<compile_context>
chip_gen: v7x
topology: tpu7x:2x2x1
jax: 0.10.0
libtpu: 0.0.40
codegen_flags: <defaults>
</compile_context>

<pallas_src>
import functools

import jax
import jax.numpy as jnp
from jax.experimental import pallas as pl
from jax.experimental.pallas import tpu as pltpu


# ----------------------------------------------------------------------------
# Fused Pallas kernel: one transformer encoder layer for B_t sequences
# ----------------------------------------------------------------------------
def _transformer_encoder_kernel(
    x_ref,                       # (B_t, L, E)  f32
    w_in_ref, b_in_ref,          # (E, 3E) bf16, (1, 3E) f32
    w_out_ref, b_out_ref,        # (H, D, E) bf16, (1, E) f32
    g1_ref, be1_ref,             # (1, E) f32
    w1_ref, b1_ref,              # (E, F) bf16, (1, F) f32
    w2_ref, b2_ref,              # (F, E) bf16, (1, E) f32
    g2_ref, be2_ref,             # (1, E) f32
    o_ref,                       # (B_t, L, E)
    *, num_heads, eps):
    bt, L, E = x_ref.shape
    H = num_heads
    D = E // H
    scale = float(D) ** -0.5
    f32 = jnp.float32
    bf16 = jnp.bfloat16

    # Flatten the sequence block: L % 8 == 0 so this is a free tile relabel.
    x = x_ref[...].reshape(bt * L, E)                               # (M, E) f32

    # ---- fused QKV projection: one (M, E) x (E, 3E) bf16 MXU matmul ----
    qkv = jnp.dot(x.astype(bf16), w_in_ref[...],
                  preferred_element_type=f32) + b_in_ref[...]       # (M, 3E) f32

    # ---- head-batched self-attention, one sequence at a time ----
    attn_rows = []
    for b in range(bt):          # tiny static loop; row slices are sublane-aligned
        rows = qkv[b * L:(b + 1) * L]                               # (L, 3E)
        q = rows[:, 0 * E:1 * E] * scale
        k = rows[:, 1 * E:2 * E]
        v = rows[:, 2 * E:3 * E]

        # (H, L, D) stacks feeding ONE batched dot each; with D % 128 == 0 the
        # head slices are whole lane-tile moves (no relayout).
        qh = jnp.stack([q[:, h * D:(h + 1) * D] for h in range(H)], 0).astype(bf16)
        kh = jnp.stack([k[:, h * D:(h + 1) * D] for h in range(H)], 0).astype(bf16)
        vh = jnp.stack([v[:, h * D:(h + 1) * D] for h in range(H)], 0).astype(bf16)

        # batched scores: contract on the last dims (no explicit kh.T)
        s = jnp.einsum("hqd,hkd->hqk", qh, kh,
                       preferred_element_type=f32)                  # (H, L, L)
        s = s - jnp.max(s, axis=-1, keepdims=True)
        p = jnp.exp(s)
        p = p * pl.reciprocal(jnp.sum(p, axis=-1, keepdims=True), approx=True)

        # batched context
        ctx = jnp.einsum("hqk,hkd->hqd", p.astype(bf16), vh,
                         preferred_element_type=f32)                # (H, L, D)

        # output projection fused with the head merge: head-batched (L,D)x(D,E)
        # matmuls summed over heads -- no lane-concat of head outputs.
        o_b = jnp.einsum("hqd,hde->hqe", ctx.astype(bf16), w_out_ref[...],
                         preferred_element_type=f32)                # (H, L, E)
        attn_rows.append(jnp.sum(o_b, axis=0))                      # (L, E)

    attn = jnp.concatenate(attn_rows, axis=0) + b_out_ref[...]      # (M, E)

    # ---- residual + LayerNorm 1 (f32) ----
    h1 = x + attn
    mu1 = jnp.mean(h1, axis=-1, keepdims=True)
    c1 = h1 - mu1
    var1 = jnp.mean(c1 * c1, axis=-1, keepdims=True)
    h1 = c1 * jax.lax.rsqrt(var1 + eps) * g1_ref[...] + be1_ref[...]

    # ---- feed-forward (bf16 MXU matmuls, f32 accumulation) ----
    ff = (jnp.dot(h1.astype(bf16), w1_ref[...], preferred_element_type=f32)
          + b1_ref[...])
    ff = jnp.maximum(ff, 0.0)
    ff = (jnp.dot(ff.astype(bf16), w2_ref[...], preferred_element_type=f32)
          + b2_ref[...])

    # ---- residual + LayerNorm 2 (f32) ----
    h2 = h1 + ff
    mu2 = jnp.mean(h2, axis=-1, keepdims=True)
    c2 = h2 - mu2
    var2 = jnp.mean(c2 * c2, axis=-1, keepdims=True)
    out = c2 * jax.lax.rsqrt(var2 + eps) * g2_ref[...] + be2_ref[...]

    o_ref[...] = out.reshape(bt, L, E).astype(o_ref.dtype)


def _pick_block_batch(n, seq_len, target_rows=256):
    """Sequences per grid step: fill the MXU M-dim, keep >= 2 grid steps."""
    divisors = [d for d in range(1, n + 1) if n % d == 0]
    for d in divisors:
        if d * seq_len >= target_rows and n // d >= 2:
            return d
    two_step = [d for d in divisors if n // d >= 2]
    if two_step:
        return max(two_step)
    return n


def transformer_encoder(x, params, *, num_heads, eps=1e-5, block_batch=None):
    """x: (seq_len, batch, embed_dim) — PyTorch MultiheadAttention layout."""
    L, N, E = x.shape
    D = E // num_heads
    F = params["ff1"][0].shape[1]
    bt = block_batch if block_batch is not None else _pick_block_batch(N, L)
    assert N % bt == 0

    # TODO(synk): this transpose is one extra HBM pass over the activations; it
    # could be folded into the BlockSpec ((L, bt, E) blocks on the original
    # layout) once E rows are >= 512 B.
    xb = jnp.transpose(x, (1, 0, 2))               # (N, L, E): batch on the grid

    w_in, b_in = params["in_proj"]
    w_out, b_out = params["out_proj"]
    g1, be1 = params["ln1"]
    w1, b1 = params["ff1"]
    w2, b2 = params["ff2"]
    g2, be2 = params["ln2"]

    bf16 = jnp.bfloat16
    w_in_b = w_in.astype(bf16)
    w_out_b = w_out.reshape(num_heads, D, E).astype(bf16)   # head-major -> (H, D, E)
    w1_b = w1.astype(bf16)
    w2_b = w2.astype(bf16)

    def rep(arr):  # full weight/bias block, same block index for every grid step
        # TODO(synk): for very large E/F on v7x (64 MiB VMEM) single-buffer these
        # (pipeline_mode=pl.Buffered(1)) or stream the FFN weights from HBM.
        nd = arr.ndim
        return pl.BlockSpec(arr.shape, lambda i, _nd=nd: (0,) * _nd)

    seq_spec = pl.BlockSpec((bt, L, E), lambda i: (i, 0, 0))

    consts = (w_in_b, b_in, w_out_b, b_out, g1, be1, w1_b, b1, w2_b, b2, g2, be2)
    weight_bytes = sum(int(a.nbytes) for a in consts)
    block_bytes = 2 * bt * L * E * 4                       # x block + out block (f32)
    act_bytes = bt * L * (3 * E + F + 8 * E) * 4           # rough live-intermediate bound
    vmem_limit = int(min(max(2 * (weight_bytes + block_bytes) + 2 * act_bytes,
                             32 << 20), 64 << 20))

    out = pl.pallas_call(
        functools.partial(_transformer_encoder_kernel,
                          num_heads=num_heads, eps=eps),
        out_shape=jax.ShapeDtypeStruct((N, L, E), x.dtype),
        grid=(N // bt,),
        in_specs=[seq_spec] + [rep(a) for a in consts],
        out_specs=seq_spec,
        compiler_params=pltpu.CompilerParams(
            dimension_semantics=("parallel",),   # v7x: both TensorCores get blocks
            vmem_limit_bytes=vmem_limit),
    )(xb, *consts)
    return jnp.transpose(out, (1, 0, 2))           # back to (L, N, E)


# ----------------------------------------------------------------------------
# Pure-JAX reference (matches torch.nn.MultiheadAttention inference semantics)
# ----------------------------------------------------------------------------
def transformer_encoder_ref(x, params, *, num_heads, eps=1e-5):
    L, N, E = x.shape
    D = E // num_heads
    hp = jax.lax.Precision.HIGHEST
    w_in, b_in = params["in_proj"]
    w_out, b_out = params["out_proj"]
    g1, be1 = params["ln1"]
    w1, b1 = params["ff1"]
    w2, b2 = params["ff2"]
    g2, be2 = params["ln2"]

    def ln(h, g, b):
        mu = jnp.mean(h, axis=-1, keepdims=True)
        var = jnp.mean((h - mu) ** 2, axis=-1, keepdims=True)
        return (h - mu) / jnp.sqrt(var + eps) * g[0] + b[0]

    qkv = jnp.einsum("lne,ef->lnf", x, w_in, precision=hp) + b_in[0]
    q, k, v = jnp.split(qkv, 3, axis=-1)
    q = q * (float(D) ** -0.5)

    def heads(t):                                  # (L, N, E) -> (N, H, L, D)
        return t.reshape(L, N, num_heads, D).transpose(1, 2, 0, 3)

    qh, kh, vh = heads(q), heads(k), heads(v)
    s = jnp.einsum("nhld,nhmd->nhlm", qh, kh, precision=hp)
    p = jax.nn.softmax(s, axis=-1)
    o = jnp.einsum("nhlm,nhmd->nhld", p, vh, precision=hp)
    o = o.transpose(2, 0, 1, 3).reshape(L, N, E)
    attn = jnp.einsum("lne,ef->lnf", o, w_out, precision=hp) + b_out[0]

    h1 = ln(x + attn, g1, be1)
    ff = jnp.maximum(jnp.einsum("lne,ef->lnf", h1, w1, precision=hp) + b1[0], 0.0)
    ff = jnp.einsum("lnf,fe->lne", ff, w2, precision=hp) + b2[0]
    return ln(h1 + ff, g2, be2)


# ----------------------------------------------------------------------------
# Deterministic synthetic parameters
# ----------------------------------------------------------------------------
def init_params(key, embed_dim, feedforward_dim):
    ks = jax.random.split(key, 6)

    def linear_p(k, fan_in, fan_out):
        kw, kb = jax.random.split(k)
        bound = float(fan_in) ** -0.5
        w = jax.random.uniform(kw, (fan_in, fan_out), jnp.float32, -bound, bound)
        b = jax.random.uniform(kb, (1, fan_out), jnp.float32, -bound, bound)
        return w, b

    def ln_p(k, dim):
        kg, kb = jax.random.split(k)
        g = 1.0 + 0.1 * jax.random.normal(kg, (1, dim), jnp.float32)
        b = 0.1 * jax.random.normal(kb, (1, dim), jnp.float32)
        return g, b

    return {
        "in_proj": linear_p(ks[0], embed_dim, 3 * embed_dim),
        "out_proj": linear_p(ks[1], embed_dim, embed_dim),
        "ln1": ln_p(ks[2], embed_dim),
        "ff1": linear_p(ks[3], embed_dim, feedforward_dim),
        "ff2": linear_p(ks[4], feedforward_dim, embed_dim),
        "ln2": ln_p(ks[5], embed_dim),
    }


if __name__ == "__main__":
    # Lane-aligned small config (E, F, head dim multiples of 128; L multiple of 8).
    embed_dim, num_heads, feedforward_dim = 256, 2, 512
    seq_len, batch = 32, 4

    key = jax.random.PRNGKey(0)
    pkey, xkey = jax.random.split(key)
    params = init_params(pkey, embed_dim, feedforward_dim)
    x = jax.random.normal(xkey, (seq_len, batch, embed_dim), jnp.float32)

    out = transformer_encoder(x, params, num_heads=num_heads)
    out = jax.block_until_ready(out)

    ref = transformer_encoder_ref(x, params, num_heads=num_heads)

    assert out.shape == (seq_len, batch, embed_dim), out.shape
    assert bool(jnp.all(jnp.isfinite(out)))
    max_err = float(jnp.max(jnp.abs(out - ref)))
    assert bool(jnp.allclose(out, ref, atol=2e-2, rtol=2e-2)), max_err
    print("KERNEL_OK")
</pallas_src>

<mosaic_0001>
module attributes {stable_mosaic.version = 11 : i64} {
  func.func @_transformer_encoder_kernel(%arg0: i32, %arg1: memref<2x32x256xf32, #tpu.memory_space<vmem>>, %arg2: memref<256x768xbf16, #tpu.memory_space<vmem>>, %arg3: memref<1x768xf32, #tpu.memory_space<vmem>>, %arg4: memref<2x128x256xbf16, #tpu.memory_space<vmem>>, %arg5: memref<1x256xf32, #tpu.memory_space<vmem>>, %arg6: memref<1x256xf32, #tpu.memory_space<vmem>>, %arg7: memref<1x256xf32, #tpu.memory_space<vmem>>, %arg8: memref<256x512xbf16, #tpu.memory_space<vmem>>, %arg9: memref<1x512xf32, #tpu.memory_space<vmem>>, %arg10: memref<512x256xbf16, #tpu.memory_space<vmem>>, %arg11: memref<1x256xf32, #tpu.memory_space<vmem>>, %arg12: memref<1x256xf32, #tpu.memory_space<vmem>>, %arg13: memref<1x256xf32, #tpu.memory_space<vmem>>, %arg14: memref<2x32x256xf32, #tpu.memory_space<vmem>>) attributes {dimension_semantics = [#tpu.dimension_semantics<parallel>], iteration_bounds = array<i64: 2>, scalar_prefetch = 0 : i64, scratch_operands = 0 : i64, tpu.core_type = #tpu.core_type<tc>, window_params = [{transform_indices = @transform_0, window_bounds = array<i64: 2, 32, 256>}, {pipeline_mode = #tpu.pipeline_mode<synchronous>, transform_indices = @transform_1, window_bounds = array<i64: 256, 768>}, {pipeline_mode = #tpu.pipeline_mode<synchronous>, transform_indices = @transform_2, window_bounds = array<i64: 1, 768>}, {pipeline_mode = #tpu.pipeline_mode<synchronous>, transform_indices = @transform_3, window_bounds = array<i64: 2, 128, 256>}, {pipeline_mode = #tpu.pipeline_mode<synchronous>, transform_indices = @transform_4, window_bounds = array<i64: 1, 256>}, {pipeline_mode = #tpu.pipeline_mode<synchronous>, transform_indices = @transform_5, window_bounds = array<i64: 1, 256>}, {pipeline_mode = #tpu.pipeline_mode<synchronous>, transform_indices = @transform_6, window_bounds = array<i64: 1, 256>}, {pipeline_mode = #tpu.pipeline_mode<synchronous>, transform_indices = @transform_7, window_bounds = array<i64: 256, 512>}, {pipeline_mode = #tpu.pipeline_mode<synchronous>, transform_indices = @transform_8, window_bounds = array<i64: 1, 512>}, {pipeline_mode = #tpu.pipeline_mode<synchronous>, transform_indices = @transform_9, window_bounds = array<i64: 512, 256>}, {pipeline_mode = #tpu.pipeline_mode<synchronous>, transform_indices = @transform_10, window_bounds = array<i64: 1, 256>}, {pipeline_mode = #tpu.pipeline_mode<synchronous>, transform_indices = @transform_11, window_bounds = array<i64: 1, 256>}, {pipeline_mode = #tpu.pipeline_mode<synchronous>, transform_indices = @transform_12, window_bounds = array<i64: 1, 256>}, {transform_indices = @transform_13, window_bounds = array<i64: 2, 32, 256>}]} {
    %c0 = arith.constant 0 : index
    %c0_0 = arith.constant 0 : index
    %c0_1 = arith.constant 0 : index
    %0 = vector.load %arg1[%c0, %c0_0, %c0_1] : memref<2x32x256xf32, #tpu.memory_space<vmem>>, vector<2x32x256xf32>
    %1 = vector.shape_cast %0 : vector<2x32x256xf32> to vector<64x256xf32>
    %2 = arith.truncf %1 : vector<64x256xf32> to vector<64x256xbf16>
    %c0_2 = arith.constant 0 : index
    %c0_3 = arith.constant 0 : index
    %3 = vector.load %arg2[%c0_2, %c0_3] : memref<256x768xbf16, #tpu.memory_space<vmem>>, vector<256x768xbf16>
    %cst = arith.constant dense<0.000000e+00> : vector<64x768xf32>
    %4 = tpu.matmul %2, %3, %cst {dimension_numbers = #tpu.dot_dimension_numbers<[1], [0], [0], [1], [0, 0, 1, 1], [], []>} : vector<64x256xbf16>, vector<256x768xbf16>, vector<64x768xf32> -> vector<64x768xf32>
    %c0_4 = arith.constant 0 : index
    %c0_5 = arith.constant 0 : index
    %5 = vector.load %arg3[%c0_4, %c0_5] : memref<1x768xf32, #tpu.memory_space<vmem>>, vector<1x768xf32>
    %6 = vector.broadcast %5 : vector<1x768xf32> to vector<64x768xf32>
    %7 = arith.addf %4, %6 : vector<64x768xf32>
    %8 = vector.extract_strided_slice %7 {offsets = [0, 0], sizes = [32, 768], strides = [1, 1]} : vector<64x768xf32> to vector<32x768xf32>
    %9 = vector.extract_strided_slice %8 {offsets = [0, 0], sizes = [32, 256], strides = [1, 1]} : vector<32x768xf32> to vector<32x256xf32>
    %cst_6 = arith.constant 0.0883883461 : f32
    %10 = vector.broadcast %cst_6 : f32 to vector<32x256xf32>
    %11 = arith.mulf %9, %10 : vector<32x256xf32>
    %12 = vector.extract_strided_slice %8 {offsets = [0, 256], sizes = [32, 256], strides = [1, 1]} : vector<32x768xf32> to vector<32x256xf32>
    %13 = vector.extract_strided_slice %8 {offsets = [0, 512], sizes = [32, 256], strides = [1, 1]} : vector<32x768xf32> to vector<32x256xf32>
    %14 = vector.extract_strided_slice %11 {offsets = [0, 0], sizes = [32, 128], strides = [1, 1]} : vector<32x256xf32> to vector<32x128xf32>
    %15 = vector.extract_strided_slice %11 {offsets = [0, 128], sizes = [32, 128], strides = [1, 1]} : vector<32x256xf32> to vector<32x128xf32>
    %16 = vector.shape_cast %14 : vector<32x128xf32> to vector<1x32x128xf32>
    %17 = vector.shape_cast %15 : vector<32x128xf32> to vector<1x32x128xf32>
    %18 = tpu.concatenate %16, %17 in 0 : vector<1x32x128xf32>, vector<1x32x128xf32> -> vector<2x32x128xf32>
    %19 = arith.truncf %18 : vector<2x32x128xf32> to vector<2x32x128xbf16>
    %20 = vector.extract_strided_slice %12 {offsets = [0, 0], sizes = [32, 128], strides = [1, 1]} : vector<32x256xf32> to vector<32x128xf32>
    %21 = vector.extract_strided_slice %12 {offsets = [0, 128], sizes = [32, 128], strides = [1, 1]} : vector<32x256xf32> to vector<32x128xf32>
    %22 = vector.shape_cast %20 : vector<32x128xf32> to vector<1x32x128xf32>
    %23 = vector.shape_cast %21 : vector<32x128xf32> to vector<1x32x128xf32>
    %24 = tpu.concatenate %22, %23 in 0 : vector<1x32x128xf32>, vector<1x32x128xf32> -> vector<2x32x128xf32>
    %25 = arith.truncf %24 : vector<2x32x128xf32> to vector<2x32x128xbf16>
    %26 = vector.extract_strided_slice %13 {offsets = [0, 0], sizes = [32, 128], strides = [1, 1]} : vector<32x256xf32> to vector<32x128xf32>
    %27 = vector.extract_strided_slice %13 {offsets = [0, 128], sizes = [32, 128], strides = [1, 1]} : vector<32x256xf32> to vector<32x128xf32>
    %28 = vector.shape_cast %26 : vector<32x128xf32> to vector<1x32x128xf32>
    %29 = vector.shape_cast %27 : vector<32x128xf32> to vector<1x32x128xf32>
    %30 = tpu.concatenate %28, %29 in 0 : vector<1x32x128xf32>, vector<1x32x128xf32> -> vector<2x32x128xf32>
    %31 = arith.truncf %30 : vector<2x32x128xf32> to vector<2x32x128xbf16>
    "tpu.trace_start"() <{level = 10 : i32, message = "hqd,hkd->hqk"}> : () -> ()
    %cst_7 = arith.constant dense<0.000000e+00> : vector<2x32x32xf32>
    %32 = tpu.matmul %19, %25, %cst_7 {dimension_numbers = #tpu.dot_dimension_numbers<[2], [2], [1], [1], [0, 0, 0, 1, 1, 1], [0], [0]>} : vector<2x32x128xbf16>, vector<2x32x128xbf16>, vector<2x32x32xf32> -> vector<2x32x32xf32>
    "tpu.trace_stop"() : () -> ()
    %cst_8 = arith.constant dense<0xFF800000> : vector<2x32xf32>
    %33 = vector.multi_reduction <maximumf>, %32, %cst_8 [2] : vector<2x32x32xf32> to vector<2x32xf32>
    %34 = vector.shape_cast %33 : vector<2x32xf32> to vector<2x32x1xf32>
    %35 = vector.broadcast %34 : vector<2x32x1xf32> to vector<2x32x32xf32>
    %36 = arith.subf %32, %35 : vector<2x32x32xf32>
    %37 = math.exp %36 : vector<2x32x32xf32>
    %cst_9 = arith.constant dense<0.000000e+00> : vector<2x32xf32>
    %38 = vector.multi_reduction <add>, %37, %cst_9 [2] : vector<2x32x32xf32> to vector<2x32xf32>
    %39 = vector.shape_cast %38 : vector<2x32xf32> to vector<2x32x1xf32>
    %40 = tpu.reciprocal %39 {approx = true} : vector<2x32x1xf32> -> vector<2x32x1xf32>
    %41 = vector.broadcast %40 : vector<2x32x1xf32> to vector<2x32x32xf32>
    %42 = arith.mulf %37, %41 : vector<2x32x32xf32>
    %43 = arith.truncf %42 : vector<2x32x32xf32> to vector<2x32x32xbf16>
    "tpu.trace_start"() <{level = 10 : i32, message = "hqk,hkd->hqd"}> : () -> ()
    %cst_10 = arith.constant dense<0.000000e+00> : vector<2x32x128xf32>
    %44 = tpu.matmul %43, %31, %cst_10 {dimension_numbers = #tpu.dot_dimension_numbers<[2], [1], [1], [2], [0, 0, 0, 1, 1, 2], [0], [0]>} : vector<2x32x32xbf16>, vector<2x32x128xbf16>, vector<2x32x128xf32> -> vector<2x32x128xf32>
    "tpu.trace_stop"() : () -> ()
    %45 = arith.truncf %44 : vector<2x32x128xf32> to vector<2x32x128xbf16>
    %c0_11 = arith.constant 0 : index
    %c0_12 = arith.constant 0 : index
    %c0_13 = arith.constant 0 : index
    %46 = vector.load %arg4[%c0_11, %c0_12, %c0_13] : memref<2x128x256xbf16, #tpu.memory_space<vmem>>, vector<2x128x256xbf16>
    "tpu.trace_start"() <{level = 10 : i32, message = "hqd,hde->hqe"}> : () -> ()
    %cst_14 = arith.constant dense<0.000000e+00> : vector<2x32x256xf32>
    %47 = tpu.matmul %45, %46, %cst_14 {dimension_numbers = #tpu.dot_dimension_numbers<[2], [1], [1], [2], [0, 0, 0, 1, 1, 2], [0], [0]>} : vector<2x32x128xbf16>, vector<2x128x256xbf16>, vector<2x32x256xf32> -> vector<2x32x256xf32>
    "tpu.trace_stop"() : () -> ()
    %cst_15 = arith.constant dense<0.000000e+00> : vector<32x256xf32>
    %48 = vector.multi_reduction <add>, %47, %cst_15 [0] : vector<2x32x256xf32> to vector<32x256xf32>
    %49 = vector.extract_strided_slice %7 {offsets = [32, 0], sizes = [32, 768], strides = [1, 1]} : vector<64x768xf32> to vector<32x768xf32>
    %50 = vector.extract_strided_slice %49 {offsets = [0, 0], sizes = [32, 256], strides = [1, 1]} : vector<32x768xf32> to vector<32x256xf32>
    %cst_16 = arith.constant 0.0883883461 : f32
    %51 = vector.broadcast %cst_16 : f32 to vector<32x256xf32>
    %52 = arith.mulf %50, %51 : vector<32x256xf32>
    %53 = vector.extract_strided_slice %49 {offsets = [0, 256], sizes = [32, 256], strides = [1, 1]} : vector<32x768xf32> to vector<32x256xf32>
    %54 = vector.extract_strided_slice %49 {offsets = [0, 512], sizes = [32, 256], strides = [1, 1]} : vector<32x768xf32> to vector<32x256xf32>
    %55 = vector.extract_strided_slice %52 {offsets = [0, 0], sizes = [32, 128], strides = [1, 1]} : vector<32x256xf32> to vector<32x128xf32>
    %56 = vector.extract_strided_slice %52 {offsets = [0, 128], sizes = [32, 128], strides = [1, 1]} : vector<32x256xf32> to vector<32x128xf32>
    %57 = vector.shape_cast %55 : vector<32x128xf32> to vector<1x32x128xf32>
    %58 = vector.shape_cast %56 : vector<32x128xf32> to vector<1x32x128xf32>
    %59 = tpu.concatenate %57, %58 in 0 : vector<1x32x128xf32>, vector<1x32x128xf32> -> vector<2x32x128xf32>
    %60 = arith.truncf %59 : vector<2x32x128xf32> to vector<2x32x128xbf16>
    %61 = vector.extract_strided_slice %53 {offsets = [0, 0], sizes = [32, 128], strides = [1, 1]} : vector<32x256xf32> to vector<32x128xf32>
    %62 = vector.extract_strided_slice %53 {offsets = [0, 128], sizes = [32, 128], strides = [1, 1]} : vector<32x256xf32> to vector<32x128xf32>
    %63 = vector.shape_cast %61 : vector<32x128xf32> to vector<1x32x128xf32>
    %64 = vector.shape_cast %62 : vector<32x128xf32> to vector<1x32x128xf32>
    %65 = tpu.concatenate %63, %64 in 0 : vector<1x32x128xf32>, vector<1x32x128xf32> -> vector<2x32x128xf32>
    %66 = arith.truncf %65 : vector<2x32x128xf32> to vector<2x32x128xbf16>
    %67 = vector.extract_strided_slice %54 {offsets = [0, 0], sizes = [32, 128], strides = [1, 1]} : vector<32x256xf32> to vector<32x128xf32>
    %68 = vector.extract_strided_slice %54 {offsets = [0, 128], sizes = [32, 128], strides = [1, 1]} : vector<32x256xf32> to vector<32x128xf32>
    %69 = vector.shape_cast %67 : vector<32x128xf32> to vector<1x32x128xf32>
    %70 = vector.shape_cast %68 : vector<32x128xf32> to vector<1x32x128xf32>
    %71 = tpu.concatenate %69, %70 in 0 : vector<1x32x128xf32>, vector<1x32x128xf32> -> vector<2x32x128xf32>
    %72 = arith.truncf %71 : vector<2x32x128xf32> to vector<2x32x128xbf16>
    "tpu.trace_start"() <{level = 10 : i32, message = "hqd,hkd->hqk"}> : () -> ()
    %cst_17 = arith.constant dense<0.000000e+00> : vector<2x32x32xf32>
    %73 = tpu.matmul %60, %66, %cst_17 {dimension_numbers = #tpu.dot_dimension_numbers<[2], [2], [1], [1], [0, 0, 0, 1, 1, 1], [0], [0]>} : vector<2x32x128xbf16>, vector<2x32x128xbf16>, vector<2x32x32xf32> -> vector<2x32x32xf32>
    "tpu.trace_stop"() : () -> ()
    %cst_18 = arith.constant dense<0xFF800000> : vector<2x32xf32>
    %74 = vector.multi_reduction <maximumf>, %73, %cst_18 [2] : vector<2x32x32xf32> to vector<2x32xf32>
    %75 = vector.shape_cast %74 : vector<2x32xf32> to vector<2x32x1xf32>
    %76 = vector.broadcast %75 : vector<2x32x1xf32> to vector<2x32x32xf32>
    %77 = arith.subf %73, %76 : vector<2x32x32xf32>
    %78 = math.exp %77 : vector<2x32x32xf32>
    %cst_19 = arith.constant dense<0.000000e+00> : vector<2x32xf32>
    %79 = vector.multi_reduction <add>, %78, %cst_19 [2] : vector<2x32x32xf32> to vector<2x32xf32>
    %80 = vector.shape_cast %79 : vector<2x32xf32> to vector<2x32x1xf32>
    %81 = tpu.reciprocal %80 {approx = true} : vector<2x32x1xf32> -> vector<2x32x1xf32>
    %82 = vector.broadcast %81 : vector<2x32x1xf32> to vector<2x32x32xf32>
    %83 = arith.mulf %78, %82 : vector<2x32x32xf32>
    %84 = arith.truncf %83 : vector<2x32x32xf32> to vector<2x32x32xbf16>
    "tpu.trace_start"() <{level = 10 : i32, message = "hqk,hkd->hqd"}> : () -> ()
    %cst_20 = arith.constant dense<0.000000e+00> : vector<2x32x128xf32>
    %85 = tpu.matmul %84, %72, %cst_20 {dimension_numbers = #tpu.dot_dimension_numbers<[2], [1], [1], [2], [0, 0, 0, 1, 1, 2], [0], [0]>} : vector<2x32x32xbf16>, vector<2x32x128xbf16>, vector<2x32x128xf32> -> vector<2x32x128xf32>
    "tpu.trace_stop"() : () -> ()
    %86 = arith.truncf %85 : vector<2x32x128xf32> to vector<2x32x128xbf16>
    %c0_21 = arith.constant 0 : index
    %c0_22 = arith.constant 0 : index
    %c0_23 = arith.constant 0 : index
    %87 = vector.load %arg4[%c0_21, %c0_22, %c0_23] : memref<2x128x256xbf16, #tpu.memory_space<vmem>>, vector<2x128x256xbf16>
    "tpu.trace_start"() <{level = 10 : i32, message = "hqd,hde->hqe"}> : () -> ()
    %cst_24 = arith.constant dense<0.000000e+00> : vector<2x32x256xf32>
    %88 = tpu.matmul %86, %87, %cst_24 {dimension_numbers = #tpu.dot_dimension_numbers<[2], [1], [1], [2], [0, 0, 0, 1, 1, 2], [0], [0]>} : vector<2x32x128xbf16>, vector<2x128x256xbf16>, vector<2x32x256xf32> -> vector<2x32x256xf32>
    "tpu.trace_stop"() : () -> ()
    %cst_25 = arith.constant dense<0.000000e+00> : vector<32x256xf32>
    %89 = vector.multi_reduction <add>, %88, %cst_25 [0] : vector<2x32x256xf32> to vector<32x256xf32>
    %90 = tpu.concatenate %48, %89 in 0 : vector<32x256xf32>, vector<32x256xf32> -> vector<64x256xf32>
    %c0_26 = arith.constant 0 : index
    %c0_27 = arith.constant 0 : index
    %91 = vector.load %arg5[%c0_26, %c0_27] : memref<1x256xf32, #tpu.memory_space<vmem>>, vector<1x256xf32>
    %92 = vector.broadcast %91 : vector<1x256xf32> to vector<64x256xf32>
    %93 = arith.addf %90, %92 : vector<64x256xf32>
    %94 = arith.addf %1, %93 : vector<64x256xf32>
    %cst_28 = arith.constant dense<0.000000e+00> : vector<64xf32>
    %95 = vector.multi_reduction <add>, %94, %cst_28 [1] : vector<64x256xf32> to vector<64xf32>
    %96 = vector.shape_cast %95 : vector<64xf32> to vector<64x1xf32>
    %cst_29 = arith.constant 2.560000e+02 : f32
    %97 = vector.broadcast %cst_29 : f32 to vector<64x1xf32>
    %98 = arith.divf %96, %97 : vector<64x1xf32>
    %99 = vector.broadcast %98 : vector<64x1xf32> to vector<64x256xf32>
    %100 = arith.subf %94, %99 : vector<64x256xf32>
    %101 = arith.mulf %100, %100 : vector<64x256xf32>
    %cst_30 = arith.constant dense<0.000000e+00> : vector<64xf32>
    %102 = vector.multi_reduction <add>, %101, %cst_30 [1] : vector<64x256xf32> to vector<64xf32>
    %103 = vector.shape_cast %102 : vector<64xf32> to vector<64x1xf32>
    %cst_31 = arith.constant 2.560000e+02 : f32
    %104 = vector.broadcast %cst_31 : f32 to vector<64x1xf32>
    %105 = arith.divf %103, %104 : vector<64x1xf32>
    %cst_32 = arith.constant 9.99999974E-6 : f32
    %106 = vector.broadcast %cst_32 : f32 to vector<64x1xf32>
    %107 = arith.addf %105, %106 : vector<64x1xf32>
    %108 = math.rsqrt %107 : vector<64x1xf32>
    %109 = vector.broadcast %108 : vector<64x1xf32> to vector<64x256xf32>
    %110 = arith.mulf %100, %109 : vector<64x256xf32>
    %c0_33 = arith.constant 0 : index
    %c0_34 = arith.constant 0 : index
    %111 = vector.load %arg6[%c0_33, %c0_34] : memref<1x256xf32, #tpu.memory_space<vmem>>, vector<1x256xf32>
    %112 = vector.broadcast %111 : vector<1x256xf32> to vector<64x256xf32>
    %113 = arith.mulf %110, %112 : vector<64x256xf32>
    %c0_35 = arith.constant 0 : index
    %c0_36 = arith.constant 0 : index
    %114 = vector.load %arg7[%c0_35, %c0_36] : memref<1x256xf32, #tpu.memory_space<vmem>>, vector<1x256xf32>
    %115 = vector.broadcast %114 : vector<1x256xf32> to vector<64x256xf32>
    %116 = arith.addf %113, %115 : vector<64x256xf32>
    %117 = arith.truncf %116 : vector<64x256xf32> to vector<64x256xbf16>
    %c0_37 = arith.constant 0 : index
    %c0_38 = arith.constant 0 : index
    %118 = vector.load %arg8[%c0_37, %c0_38] : memref<256x512xbf16, #tpu.memory_space<vmem>>, vector<256x512xbf16>
    %cst_39 = arith.constant dense<0.000000e+00> : vector<64x512xf32>
    %119 = tpu.matmul %117, %118, %cst_39 {dimension_numbers = #tpu.dot_dimension_numbers<[1], [0], [0], [1], [0, 0, 1, 1], [], []>} : vector<64x256xbf16>, vector<256x512xbf16>, vector<64x512xf32> -> vector<64x512xf32>
    %c0_40 = arith.constant 0 : index
    %c0_41 = arith.constant 0 : index
    %120 = vector.load %arg9[%c0_40, %c0_41] : memref<1x512xf32, #tpu.memory_space<vmem>>, vector<1x512xf32>
    %121 = vector.broadcast %120 : vector<1x512xf32> to vector<64x512xf32>
    %122 = arith.addf %119, %121 : vector<64x512xf32>
    %cst_42 = arith.constant 0.000000e+00 : f32
    %123 = vector.broadcast %cst_42 : f32 to vector<64x512xf32>
    %124 = arith.maximumf %122, %123 : vector<64x512xf32>
    %125 = arith.truncf %124 : vector<64x512xf32> to vector<64x512xbf16>
    %c0_43 = arith.constant 0 : index
    %c0_44 = arith.constant 0 : index
    %126 = vector.load %arg10[%c0_43, %c0_44] : memref<512x256xbf16, #tpu.memory_space<vmem>>, vector<512x256xbf16>
    %cst_45 = arith.constant dense<0.000000e+00> : vector<64x256xf32>
    %127 = tpu.matmul %125, %126, %cst_45 {dimension_numbers = #tpu.dot_dimension_numbers<[1], [0], [0], [1], [0, 0, 1, 1], [], []>} : vector<64x512xbf16>, vector<512x256xbf16>, vector<64x256xf32> -> vector<64x256xf32>
    %c0_46 = arith.constant 0 : index
    %c0_47 = arith.constant 0 : index
    %128 = vector.load %arg11[%c0_46, %c0_47] : memref<1x256xf32, #tpu.memory_space<vmem>>, vector<1x256xf32>
    %129 = vector.broadcast %128 : vector<1x256xf32> to vector<64x256xf32>
    %130 = arith.addf %127, %129 : vector<64x256xf32>
    %131 = arith.addf %116, %130 : vector<64x256xf32>
    %cst_48 = arith.constant dense<0.000000e+00> : vector<64xf32>
    %132 = vector.multi_reduction <add>, %131, %cst_48 [1] : vector<64x256xf32> to vector<64xf32>
    %133 = vector.shape_cast %132 : vector<64xf32> to vector<64x1xf32>
    %cst_49 = arith.constant 2.560000e+02 : f32
    %134 = vector.broadcast %cst_49 : f32 to vector<64x1xf32>
    %135 = arith.divf %133, %134 : vector<64x1xf32>
    %136 = vector.broadcast %135 : vector<64x1xf32> to vector<64x256xf32>
    %137 = arith.subf %131, %136 : vector<64x256xf32>
    %138 = arith.mulf %137, %137 : vector<64x256xf32>
    %cst_50 = arith.constant dense<0.000000e+00> : vector<64xf32>
    %139 = vector.multi_reduction <add>, %138, %cst_50 [1] : vector<64x256xf32> to vector<64xf32>
    %140 = vector.shape_cast %139 : vector<64xf32> to vector<64x1xf32>
    %cst_51 = arith.constant 2.560000e+02 : f32
    %141 = vector.broadcast %cst_51 : f32 to vector<64x1xf32>
    %142 = arith.divf %140, %141 : vector<64x1xf32>
    %cst_52 = arith.constant 9.99999974E-6 : f32
    %143 = vector.broadcast %cst_52 : f32 to vector<64x1xf32>
    %144 = arith.addf %142, %143 : vector<64x1xf32>
    %145 = math.rsqrt %144 : vector<64x1xf32>
    %146 = vector.broadcast %145 : vector<64x1xf32> to vector<64x256xf32>
    %147 = arith.mulf %137, %146 : vector<64x256xf32>
    %c0_53 = arith.constant 0 : index
    %c0_54 = arith.constant 0 : index
    %148 = vector.load %arg12[%c0_53, %c0_54] : memref<1x256xf32, #tpu.memory_space<vmem>>, vector<1x256xf32>
    %149 = vector.broadcast %148 : vector<1x256xf32> to vector<64x256xf32>
    %150 = arith.mulf %147, %149 : vector<64x256xf32>
    %c0_55 = arith.constant 0 : index
    %c0_56 = arith.constant 0 : index
    %151 = vector.load %arg13[%c0_55, %c0_56] : memref<1x256xf32, #tpu.memory_space<vmem>>, vector<1x256xf32>
    %152 = vector.broadcast %151 : vector<1x256xf32> to vector<64x256xf32>
    %153 = arith.addf %150, %152 : vector<64x256xf32>
    %154 = vector.shape_cast %153 : vector<64x256xf32> to vector<2x32x256xf32>
    %c0_57 = arith.constant 0 : index
    %c0_58 = arith.constant 0 : index
    %c0_59 = arith.constant 0 : index
    %155 = vector.load %arg14[%c0_57, %c0_58, %c0_59] : memref<2x32x256xf32, #tpu.memory_space<vmem>>, vector<2x32x256xf32>
    tpu.vector_store %arg14[%c0_57, %c0_58, %c0_59], %154 {strides = array<i32>} : memref<2x32x256xf32, #tpu.memory_space<vmem>>, vector<2x32x256xf32>,
    return
  }
  func.func @transform_0(%arg0: i32) -> (i32, i32, i32) {
    %c0_i32 = arith.constant 0 : i32
    %c0_i32_0 = arith.constant 0 : i32
    %c0_i32_1 = arith.constant 0 : i32
    return %arg0, %c0_i32, %c0_i32_0 : i32, i32, i32
  }
  func.func @transform_1(%arg0: i32) -> (i32, i32) {
    %c0_i32 = arith.constant 0 : i32
    %c0_i32_0 = arith.constant 0 : i32
    %c0_i32_1 = arith.constant 0 : i32
    return %c0_i32, %c0_i32_0 : i32, i32
  }
  func.func @transform_2(%arg0: i32) -> (i32, i32) {
    %c0_i32 = arith.constant 0 : i32
    %c0_i32_0 = arith.constant 0 : i32
    %c0_i32_1 = arith.constant 0 : i32
    return %c0_i32, %c0_i32_0 : i32, i32
  }
  func.func @transform_3(%arg0: i32) -> (i32, i32, i32) {
    %c0_i32 = arith.constant 0 : i32
    %c0_i32_0 = arith.constant 0 : i32
    %c0_i32_1 = arith.constant 0 : i32
    %c0_i32_2 = arith.constant 0 : i32
    return %c0_i32, %c0_i32_0, %c0_i32_1 : i32, i32, i32
  }
  func.func @transform_4(%arg0: i32) -> (i32, i32) {
    %c0_i32 = arith.constant 0 : i32
    %c0_i32_0 = arith.constant 0 : i32
    %c0_i32_1 = arith.constant 0 : i32
    return %c0_i32, %c0_i32_0 : i32, i32
  }
  func.func @transform_5(%arg0: i32) -> (i32, i32) {
    %c0_i32 = arith.constant 0 : i32
    %c0_i32_0 = arith.constant 0 : i32
    %c0_i32_1 = arith.constant 0 : i32
    return %c0_i32, %c0_i32_0 : i32, i32
  }
  func.func @transform_6(%arg0: i32) -> (i32, i32) {
    %c0_i32 = arith.constant 0 : i32
    %c0_i32_0 = arith.constant 0 : i32
    %c0_i32_1 = arith.constant 0 : i32
    return %c0_i32, %c0_i32_0 : i32, i32
  }
  func.func @transform_7(%arg0: i32) -> (i32, i32) {
    %c0_i32 = arith.constant 0 : i32
    %c0_i32_0 = arith.constant 0 : i32
    %c0_i32_1 = arith.constant 0 : i32
    return %c0_i32, %c0_i32_0 : i32, i32
  }
  func.func @transform_8(%arg0: i32) -> (i32, i32) {
    %c0_i32 = arith.constant 0 : i32
    %c0_i32_0 = arith.constant 0 : i32
    %c0_i32_1 = arith.constant 0 : i32
    return %c0_i32, %c0_i32_0 : i32, i32
  }
  func.func @transform_9(%arg0: i32) -> (i32, i32) {
    %c0_i32 = arith.constant 0 : i32
    %c0_i32_0 = arith.constant 0 : i32
    %c0_i32_1 = arith.constant 0 : i32
    return %c0_i32, %c0_i32_0 : i32, i32
  }
  func.func @transform_10(%arg0: i32) -> (i32, i32) {
    %c0_i32 = arith.constant 0 : i32
    %c0_i32_0 = arith.constant 0 : i32
    %c0_i32_1 = arith.constant 0 : i32
    return %c0_i32, %c0_i32_0 : i32, i32
  }
  func.func @transform_11(%arg0: i32) -> (i32, i32) {
    %c0_i32 = arith.constant 0 : i32
    %c0_i32_0 = arith.constant 0 : i32
    %c0_i32_1 = arith.constant 0 : i32
    return %c0_i32, %c0_i32_0 : i32, i32
  }
  func.func @transform_12(%arg0: i32) -> (i32, i32) {
    %c0_i32 = arith.constant 0 : i32
    %c0_i32_0 = arith.constant 0 : i32
    %c0_i32_1 = arith.constant 0 : i32
    return %c0_i32, %c0_i32_0 : i32, i32
  }
  func.func @transform_13(%arg0: i32) -> (i32, i32, i32) {
    %c0_i32 = arith.constant 0 : i32
    %c0_i32_0 = arith.constant 0 : i32
    %c0_i32_1 = arith.constant 0 : i32
    return %arg0, %c0_i32, %c0_i32_0 : i32, i32, i32
  }
}

</mosaic_0001>

<llo_original>
// kernel: tpu_custom_call.1
$region0: #{tpu_custom_call.1}
  #allocation0 [shape = 'u32[]', space=smem, size = 0x4, offset = 0x4, fixed_abs, tag = 'smem constant byte address 0x4 - core index']
  #allocation1 [shape = 'u32[144,128]{1,0:T(1,128)}', space=vmem, size = 0x12000, scoped, tag = 'internal scratch']
  %s0 = inlined_call_operand.hbm [shape: f32[4,32,256], index: 0, kind: input, shape index: {}]
  %s1 = inlined_call_operand.hbm [shape: bf16[256,768], index: 1, kind: input, shape index: {}]
  %s2 = inlined_call_operand.vmem [shape: f32[1,768], index: 2, kind: input, shape index: {}]
  %s3 = inlined_call_operand.hbm [shape: bf16[2,128,256], index: 3, kind: input, shape index: {}]
  %s4 = inlined_call_operand.vmem [shape: f32[1,256], index: 4, kind: input, shape index: {}]
  %s5 = inlined_call_operand.vmem [shape: f32[1,256], index: 5, kind: input, shape index: {}]
  %s6 = inlined_call_operand.vmem [shape: f32[1,256], index: 6, kind: input, shape index: {}]
  %s7 = inlined_call_operand.hbm [shape: bf16[256,512], index: 7, kind: input, shape index: {}]
  %s8 = inlined_call_operand.vmem [shape: f32[1,512], index: 8, kind: input, shape index: {}]
  %s9 = inlined_call_operand.hbm [shape: bf16[512,256], index: 9, kind: input, shape index: {}]
  %s10 = inlined_call_operand.vmem [shape: f32[1,256], index: 10, kind: input, shape index: {}]
  %s11 = inlined_call_operand.vmem [shape: f32[1,256], index: 11, kind: input, shape index: {}]
  %s12 = inlined_call_operand.vmem [shape: f32[1,256], index: 12, kind: input, shape index: {}]
  %s13 = inlined_call_operand.hbm [shape: f32[4,32,256], index: 13, kind: output, shape index: {}]
  %s14 = sld [smem:[#allocation0]]
  $region105: #{tpu_custom_call.1} parent=0
    _
  %s16 = ssub.s32 1, %s14
  %s17 = scalar_select 0, %s16, %s14
  $region1: #{tpu_custom_call.1} parent=0
    #allocation2 [shape = 'u8[131072]{0}', space=vmem, size = 0x20000, scoped, tag = 'input window, operand 0']
    #allocation3 [shape = 's32[2]{0}', space=sflag, size = 0x8, scoped, tag = 'scoped memory for tpu_custom_call.1']
    #allocation4 [shape = 's32[2]{0}', space=sflag, size = 0x8, scoped, tag = 'scoped memory for tpu_custom_call.1']
    #allocation5 [shape = 'u8[393216]{0}', space=vmem, size = 0x60000, scoped, tag = 'input window, operand 1, single buffered']
    #allocation6 [shape = 's32[1]{0}', space=sflag, size = 0x4, scoped, tag = 'scoped memory for tpu_custom_call.1']
    #allocation7 [shape = 'u8[131072]{0}', space=vmem, size = 0x20000, scoped, tag = 'input window, operand 3, single buffered']
    #allocation8 [shape = 'u8[262144]{0}', space=vmem, size = 0x40000, scoped, tag = 'input window, operand 7, single buffered']
    #allocation9 [shape = 's32[1]{0}', space=sflag, size = 0x4, scoped, tag = 'scoped memory for tpu_custom_call.1']
    #allocation10 [shape = 'u8[262144]{0}', space=vmem, size = 0x40000, scoped, tag = 'input window, operand 9, single buffered']
    #allocation11 [shape = 'u8[131072]{0}', space=vmem, size = 0x20000, scoped, tag = 'output window, operand 0']
    %18 = vsyncpa [#allocation3], 0
    %s19 = scalar_lea.sflag [#allocation3], 1
    %20 = vsyncpa %s19, 0
    %21 = vsyncpa [#allocation6], 0
    %22 = vsyncpa [#allocation9], 0
    %23 = vsyncpa [#allocation4], 0
    %s24 = scalar_lea.sflag [#allocation4], 1
    %25 = vsyncpa %s24, 0
    loop: start=0, step=1, limit=4
    $region2: #{tpu_custom_call.1} parent=1 // loop_pre_header
      _
    $region3: #{tpu_custom_call.1} parent=1 // loop_header
      %s27 = sphi 0, %s31
      %p28 = scmp.ge.s32.totalorder %s27, 4
      %s37 = sphi 0, %s39
      %s40 = sphi 0, %s37
      %s41 = sphi 0, %s40
      %s57 = sphi 0, %s41
      %s61 = sphi 0, %s61
      %s63 = sphi 0, %s61
      %s64 = sphi 0, %s63
      %s78 = sphi 0, %s64
      %s82 = sphi 0, %s82
      %s84 = sphi 0, %s82
      %s85 = sphi 0, %s84
      %s99 = sphi 0, %s85
      %s103 = sphi 0, %s103
      %s105 = sphi 0, %s103
      %s106 = sphi 0, %s105
      %s120 = sphi 0, %s106
      %s124 = sphi 0, %s124
      %s126 = sphi 0, %s124
      %s127 = sphi 0, %s126
      %s141 = sphi 0, %s127
      %s145 = sphi 0, %s145
      %s147 = sphi 0, %s145
      %s148 = sphi 0, %s147
      %s162 = sphi 0, %s148
      %s166 = sphi 0, %s166
      %s168 = sphi 0, %s166
      %s169 = sphi 0, %s168
      %s183 = sphi 0, %s169
      %s187 = sphi 0, %s187
      %s189 = sphi 0, %s187
      %s190 = sphi 0, %s189
      %s204 = sphi 0, %s190
      %s208 = sphi 0, %s208
      %s210 = sphi 0, %s208
      %s211 = sphi 0, %s210
      %s225 = sphi 0, %s211
      %s229 = sphi 0, %s229
      %s231 = sphi 0, %s229
      %s232 = sphi 0, %s231
      %s246 = sphi 0, %s232
      %s250 = sphi 0, %s250
      %s252 = sphi 0, %s250
      %s253 = sphi 0, %s252
      %s267 = sphi 0, %s253
      %s271 = sphi 0, %s271
      %s273 = sphi 0, %s271
      %s274 = sphi 0, %s273
      %s288 = sphi 0, %s274
      %s292 = sphi 0, %s292
      %s294 = sphi 0, %s292
      %s295 = sphi 0, %s294
      %s309 = sphi 0, %s295
      %s315 = sphi 0, %s317
      %s318 = sphi 0, %s315
      %s319 = sphi 0, %s318
      %s335 = sphi 0, %s319
    $region4: #{tpu_custom_call.1} parent=1 // loop_header_branch
      %30 = sbr.rel (%p28) target = $region8
    $region5: #{tpu_custom_call.1} parent=1 // loop_body
      %s32 = ssub.s32 %s27, 1
      %s33 = ssub.s32 %s27, 2
      %s34 = sadd.s32 %s27, 1
      %s35 = ssub.s32 %s27, %s34
      %p36 = scmp.eq.s32.totalorder %s35, 0
      %s38 = sadd.s32 %s37, 1
      %s39 = scalar_select %p36, %s37, %s38
      %p42 = pneg %p36
      %p43 = scmp.eq.s32.totalorder %s27, 1
      %p44 = por %p42, %p43
      %p45 = scmp.ne.s32.totalorder %s37, %s40
      %p46 = scmp.eq.s32.totalorder %s27, 0
      %p47 = por %p45, %p46
      %p48 = scmp.ne.s32.totalorder %s37, %s40
      %p49 = scmp.eq.s32.totalorder %s32, 1
      %p50 = por %p48, %p49
      %p51 = scmp.ne.s32.totalorder %s40, %s41
      %p52 = scmp.eq.s32.totalorder %s32, 0
      %p53 = por %p51, %p52
      %p54 = scmp.ne.s32.totalorder %s40, %s41
      %p55 = scmp.eq.s32.totalorder %s33, 1
      %p56 = por %p54, %p55
      %p58 = scmp.ne.s32.totalorder %s41, %s57
      %p59 = scmp.eq.s32.totalorder %s33, 0
      %p60 = por %p58, %p59
      %s62 = sadd.s32 %s61, 1
      %p65 = scmp.eq.s32.totalorder %s27, 1
      %p66 = scmp.ne.s32.totalorder %s61, %s63
      %p67 = scmp.eq.s32.totalorder %s27, 0
      %p68 = por %p66, %p67
      %p69 = scmp.ne.s32.totalorder %s61, %s63
      %p70 = scmp.eq.s32.totalorder %s32, 1
      %p71 = por %p69, %p70
      %p72 = scmp.ne.s32.totalorder %s63, %s64
      %p73 = scmp.eq.s32.totalorder %s32, 0
      %p74 = por %p72, %p73
      %p75 = scmp.ne.s32.totalorder %s63, %s64
      %p76 = scmp.eq.s32.totalorder %s33, 1
      %p77 = por %p75, %p76
      %p79 = scmp.ne.s32.totalorder %s64, %s78
      %p80 = scmp.eq.s32.totalorder %s33, 0
      %p81 = por %p79, %p80
      %s83 = sadd.s32 %s82, 1
      %p86 = scmp.eq.s32.totalorder %s27, 1
      %p87 = scmp.ne.s32.totalorder %s82, %s84
      %p88 = scmp.eq.s32.totalorder %s27, 0
      %p89 = por %p87, %p88
      %p90 = scmp.ne.s32.totalorder %s82, %s84
      %p91 = scmp.eq.s32.totalorder %s32, 1
      %p92 = por %p90, %p91
      %p93 = scmp.ne.s32.totalorder %s84, %s85
      %p94 = scmp.eq.s32.totalorder %s32, 0
      %p95 = por %p93, %p94
      %p96 = scmp.ne.s32.totalorder %s84, %s85
      %p97 = scmp.eq.s32.totalorder %s33, 1
      %p98 = por %p96, %p97
      %p100 = scmp.ne.s32.totalorder %s85, %s99
      %p101 = scmp.eq.s32.totalorder %s33, 0
      %p102 = por %p100, %p101
      %s104 = sadd.s32 %s103, 1
      %p107 = scmp.eq.s32.totalorder %s27, 1
      %p108 = scmp.ne.s32.totalorder %s103, %s105
      %p109 = scmp.eq.s32.totalorder %s27, 0
      %p110 = por %p108, %p109
      %p111 = scmp.ne.s32.totalorder %s103, %s105
      %p112 = scmp.eq.s32.totalorder %s32, 1
      %p113 = por %p111, %p112
      %p114 = scmp.ne.s32.totalorder %s105, %s106
      %p115 = scmp.eq.s32.totalorder %s32, 0
      %p116 = por %p114, %p115
      %p117 = scmp.ne.s32.totalorder %s105, %s106
      %p118 = scmp.eq.s32.totalorder %s33, 1
      %p119 = por %p117, %p118
      %p121 = scmp.ne.s32.totalorder %s106, %s120
      %p122 = scmp.eq.s32.totalorder %s33, 0
      %p123 = por %p121, %p122
      %s125 = sadd.s32 %s124, 1
      %p128 = scmp.eq.s32.totalorder %s27, 1
      %p129 = scmp.ne.s32.totalorder %s124, %s126
      %p130 = scmp.eq.s32.totalorder %s27, 0
      %p131 = por %p129, %p130
      %p132 = scmp.ne.s32.totalorder %s124, %s126
      %p133 = scmp.eq.s32.totalorder %s32, 1
      %p134 = por %p132, %p133
      %p135 = scmp.ne.s32.totalorder %s126, %s127
      %p136 = scmp.eq.s32.totalorder %s32, 0
      %p137 = por %p135, %p136
      %p138 = scmp.ne.s32.totalorder %s126, %s127
      %p139 = scmp.eq.s32.totalorder %s33, 1
      %p140 = por %p138, %p139
      %p142 = scmp.ne.s32.totalorder %s127, %s141
      %p143 = scmp.eq.s32.totalorder %s33, 0
      %p144 = por %p142, %p143
      %s146 = sadd.s32 %s145, 1
      %p149 = scmp.eq.s32.totalorder %s27, 1
      %p150 = scmp.ne.s32.totalorder %s145, %s147
      %p151 = scmp.eq.s32.totalorder %s27, 0
      %p152 = por %p150, %p151
      %p153 = scmp.ne.s32.totalorder %s145, %s147
      %p154 = scmp.eq.s32.totalorder %s32, 1
      %p155 = por %p153, %p154
      %p156 = scmp.ne.s32.totalorder %s147, %s148
      %p157 = scmp.eq.s32.totalorder %s32, 0
      %p158 = por %p156, %p157
      %p159 = scmp.ne.s32.totalorder %s147, %s148
      %p160 = scmp.eq.s32.totalorder %s33, 1
      %p161 = por %p159, %p160
      %p163 = scmp.ne.s32.totalorder %s148, %s162
      %p164 = scmp.eq.s32.totalorder %s33, 0
      %p165 = por %p163, %p164
      %s167 = sadd.s32 %s166, 1
      %p170 = scmp.eq.s32.totalorder %s27, 1
      %p171 = scmp.ne.s32.totalorder %s166, %s168
      %p172 = scmp.eq.s32.totalorder %s27, 0
      %p173 = por %p171, %p172
      %p174 = scmp.ne.s32.totalorder %s166, %s168
      %p175 = scmp.eq.s32.totalorder %s32, 1
      %p176 = por %p174, %p175
      %p177 = scmp.ne.s32.totalorder %s168, %s169
      %p178 = scmp.eq.s32.totalorder %s32, 0
      %p179 = por %p177, %p178
      %p180 = scmp.ne.s32.totalorder %s168, %s169
      %p181 = scmp.eq.s32.totalorder %s33, 1
      %p182 = por %p180, %p181
      %p184 = scmp.ne.s32.totalorder %s169, %s183
      %p185 = scmp.eq.s32.totalorder %s33, 0
      %p186 = por %p184, %p185
      %s188 = sadd.s32 %s187, 1
      %p191 = scmp.eq.s32.totalorder %s27, 1
      %p192 = scmp.ne.s32.totalorder %s187, %s189
      %p193 = scmp.eq.s32.totalorder %s27, 0
      %p194 = por %p192, %p193
      %p195 = scmp.ne.s32.totalorder %s187, %s189
      %p196 = scmp.eq.s32.totalorder %s32, 1
      %p197 = por %p195, %p196
      %p198 = scmp.ne.s32.totalorder %s189, %s190
      %p199 = scmp.eq.s32.totalorder %s32, 0
      %p200 = por %p198, %p199
      %p201 = scmp.ne.s32.totalorder %s189, %s190
      %p202 = scmp.eq.s32.totalorder %s33, 1
      %p203 = por %p201, %p202
      %p205 = scmp.ne.s32.totalorder %s190, %s204
      %p206 = scmp.eq.s32.totalorder %s33, 0
      %p207 = por %p205, %p206
      %s209 = sadd.s32 %s208, 1
      %p212 = scmp.eq.s32.totalorder %s27, 1
      %p213 = scmp.ne.s32.totalorder %s208, %s210
      %p214 = scmp.eq.s32.totalorder %s27, 0
      %p215 = por %p213, %p214
      %p216 = scmp.ne.s32.totalorder %s208, %s210
      %p217 = scmp.eq.s32.totalorder %s32, 1
      %p218 = por %p216, %p217
      %p219 = scmp.ne.s32.totalorder %s210, %s211
      %p220 = scmp.eq.s32.totalorder %s32, 0
      %p221 = por %p219, %p220
      %p222 = scmp.ne.s32.totalorder %s210, %s211
      %p223 = scmp.eq.s32.totalorder %s33, 1
      %p224 = por %p222, %p223
      %p226 = scmp.ne.s32.totalorder %s211, %s225
      %p227 = scmp.eq.s32.totalorder %s33, 0
      %p228 = por %p226, %p227
      %s230 = sadd.s32 %s229, 1
      %p233 = scmp.eq.s32.totalorder %s27, 1
      %p234 = scmp.ne.s32.totalorder %s229, %s231
      %p235 = scmp.eq.s32.totalorder %s27, 0
      %p236 = por %p234, %p235
      %p237 = scmp.ne.s32.totalorder %s229, %s231
      %p238 = scmp.eq.s32.totalorder %s32, 1
      %p239 = por %p237, %p238
      %p240 = scmp.ne.s32.totalorder %s231, %s232
      %p241 = scmp.eq.s32.totalorder %s32, 0
      %p242 = por %p240, %p241
      %p243 = scmp.ne.s32.totalorder %s231, %s232
      %p244 = scmp.eq.s32.totalorder %s33, 1
      %p245 = por %p243, %p244
      %p247 = scmp.ne.s32.totalorder %s232, %s246
      %p248 = scmp.eq.s32.totalorder %s33, 0
      %p249 = por %p247, %p248
      %s251 = sadd.s32 %s250, 1
      %p254 = scmp.eq.s32.totalorder %s27, 1
      %p255 = scmp.ne.s32.totalorder %s250, %s252
      %p256 = scmp.eq.s32.totalorder %s27, 0
      %p257 = por %p255, %p256
      %p258 = scmp.ne.s32.totalorder %s250, %s252
      %p259 = scmp.eq.s32.totalorder %s32, 1
      %p260 = por %p258, %p259
      %p261 = scmp.ne.s32.totalorder %s252, %s253
      %p262 = scmp.eq.s32.totalorder %s32, 0
      %p263 = por %p261, %p262
      %p264 = scmp.ne.s32.totalorder %s252, %s253
      %p265 = scmp.eq.s32.totalorder %s33, 1
      %p266 = por %p264, %p265
      %p268 = scmp.ne.s32.totalorder %s253, %s267
      %p269 = scmp.eq.s32.totalorder %s33, 0
      %p270 = por %p268, %p269
      %s272 = sadd.s32 %s271, 1
      %p275 = scmp.eq.s32.totalorder %s27, 1
      %p276 = scmp.ne.s32.totalorder %s271, %s273
      %p277 = scmp.eq.s32.totalorder %s27, 0
      %p278 = por %p276, %p277
      %p279 = scmp.ne.s32.totalorder %s271, %s273
      %p280 = scmp.eq.s32.totalorder %s32, 1
      %p281 = por %p279, %p280
      %p282 = scmp.ne.s32.totalorder %s273, %s274
      %p283 = scmp.eq.s32.totalorder %s32, 0
      %p284 = por %p282, %p283
      %p285 = scmp.ne.s32.totalorder %s273, %s274
      %p286 = scmp.eq.s32.totalorder %s33, 1
      %p287 = por %p285, %p286
      %p289 = scmp.ne.s32.totalorder %s274, %s288
      %p290 = scmp.eq.s32.totalorder %s33, 0
      %p291 = por %p289, %p290
      %s293 = sadd.s32 %s292, 1
      %p296 = scmp.eq.s32.totalorder %s27, 1
      %p297 = scmp.ne.s32.totalorder %s292, %s294
      %p298 = scmp.eq.s32.totalorder %s27, 0
      %p299 = por %p297, %p298
      %p300 = scmp.ne.s32.totalorder %s292, %s294
      %p301 = scmp.eq.s32.totalorder %s32, 1
      %p302 = por %p300, %p301
      %p303 = scmp.ne.s32.totalorder %s294, %s295
      %p304 = scmp.eq.s32.totalorder %s32, 0
      %p305 = por %p303, %p304
      %p306 = scmp.ne.s32.totalorder %s294, %s295
      %p307 = scmp.eq.s32.totalorder %s33, 1
      %p308 = por %p306, %p307
      %p310 = scmp.ne.s32.totalorder %s295, %s309
      %p311 = scmp.eq.s32.totalorder %s33, 0
      %p312 = por %p310, %p311
      %s313 = ssub.s32 %s27, %s34
      %p314 = scmp.eq.s32.totalorder %s313, 0
      %s316 = sadd.s32 %s315, 1
      %s317 = scalar_select %p314, %s315, %s316
      %p320 = pneg %p314
      %p321 = scmp.eq.s32.totalorder %s27, 1
      %p322 = por %p320, %p321
      %p323 = scmp.ne.s32.totalorder %s315, %s318
      %p324 = scmp.eq.s32.totalorder %s27, 0
      %p325 = por %p323, %p324
      %p326 = scmp.ne.s32.totalorder %s315, %s318
      %p327 = scmp.eq.s32.totalorder %s32, 1
      %p328 = por %p326, %p327
      %p329 = scmp.ne.s32.totalorder %s318, %s319
      %p330 = scmp.eq.s32.totalorder %s32, 0
      %p331 = por %p329, %p330
      %p332 = scmp.ne.s32.totalorder %s318, %s319
      %p333 = scmp.eq.s32.totalorder %s33, 1
      %p334 = por %p332, %p333
      %p336 = scmp.ne.s32.totalorder %s319, %s335
      %p337 = scmp.eq.s32.totalorder %s33, 0
      %p338 = por %p336, %p337
      %p339 = scmp.le.s32.totalorder 1, %s27
      %p340 = scmp.lt.s32.totalorder %s27, 3
      %p341 = pnand %p339, %p340
      %p342 = pneg %p341
      // Predicated region
      $region9: #{tpu_custom_call.1} parent=5 // pred_check
        _
      $region10: #{tpu_custom_call.1} parent=5 // pred_check_branch
        %344 = sbr.rel (%p341) target = $region12
      $region11: #{tpu_custom_call.1} parent=5 // pred_region
        %s345 = ssub.s32 %s27, 1
        // Predicated region
        $region13: #{tpu_custom_call.1} parent=11 // pred_check
          %p346 = pneg %p74
        $region14: #{tpu_custom_call.1} parent=11 // pred_check_branch
          %348 = sbr.rel (%p346) target = $region16
        $region15: #{tpu_custom_call.1} parent=11 // pred_region
          %s350 = ssub.s32 12288, 12288
          %351 = vsyncadd [#allocation6], %s350
          %s352 = sshll.u32 [#allocation5], 4
          %s353 = int_to_ptr.vmem [resolvable:$true] %s352
          %358 = dma.hbm_to_vmem [thread:$0]  %s1, 12288, %s353, [#allocation6], 384, 384, 24
        $region16: #{tpu_custom_call.1} parent=11 // pred_fallthru
          _
        // Predicated region
        $region17: #{tpu_custom_call.1} parent=11 // pred_check
          %p359 = pneg %p95
        $region18: #{tpu_custom_call.1} parent=11 // pred_check_branch
          %361 = sbr.rel (%p359) target = $region20
        $region19: #{tpu_custom_call.1} parent=11 // pred_region
          _
        $region20: #{tpu_custom_call.1} parent=11 // pred_fallthru
          _
        // Predicated region
        $region21: #{tpu_custom_call.1} parent=11 // pred_check
          %p362 = pneg %p116
        $region22: #{tpu_custom_call.1} parent=11 // pred_check_branch
          %364 = sbr.rel (%p362) target = $region24
        $region23: #{tpu_custom_call.1} parent=11 // pred_region
          %s366 = ssub.s32 4096, 4096
          %367 = vsyncadd [#allocation6], %s366
          %s368 = sshll.u32 [#allocation7], 4
          %s369 = int_to_ptr.vmem [resolvable:$true] %s368
          %374 = dma.hbm_to_vmem [thread:$0]  %s3, 4096, %s369, [#allocation6], 128, 128, 8
        $region24: #{tpu_custom_call.1} parent=11 // pred_fallthru
          _
        // Predicated region
        $region25: #{tpu_custom_call.1} parent=11 // pred_check
          %p375 = pneg %p137
        $region26: #{tpu_custom_call.1} parent=11 // pred_check_branch
          %377 = sbr.rel (%p375) target = $region28
        $region27: #{tpu_custom_call.1} parent=11 // pred_region
          _
        $region28: #{tpu_custom_call.1} parent=11 // pred_fallthru
          _
        // Predicated region
        $region29: #{tpu_custom_call.1} parent=11 // pred_check
          %p378 = pneg %p158
        $region30: #{tpu_custom_call.1} parent=11 // pred_check_branch
          %380 = sbr.rel (%p378) target = $region32
        $region31: #{tpu_custom_call.1} parent=11 // pred_region
          _
        $region32: #{tpu_custom_call.1} parent=11 // pred_fallthru
          _
        // Predicated region
        $region33: #{tpu_custom_call.1} parent=11 // pred_check
          %p381 = pneg %p179
        $region34: #{tpu_custom_call.1} parent=11 // pred_check_branch
          %383 = sbr.rel (%p381) target = $region36
        $region35: #{tpu_custom_call.1} parent=11 // pred_region
          _
        $region36: #{tpu_custom_call.1} parent=11 // pred_fallthru
          _
        // Predicated region
        $region37: #{tpu_custom_call.1} parent=11 // pred_check
          %p384 = pneg %p200
        $region38: #{tpu_custom_call.1} parent=11 // pred_check_branch
          %386 = sbr.rel (%p384) target = $region40
        $region39: #{tpu_custom_call.1} parent=11 // pred_region
          %s388 = ssub.s32 8192, 8192
          %389 = vsyncadd [#allocation9], %s388
          %s390 = sshll.u32 [#allocation8], 4
          %s391 = int_to_ptr.vmem [resolvable:$true] %s390
          %396 = dma.hbm_to_vmem [thread:$0]  %s7, 8192, %s391, [#allocation9], 256, 256, 16
        $region40: #{tpu_custom_call.1} parent=11 // pred_fallthru
          _
        // Predicated region
        $region41: #{tpu_custom_call.1} parent=11 // pred_check
          %p397 = pneg %p221
        $region42: #{tpu_custom_call.1} parent=11 // pred_check_branch
          %399 = sbr.rel (%p397) target = $region44
        $region43: #{tpu_custom_call.1} parent=11 // pred_region
          _
        $region44: #{tpu_custom_call.1} parent=11 // pred_fallthru
          _
        // Predicated region
        $region45: #{tpu_custom_call.1} parent=11 // pred_check
          %p400 = pneg %p242
        $region46: #{tpu_custom_call.1} parent=11 // pred_check_branch
          %402 = sbr.rel (%p400) target = $region48
        $region47: #{tpu_custom_call.1} parent=11 // pred_region
          %s404 = ssub.s32 8192, 8192
          %405 = vsyncadd [#allocation9], %s404
          %s406 = sshll.u32 [#allocation10], 4
          %s407 = int_to_ptr.vmem [resolvable:$true] %s406
          %412 = dma.hbm_to_vmem [thread:$0]  %s9, 8192, %s407, [#allocation9], 128, 128, 8
        $region48: #{tpu_custom_call.1} parent=11 // pred_fallthru
          _
        // Predicated region
        $region49: #{tpu_custom_call.1} parent=11 // pred_check
          %p413 = pneg %p263
        $region50: #{tpu_custom_call.1} parent=11 // pred_check_branch
          %415 = sbr.rel (%p413) target = $region52
        $region51: #{tpu_custom_call.1} parent=11 // pred_region
          _
        $region52: #{tpu_custom_call.1} parent=11 // pred_fallthru
          _
        // Predicated region
        $region53: #{tpu_custom_call.1} parent=11 // pred_check
          %p416 = pneg %p284
        $region54: #{tpu_custom_call.1} parent=11 // pred_check_branch
          %418 = sbr.rel (%p416) target = $region56
        $region55: #{tpu_custom_call.1} parent=11 // pred_region
          _
        $region56: #{tpu_custom_call.1} parent=11 // pred_fallthru
          _
        // Predicated region
        $region57: #{tpu_custom_call.1} parent=11 // pred_check
          %p419 = pneg %p305
        $region58: #{tpu_custom_call.1} parent=11 // pred_check_branch
          %421 = sbr.rel (%p419) target = $region60
        $region59: #{tpu_custom_call.1} parent=11 // pred_region
          _
        $region60: #{tpu_custom_call.1} parent=11 // pred_fallthru
          _
      $region12: #{tpu_custom_call.1} parent=5 // pred_fallthru
        _
      %p422 = scmp.lt.s32.totalorder %s27, 2
      // Predicated region
      $region61: #{tpu_custom_call.1} parent=5 // pred_check
        %p423 = pneg %p422
      $region62: #{tpu_custom_call.1} parent=5 // pred_check_branch
        %425 = sbr.rel (%p423) target = $region64
      $region63: #{tpu_custom_call.1} parent=5 // pred_region
        // Predicated region
        $region65: #{tpu_custom_call.1} parent=63 // pred_check
          %p426 = pneg %p47
        $region66: #{tpu_custom_call.1} parent=63 // pred_check_branch
          %428 = sbr.rel (%p426) target = $region68
        $region67: #{tpu_custom_call.1} parent=63 // pred_region
          %s429 = sand.u32 %s37, 1
          %s430 = scalar_lea.sflag [#allocation3], %s429
          %s431 = sand.u32 %s37, 1
          %s432 = smul.addr %s431, 128
          %s433 = scalar_lea.vmem [#allocation2], %s432
          %s434 = smul.u32 2, %s27
          %s436 = ssub.s32 2048, 2048
          %437 = vsyncadd %s430, %s436
          %s438 = smul.addr %s434, 8
          %s439 = smul.addr %s438, 128
          %s440 = scalar_lea.hbm %s0, %s439
          %s441 = sshll.u32 %s433, 4
          %s442 = int_to_ptr.vmem [resolvable:$true] %s441
          %447 = dma.hbm_to_vmem [thread:$0]  %s440, 2048, %s442, %s430, 256, 256, 16
        $region68: #{tpu_custom_call.1} parent=63 // pred_fallthru
          _
      $region64: #{tpu_custom_call.1} parent=5 // pred_fallthru
        _
      %p448 = scmp.le.s32.totalorder 1, %s27
      %p449 = scmp.lt.s32.totalorder %s27, 3
      %p450 = pnand %p448, %p449
      %p451 = pneg %p450
      // Predicated region
      $region69: #{tpu_custom_call.1} parent=5 // pred_check
        _
      $region70: #{tpu_custom_call.1} parent=5 // pred_check_branch
        %453 = sbr.rel (%p450) target = $region72
      $region71: #{tpu_custom_call.1} parent=5 // pred_region
        %s454 = ssub.s32 %s27, 1
        %s455 = sand.u32 %s40, 1
        %s456 = scalar_lea.sflag [#allocation3], %s455
        %s457 = sand.u32 %s40, 1
        %s458 = smul.addr %s457, 128
        %s459 = scalar_lea.vmem [#allocation2], %s458
        // Predicated region
        $region73: #{tpu_custom_call.1} parent=71 // pred_check
          %p460 = pneg %p53
        $region74: #{tpu_custom_call.1} parent=71 // pred_check_branch
          %462 = sbr.rel (%p460) target = $region76
        $region75: #{tpu_custom_call.1} parent=71 // pred_region
          %463 = dma.done %s456, 2048
        $region76: #{tpu_custom_call.1} parent=71 // pred_fallthru
          _
        // Predicated region
        $region77: #{tpu_custom_call.1} parent=71 // pred_check
          %p464 = pneg %p74
        $region78: #{tpu_custom_call.1} parent=71 // pred_check_branch
          %466 = sbr.rel (%p464) target = $region80
        $region79: #{tpu_custom_call.1} parent=71 // pred_region
          %467 = dma.done [#allocation6], 12288
        $region80: #{tpu_custom_call.1} parent=71 // pred_fallthru
          _
        // Predicated region
        $region81: #{tpu_custom_call.1} parent=71 // pred_check
          %p468 = pneg %p116
        $region82: #{tpu_custom_call.1} parent=71 // pred_check_branch
          %470 = sbr.rel (%p468) target = $region84
        $region83: #{tpu_custom_call.1} parent=71 // pred_region
          %471 = dma.done [#allocation6], 4096
        $region84: #{tpu_custom_call.1} parent=71 // pred_fallthru
          _
        // Predicated region
        $region85: #{tpu_custom_call.1} parent=71 // pred_check
          %p472 = pneg %p200
        $region86: #{tpu_custom_call.1} parent=71 // pred_check_branch
          %474 = sbr.rel (%p472) target = $region88
        $region87: #{tpu_custom_call.1} parent=71 // pred_region
          %475 = dma.done [#allocation9], 8192
        $region88: #{tpu_custom_call.1} parent=71 // pred_fallthru
          _
        // Predicated region
        $region89: #{tpu_custom_call.1} parent=71 // pred_check
          %p476 = pneg %p242
        $region90: #{tpu_custom_call.1} parent=71 // pred_check_branch
          %478 = sbr.rel (%p476) target = $region92
        $region91: #{tpu_custom_call.1} parent=71 // pred_region
          %479 = dma.done [#allocation9], 8192
        $region92: #{tpu_custom_call.1} parent=71 // pred_fallthru
          _
        %s480 = sand.u32 %s40, 1
        %s481 = scalar_lea.sflag [#allocation3], %s480
        %s482 = sand.u32 %s40, 1
        %s483 = smul.addr %s482, 128
        %s484 = scalar_lea.vmem [#allocation2], %s483
        %p485 = pneg %p53
        %p486 = pneg %p50
        %p487 = pneg %p74
        %p488 = pneg %p71
        %p489 = pneg %p95
        %p490 = pneg %p92
        %p491 = pneg %p116
        %p492 = pneg %p113
        %p493 = pneg %p137
        %p494 = pneg %p134
        %p495 = pneg %p158
        %p496 = pneg %p155
        %p497 = pneg %p179
        %p498 = pneg %p176
        %p499 = pneg %p200
        %p500 = pneg %p197
        %p501 = pneg %p221
        %p502 = pneg %p218
        %p503 = pneg %p242
        %p504 = pneg %p239
        %p505 = pneg %p263
        %p506 = pneg %p260
        %p507 = pneg %p284
        %p508 = pneg %p281
        %p509 = pneg %p305
        %p510 = pneg %p302
        %p511 = pneg %p331
        %p512 = pneg %p328
        %s513 = sand.u32 %s318, 1
        %s514 = scalar_lea.sflag [#allocation4], %s513
        %s515 = sand.u32 %s318, 1
        %s516 = smul.addr %s515, 128
        %s517 = scalar_lea.vmem [#allocation11], %s516
        %s518 = smul.u32 2, %s32
        %s519 = smul.u32 2, %s32
        %v521 = vld [vmem:[%s459] sm:$0xff]
        %v522 = vld [vmem:[%s459 + $0x8] sm:$0xff]
        %v523 = vld [vmem:[%s459 + $0x10] sm:$0xff]
        %v524 = vld [vmem:[%s459 + $0x18] sm:$0xff]
        %v525 = vld [vmem:[%s459 + $0x20] sm:$0xff]
        %v526 = vld [vmem:[%s459 + $0x28] sm:$0xff]
        %v527 = vld [vmem:[%s459 + $0x30] sm:$0xff]
        %v528 = vld [vmem:[%s459 + $0x38] sm:$0xff]
        %v529 = vld [vmem:[%s459 + $0x40] sm:$0xff]
        %v530 = vld [vmem:[%s459 + $0x48] sm:$0xff]
        %v531 = vld [vmem:[%s459 + $0x50] sm:$0xff]
        %v532 = vld [vmem:[%s459 + $0x58] sm:$0xff]
        %v533 = vld [vmem:[%s459 + $0x60] sm:$0xff]
        %v534 = vld [vmem:[%s459 + $0x68] sm:$0xff]
        %v535 = vld [vmem:[%s459 + $0x70] sm:$0xff]
        %v536 = vld [vmem:[%s459 + $0x78] sm:$0xff]
        %v537 = vpack.c.bf16 %v523, %v521
        %v538 = vpack.c.bf16 %v524, %v522
        %v539 = vpack.c.bf16 %v527, %v525
        %v540 = vpack.c.bf16 %v528, %v526
        %v541 = vpack.c.bf16 %v531, %v529
        %v542 = vpack.c.bf16 %v532, %v530
        %v543 = vpack.c.bf16 %v535, %v533
        %v544 = vpack.c.bf16 %v536, %v534
        %v545 = vld [vmem:[#allocation5] sm:$0xff]
        %v546 = vld [vmem:[#allocation5 + $0x8] sm:$0xff]
        %v547 = vld [vmem:[#allocation5 + $0x10] sm:$0xff]
        %v548 = vld [vmem:[#allocation5 + $0x18] sm:$0xff]
        %v549 = vld [vmem:[#allocation5 + $0x20] sm:$0xff]
        %v550 = vld [vmem:[#allocation5 + $0x28] sm:$0xff]
        %v551 = vld [vmem:[#allocation5 + $0x30] sm:$0xff]
        %v552 = vld [vmem:[#allocation5 + $0x38] sm:$0xff]
        %v553 = vld [vmem:[#allocation5 + $0x40] sm:$0xff]
        %v554 = vld [vmem:[#allocation5 + $0x48] sm:$0xff]
        %v555 = vld [vmem:[#allocation5 + $0x50] sm:$0xff]
        %v556 = vld [vmem:[#allocation5 + $0x58] sm:$0xff]
        %v557 = vld [vmem:[#allocation5 + $0x60] sm:$0xff]
        %v558 = vld [vmem:[#allocation5 + $0x68] sm:$0xff]
        %v559 = vld [vmem:[#allocation5 + $0x70] sm:$0xff]
        %v560 = vld [vmem:[#allocation5 + $0x78] sm:$0xff]
        %v561 = vld [vmem:[#allocation5 + $0x80] sm:$0xff]
        %v562 = vld [vmem:[#allocation5 + $0x88] sm:$0xff]
        %v563 = vld [vmem:[#allocation5 + $0x90] sm:$0xff]
        %v564 = vld [vmem:[#allocation5 + $0x98] sm:$0xff]
        %v565 = vld [vmem:[#allocation5 + $0xa0] sm:$0xff]
        %v566 = vld [vmem:[#allocation5 + $0xa8] sm:$0xff]
        %v567 = vld [vmem:[#allocation5 + $0xb0] sm:$0xff]
        %v568 = vld [vmem:[#allocation5 + $0xb8] sm:$0xff]
        %v569 = vld [vmem:[#allocation5 + $0xc0] sm:$0xff]
        %v570 = vld [vmem:[#allocation5 + $0xc8] sm:$0xff]
        %v571 = vld [vmem:[#allocation5 + $0xd0] sm:$0xff]
        %v572 = vld [vmem:[#allocation5 + $0xd8] sm:$0xff]
        %v573 = vld [vmem:[#allocation5 + $0xe0] sm:$0xff]
        %v574 = vld [vmem:[#allocation5 + $0xe8] sm:$0xff]
        %v575 = vld [vmem:[#allocation5 + $0xf0] sm:$0xff]
        %v576 = vld [vmem:[#allocation5 + $0xf8] sm:$0xff]
        %v577 = vld [vmem:[#allocation5 + $0x100] sm:$0xff]
        %v578 = vld [vmem:[#allocation5 + $0x108] sm:$0xff]
        %v579 = vld [vmem:[#allocation5 + $0x110] sm:$0xff]
        %v580 = vld [vmem:[#allocation5 + $0x118] sm:$0xff]
        %v581 = vld [vmem:[#allocation5 + $0x120] sm:$0xff]
        %v582 = vld [vmem:[#allocation5 + $0x128] sm:$0xff]
        %v583 = vld [vmem:[#allocation5 + $0x130] sm:$0xff]
        %v584 = vld [vmem:[#allocation5 + $0x138] sm:$0xff]
        %v585 = vld [vmem:[#allocation5 + $0x140] sm:$0xff]
        %v586 = vld [vmem:[#allocation5 + $0x148] sm:$0xff]
        %v587 = vld [vmem:[#allocation5 + $0x150] sm:$0xff]
        %v588 = vld [vmem:[#allocation5 + $0x158] sm:$0xff]
        %v589 = vld [vmem:[#allocation5 + $0x160] sm:$0xff]
        %v590 = vld [vmem:[#allocation5 + $0x168] sm:$0xff]
        %v591 = vld [vmem:[#allocation5 + $0x170] sm:$0xff]
        %v592 = vld [vmem:[#allocation5 + $0x178] sm:$0xff]
        %v593 = vld [vmem:[#allocation5 + $0x180] sm:$0xff]
        %v594 = vld [vmem:[#allocation5 + $0x188] sm:$0xff]
        %v595 = vld [vmem:[#allocation5 + $0x190] sm:$0xff]
        %v596 = vld [vmem:[#allocation5 + $0x198] sm:$0xff]
        %v597 = vld [vmem:[#allocation5 + $0x1a0] sm:$0xff]
        %v598 = vld [vmem:[#allocation5 + $0x1a8] sm:$0xff]
        %v599 = vld [vmem:[#allocation5 + $0x1b0] sm:$0xff]
        %v600 = vld [vmem:[#allocation5 + $0x1b8] sm:$0xff]
        %v601 = vld [vmem:[#allocation5 + $0x1c0] sm:$0xff]
        %v602 = vld [vmem:[#allocation5 + $0x1c8] sm:$0xff]
        %v603 = vld [vmem:[#allocation5 + $0x1d0] sm:$0xff]
        %v604 = vld [vmem:[#allocation5 + $0x1d8] sm:$0xff]
        %v605 = vld [vmem:[#allocation5 + $0x1e0] sm:$0xff]
        %v606 = vld [vmem:[#allocation5 + $0x1e8] sm:$0xff]
        %v607 = vld [vmem:[#allocation5 + $0x1f0] sm:$0xff]
        %v608 = vld [vmem:[#allocation5 + $0x1f8] sm:$0xff]
        %v609 = vld [vmem:[#allocation5 + $0x200] sm:$0xff]
        %v610 = vld [vmem:[#allocation5 + $0x208] sm:$0xff]
        %v611 = vld [vmem:[#allocation5 + $0x210] sm:$0xff]
        %v612 = vld [vmem:[#allocation5 + $0x218] sm:$0xff]
        %v613 = vld [vmem:[#allocation5 + $0x220] sm:$0xff]
        %v614 = vld [vmem:[#allocation5 + $0x228] sm:$0xff]
        %v615 = vld [vmem:[#allocation5 + $0x230] sm:$0xff]
        %v616 = vld [vmem:[#allocation5 + $0x238] sm:$0xff]
        %v617 = vld [vmem:[#allocation5 + $0x240] sm:$0xff]
        %v618 = vld [vmem:[#allocation5 + $0x248] sm:$0xff]
        %v619 = vld [vmem:[#allocation5 + $0x250] sm:$0xff]
        %v620 = vld [vmem:[#allocation5 + $0x258] sm:$0xff]
        %v621 = vld [vmem:[#allocation5 + $0x260] sm:$0xff]
        %v622 = vld [vmem:[#allocation5 + $0x268] sm:$0xff]
        %v623 = vld [vmem:[#allocation5 + $0x270] sm:$0xff]
        %v624 = vld [vmem:[#allocation5 + $0x278] sm:$0xff]
        %v625 = vld [vmem:[#allocation5 + $0x280] sm:$0xff]
        %v626 = vld [vmem:[#allocation5 + $0x288] sm:$0xff]
        %v627 = vld [vmem:[#allocation5 + $0x290] sm:$0xff]
        %v628 = vld [vmem:[#allocation5 + $0x298] sm:$0xff]
        %v629 = vld [vmem:[#allocation5 + $0x2a0] sm:$0xff]
        %v630 = vld [vmem:[#allocation5 + $0x2a8] sm:$0xff]
        %v631 = vld [vmem:[#allocation5 + $0x2b0] sm:$0xff]
        %v632 = vld [vmem:[#allocation5 + $0x2b8] sm:$0xff]
        %v633 = vld [vmem:[#allocation5 + $0x2c0] sm:$0xff]
        %v634 = vld [vmem:[#allocation5 + $0x2c8] sm:$0xff]
        %v635 = vld [vmem:[#allocation5 + $0x2d0] sm:$0xff]
        %v636 = vld [vmem:[#allocation5 + $0x2d8] sm:$0xff]
        %v637 = vld [vmem:[#allocation5 + $0x2e0] sm:$0xff]
        %v638 = vld [vmem:[#allocation5 + $0x2e8] sm:$0xff]
        %v639 = vld [vmem:[#allocation5 + $0x2f0] sm:$0xff]
        %v640 = vld [vmem:[#allocation5 + $0x2f8] sm:$0xff]
        %v641 = vld [vmem:[%s2] sm:$0x3f]
        %v643 = vlaneseq
        %v644 = vshrl.u32 %v643, 7
        %v645 = vsub.s32 0, %v644
        %v646 = vrot.slane %v641, %v645
        %v647 = vlaneseq
        %v648 = vshrl.u32 %v647, 7
        %v649 = vsub.s32 1, %v648
        %v650 = vrot.slane %v641, %v649
        %v651 = vlaneseq
        %v652 = vshrl.u32 %v651, 7
        %v653 = vsub.s32 2, %v652
        %v654 = vrot.slane %v641, %v653
        %v655 = vlaneseq
        %v656 = vshrl.u32 %v655, 7
        %v657 = vsub.s32 3, %v656
        %v658 = vrot.slane %v641, %v657
        %v659 = vlaneseq
        %v660 = vshrl.u32 %v659, 7
        %v661 = vsub.s32 4, %v660
        %v662 = vrot.slane %v641, %v661
        %v663 = vlaneseq
        %v664 = vshrl.u32 %v663, 7
        %v665 = vsub.s32 5, %v664
        %v666 = vrot.slane %v641, %v665
        %v769 = vunpack.c.l.b16 %v545
        %v770 = vunpack.c.h.b16 %v545
        %v771 = vunpack.c.l.b16 %v546
        %v772 = vunpack.c.h.b16 %v546
        %v773 = vunpack.c.l.b16 %v547
        %v774 = vunpack.c.h.b16 %v547
        %v775 = vunpack.c.l.b16 %v548
        %v776 = vunpack.c.h.b16 %v548
        %v777 = vunpack.c.l.b16 %v549
        %v778 = vunpack.c.h.b16 %v549
        %v779 = vunpack.c.l.b16 %v550
        %v780 = vunpack.c.h.b16 %v550
        %v781 = vunpack.c.l.b16 %v551
        %v782 = vunpack.c.h.b16 %v551
        %v783 = vunpack.c.l.b16 %v552
        %v784 = vunpack.c.h.b16 %v552
        %v785 = vunpack.c.l.b16 %v553
        %v786 = vunpack.c.h.b16 %v553
        %v787 = vunpack.c.l.b16 %v554
        %v788 = vunpack.c.h.b16 %v554
        %v789 = vunpack.c.l.b16 %v555
        %v790 = vunpack.c.h.b16 %v555
        %v791 = vunpack.c.l.b16 %v556
        %v792 = vunpack.c.h.b16 %v556
        %v793 = vunpack.c.l.b16 %v557
        %v794 = vunpack.c.h.b16 %v557
        %v795 = vunpack.c.l.b16 %v558
        %v796 = vunpack.c.h.b16 %v558
        %v797 = vunpack.c.l.b16 %v559
        %v798 = vunpack.c.h.b16 %v559
        %v799 = vunpack.c.l.b16 %v560
        %v800 = vunpack.c.h.b16 %v560
        %v801 = vunpack.c.l.b16 %v561
        %v802 = vunpack.c.h.b16 %v561
        %v803 = vunpack.c.l.b16 %v562
        %v804 = vunpack.c.h.b16 %v562
        %v805 = vunpack.c.l.b16 %v563
        %v806 = vunpack.c.h.b16 %v563
        %v807 = vunpack.c.l.b16 %v564
        %v808 = vunpack.c.h.b16 %v564
        %v809 = vunpack.c.l.b16 %v565
        %v810 = vunpack.c.h.b16 %v565
        %v811 = vunpack.c.l.b16 %v566
        %v812 = vunpack.c.h.b16 %v566
        %v813 = vunpack.c.l.b16 %v567
        %v814 = vunpack.c.h.b16 %v567
        %v815 = vunpack.c.l.b16 %v568
        %v816 = vunpack.c.h.b16 %v568
        %v817 = vunpack.c.l.b16 %v569
        %v818 = vunpack.c.h.b16 %v569
        %v819 = vunpack.c.l.b16 %v570
        %v820 = vunpack.c.h.b16 %v570
        %v821 = vunpack.c.l.b16 %v571
        %v822 = vunpack.c.h.b16 %v571
        %v823 = vunpack.c.l.b16 %v572
        %v824 = vunpack.c.h.b16 %v572
        %v825 = vunpack.c.l.b16 %v573
        %v826 = vunpack.c.h.b16 %v573
        %v827 = vunpack.c.l.b16 %v574
        %v828 = vunpack.c.h.b16 %v574
        %v829 = vunpack.c.l.b16 %v575
        %v830 = vunpack.c.h.b16 %v575
        %v831 = vunpack.c.l.b16 %v576
        %v832 = vunpack.c.h.b16 %v576
        %v833 = vunpack.c.l.b16 %v577
        %v834 = vunpack.c.h.b16 %v577
        %v835 = vunpack.c.l.b16 %v578
        %v836 = vunpack.c.h.b16 %v578
        %v837 = vunpack.c.l.b16 %v579
        %v838 = vunpack.c.h.b16 %v579
        %v839 = vunpack.c.l.b16 %v580
        %v840 = vunpack.c.h.b16 %v580
        %v841 = vunpack.c.l.b16 %v581
        %v842 = vunpack.c.h.b16 %v581
        %v843 = vunpack.c.l.b16 %v582
        %v844 = vunpack.c.h.b16 %v582
        %v845 = vunpack.c.l.b16 %v583
        %v846 = vunpack.c.h.b16 %v583
        %v847 = vunpack.c.l.b16 %v584
        %v848 = vunpack.c.h.b16 %v584
        %v849 = vunpack.c.l.b16 %v585
        %v850 = vunpack.c.h.b16 %v585
        %v851 = vunpack.c.l.b16 %v586
        %v852 = vunpack.c.h.b16 %v586
        %v853 = vunpack.c.l.b16 %v587
        %v854 = vunpack.c.h.b16 %v587
        %v855 = vunpack.c.l.b16 %v588
        %v856 = vunpack.c.h.b16 %v588
        %v857 = vunpack.c.l.b16 %v589
        %v858 = vunpack.c.h.b16 %v589
        %v859 = vunpack.c.l.b16 %v590
        %v860 = vunpack.c.h.b16 %v590
        %v861 = vunpack.c.l.b16 %v591
        %v862 = vunpack.c.h.b16 %v591
        %v863 = vunpack.c.l.b16 %v592
        %v864 = vunpack.c.h.b16 %v592
        %v865 = vunpack.c.l.b16 %v593
        %v866 = vunpack.c.h.b16 %v593
        %v867 = vunpack.c.l.b16 %v594
        %v868 = vunpack.c.h.b16 %v594
        %v869 = vunpack.c.l.b16 %v595
        %v870 = vunpack.c.h.b16 %v595
        %v871 = vunpack.c.l.b16 %v596
        %v872 = vunpack.c.h.b16 %v596
        %v873 = vunpack.c.l.b16 %v597
        %v874 = vunpack.c.h.b16 %v597
        %v875 = vunpack.c.l.b16 %v598
        %v876 = vunpack.c.h.b16 %v598
        %v877 = vunpack.c.l.b16 %v599
        %v878 = vunpack.c.h.b16 %v599
        %v879 = vunpack.c.l.b16 %v600
        %v880 = vunpack.c.h.b16 %v600
        %v881 = vunpack.c.l.b16 %v601
        %v882 = vunpack.c.h.b16 %v601
        %v883 = vunpack.c.l.b16 %v602
        %v884 = vunpack.c.h.b16 %v602
        %v885 = vunpack.c.l.b16 %v603
        %v886 = vunpack.c.h.b16 %v603
        %v887 = vunpack.c.l.b16 %v604
        %v888 = vunpack.c.h.b16 %v604
        %v889 = vunpack.c.l.b16 %v605
        %v890 = vunpack.c.h.b16 %v605
        %v891 = vunpack.c.l.b16 %v606
        %v892 = vunpack.c.h.b16 %v606
        %v893 = vunpack.c.l.b16 %v607
        %v894 = vunpack.c.h.b16 %v607
        %v895 = vunpack.c.l.b16 %v608
        %v896 = vunpack.c.h.b16 %v608
        %v897 = vunpack.c.l.b16 %v609
        %v898 = vunpack.c.h.b16 %v609
        %v899 = vunpack.c.l.b16 %v610
        %v900 = vunpack.c.h.b16 %v610
        %v901 = vunpack.c.l.b16 %v611
        %v902 = vunpack.c.h.b16 %v611
        %v903 = vunpack.c.l.b16 %v612
        %v904 = vunpack.c.h.b16 %v612
        %v905 = vunpack.c.l.b16 %v613
        %v906 = vunpack.c.h.b16 %v613
        %v907 = vunpack.c.l.b16 %v614
        %v908 = vunpack.c.h.b16 %v614
        %v909 = vunpack.c.l.b16 %v615
        %v910 = vunpack.c.h.b16 %v615
        %v911 = vunpack.c.l.b16 %v616
        %v912 = vunpack.c.h.b16 %v616
        %v913 = vunpack.c.l.b16 %v617
        %v914 = vunpack.c.h.b16 %v617
        %v915 = vunpack.c.l.b16 %v618
        %v916 = vunpack.c.h.b16 %v618
        %v917 = vunpack.c.l.b16 %v619
        %v918 = vunpack.c.h.b16 %v619
        %v919 = vunpack.c.l.b16 %v620
        %v920 = vunpack.c.h.b16 %v620
        %v921 = vunpack.c.l.b16 %v621
        %v922 = vunpack.c.h.b16 %v621
        %v923 = vunpack.c.l.b16 %v622
        %v924 = vunpack.c.h.b16 %v622
        %v925 = vunpack.c.l.b16 %v623
        %v926 = vunpack.c.h.b16 %v623
        %v927 = vunpack.c.l.b16 %v624
        %v928 = vunpack.c.h.b16 %v624
        %v929 = vunpack.c.l.b16 %v625
        %v930 = vunpack.c.h.b16 %v625
        %v931 = vunpack.c.l.b16 %v626
        %v932 = vunpack.c.h.b16 %v626
        %v933 = vunpack.c.l.b16 %v627
        %v934 = vunpack.c.h.b16 %v627
        %v935 = vunpack.c.l.b16 %v628
        %v936 = vunpack.c.h.b16 %v628
        %v937 = vunpack.c.l.b16 %v629
        %v938 = vunpack.c.h.b16 %v629
        %v939 = vunpack.c.l.b16 %v630
        %v940 = vunpack.c.h.b16 %v630
        %v941 = vunpack.c.l.b16 %v631
        %v942 = vunpack.c.h.b16 %v631
        %v943 = vunpack.c.l.b16 %v632
        %v944 = vunpack.c.h.b16 %v632
        %v945 = vunpack.c.l.b16 %v633
        %v946 = vunpack.c.h.b16 %v633
        %v947 = vunpack.c.l.b16 %v634
        %v948 = vunpack.c.h.b16 %v634
        %v949 = vunpack.c.l.b16 %v635
        %v950 = vunpack.c.h.b16 %v635
        %v951 = vunpack.c.l.b16 %v636
        %v952 = vunpack.c.h.b16 %v636
        %v953 = vunpack.c.l.b16 %v637
        %v954 = vunpack.c.h.b16 %v637
        %v955 = vunpack.c.l.b16 %v638
        %v956 = vunpack.c.h.b16 %v638
        %v957 = vunpack.c.l.b16 %v639
        %v958 = vunpack.c.h.b16 %v639
        %v959 = vunpack.c.l.b16 %v640
        %v960 = vunpack.c.h.b16 %v640
        %v961 = vpack.c.b16 %v775, %v769
        %v962 = vpack.c.b16 %v776, %v770
        %v963 = vpack.c.b16 %v777, %v771
        %v964 = vpack.c.b16 %v778, %v772
        %v965 = vpack.c.b16 %v779, %v773
        %v966 = vpack.c.b16 %v780, %v774
        %v967 = vpack.c.b16 %v787, %v781
        %v968 = vpack.c.b16 %v788, %v782
        %v969 = vpack.c.b16 %v789, %v783
        %v970 = vpack.c.b16 %v790, %v784
        %v971 = vpack.c.b16 %v791, %v785
        %v972 = vpack.c.b16 %v792, %v786
        %v973 = vpack.c.b16 %v799, %v793
        %v974 = vpack.c.b16 %v800, %v794
        %v975 = vpack.c.b16 %v801, %v795
        %v976 = vpack.c.b16 %v802, %v796
        %v977 = vpack.c.b16 %v803, %v797
        %v978 = vpack.c.b16 %v804, %v798
        %v979 = vpack.c.b16 %v811, %v805
        %v980 = vpack.c.b16 %v812, %v806
        %v981 = vpack.c.b16 %v813, %v807
        %v982 = vpack.c.b16 %v814, %v808
        %v983 = vpack.c.b16 %v815, %v809
        %v984 = vpack.c.b16 %v816, %v810
        %v985 = vpack.c.b16 %v823, %v817
        %v986 = vpack.c.b16 %v824, %v818
        %v987 = vpack.c.b16 %v825, %v819
        %v988 = vpack.c.b16 %v826, %v820
        %v989 = vpack.c.b16 %v827, %v821
        %v990 = vpack.c.b16 %v828, %v822
        %v991 = vpack.c.b16 %v835, %v829
        %v992 = vpack.c.b16 %v836, %v830
        %v993 = vpack.c.b16 %v837, %v831
        %v994 = vpack.c.b16 %v838, %v832
        %v995 = vpack.c.b16 %v839, %v833
        %v996 = vpack.c.b16 %v840, %v834
        %v997 = vpack.c.b16 %v847, %v841
        %v998 = vpack.c.b16 %v848, %v842
        %v999 = vpack.c.b16 %v849, %v843
        %v1000 = vpack.c.b16 %v850, %v844
        %v1001 = vpack.c.b16 %v851, %v845
        %v1002 = vpack.c.b16 %v852, %v846
        %v1003 = vpack.c.b16 %v859, %v853
        %v1004 = vpack.c.b16 %v860, %v854
        %v1005 = vpack.c.b16 %v861, %v855
        %v1006 = vpack.c.b16 %v862, %v856
        %v1007 = vpack.c.b16 %v863, %v857
        %v1008 = vpack.c.b16 %v864, %v858
        %v1009 = vpack.c.b16 %v871, %v865
        %v1010 = vpack.c.b16 %v872, %v866
        %v1011 = vpack.c.b16 %v873, %v867
        %v1012 = vpack.c.b16 %v874, %v868
        %v1013 = vpack.c.b16 %v875, %v869
        %v1014 = vpack.c.b16 %v876, %v870
        %v1015 = vpack.c.b16 %v883, %v877
        %v1016 = vpack.c.b16 %v884, %v878
        %v1017 = vpack.c.b16 %v885, %v879
        %v1018 = vpack.c.b16 %v886, %v880
        %v1019 = vpack.c.b16 %v887, %v881
        %v1020 = vpack.c.b16 %v888, %v882
        %v1021 = vpack.c.b16 %v895, %v889
        %v1022 = vpack.c.b16 %v896, %v890
        %v1023 = vpack.c.b16 %v897, %v891
        %v1024 = vpack.c.b16 %v898, %v892
        %v1025 = vpack.c.b16 %v899, %v893
        %v1026 = vpack.c.b16 %v900, %v894
        %v1027 = vpack.c.b16 %v907, %v901
        %v1028 = vpack.c.b16 %v908, %v902
        %v1029 = vpack.c.b16 %v909, %v903
        %v1030 = vpack.c.b16 %v910, %v904
        %v1031 = vpack.c.b16 %v911, %v905
        %v1032 = vpack.c.b16 %v912, %v906
        %v1033 = vpack.c.b16 %v919, %v913
        %v1034 = vpack.c.b16 %v920, %v914
        %v1035 = vpack.c.b16 %v921, %v915
        %v1036 = vpack.c.b16 %v922, %v916
        %v1037 = vpack.c.b16 %v923, %v917
        %v1038 = vpack.c.b16 %v924, %v918
        %v1039 = vpack.c.b16 %v931, %v925
        %v1040 = vpack.c.b16 %v932, %v926
        %v1041 = vpack.c.b16 %v933, %v927
        %v1042 = vpack.c.b16 %v934, %v928
        %v1043 = vpack.c.b16 %v935, %v929
        %v1044 = vpack.c.b16 %v936, %v930
        %v1045 = vpack.c.b16 %v943, %v937
        %v1046 = vpack.c.b16 %v944, %v938
        %v1047 = vpack.c.b16 %v945, %v939
        %v1048 = vpack.c.b16 %v946, %v940
        %v1049 = vpack.c.b16 %v947, %v941
        %v1050 = vpack.c.b16 %v948, %v942
        %v1051 = vpack.c.b16 %v955, %v949
        %v1052 = vpack.c.b16 %v956, %v950
        %v1053 = vpack.c.b16 %v957, %v951
        %v1054 = vpack.c.b16 %v958, %v952
        %v1055 = vpack.c.b16 %v959, %v953
        %v1056 = vpack.c.b16 %v960, %v954
        %1153 = vmatprep.subr.bf16.mxu0 %v962
        %1154 = vmatpush1.bf16.msra.mxu0 %v961
        %1155 = vmatprep.subr.bf16.mxu0 %v968
        %1156 = vmatpush1.bf16.msra.mxu0 %v967
        %1157 = vmatprep.subr.bf16.mxu0 %v974
        %1158 = vmatpush1.bf16.msra.mxu0 %v973
        %1159 = vmatprep.subr.bf16.mxu0 %v980
        %1160 = vmatpush1.bf16.msra.mxu0 %v979
        %1161 = vmatprep.subr.bf16.mxu0 %v986
        %1162 = vmatpush1.bf16.msra.mxu0 %v985
        %1163 = vmatprep.subr.bf16.mxu0 %v992
        %1164 = vmatpush1.bf16.msra.mxu0 %v991
        %1165 = vmatprep.subr.bf16.mxu0 %v998
        %1166 = vmatpush1.bf16.msra.mxu0 %v997
        %1167 = vmatprep.subr.bf16.mxu0 %v1004
        %1168 = vmatpush1.bf16.msra.mxu0 %v1003
        %1169 = vmatprep.subr.bf16.mxu0 %v1010
        %1170 = vmatpush1.bf16.msra.mxu0 %v1009
        %1171 = vmatprep.subr.bf16.mxu0 %v1016
        %1172 = vmatpush1.bf16.msra.mxu0 %v1015
        %1173 = vmatprep.subr.bf16.mxu0 %v1022
        %1174 = vmatpush1.bf16.msra.mxu0 %v1021
        %1175 = vmatprep.subr.bf16.mxu0 %v1028
        %1176 = vmatpush1.bf16.msra.mxu0 %v1027
        %1177 = vmatprep.subr.bf16.mxu0 %v1034
        %1178 = vmatpush1.bf16.msra.mxu0 %v1033
        %1179 = vmatprep.subr.bf16.mxu0 %v1040
        %1180 = vmatpush1.bf16.msra.mxu0 %v1039
        %1181 = vmatprep.subr.bf16.mxu0 %v1046
        %1182 = vmatpush1.bf16.msra.mxu0 %v1045
        %1183 = vmatprep.subr.bf16.mxu0 %v1052
        %1184 = vmatpush1.bf16.msra.mxu0 %v1051
        %1185 = vmatprep.mubr.bf16.mxu0 %v538
        %1186 = vmatmul.mubr.bf16.gmra.mrb[0].mxu0 %v537
        %v1187 = vpop.f32.mrb[0].mxu0
        %v1188 = vadd.f32 %v646, %v1187
        %v1189 = vpop.f32.mrb[0].mxu0
        %v1190 = vadd.f32 %v650, %v1189
        %v1191 = vpop.f32.mrb[0].mxu0
        %v1192 = vadd.f32 %v646, %v1191
        %v1193 = vpop.f32.mrb[0].mxu0
        %v1194 = vadd.f32 %v650, %v1193
        %1195 = vmatprep.mubr.bf16.mxu0 %v540
        %1196 = vmatmul.mubr.bf16.gmra.mrb[0].mxu0 %v539
        %v1197 = vpop.f32.mrb[0].mxu0
        %v1198 = vadd.f32 %v646, %v1197
        %v1199 = vpop.f32.mrb[0].mxu0
        %v1200 = vadd.f32 %v650, %v1199
        %v1201 = vpop.f32.mrb[0].mxu0
        %v1202 = vadd.f32 %v646, %v1201
        %v1203 = vpop.f32.mrb[0].mxu0
        %v1204 = vadd.f32 %v650, %v1203
        %1205 = vmatprep.mubr.bf16.mxu0 %v542
        %1206 = vmatmul.mubr.bf16.gmra.mrb[0].mxu0 %v541
        %v1207 = vpop.f32.mrb[0].mxu0
        %v1208 = vadd.f32 %v646, %v1207
        %v1209 = vpop.f32.mrb[0].mxu0
        %v1210 = vadd.f32 %v650, %v1209
        %v1211 = vpop.f32.mrb[0].mxu0
        %v1212 = vadd.f32 %v646, %v1211
        %v1213 = vpop.f32.mrb[0].mxu0
        %v1214 = vadd.f32 %v650, %v1213
        %1215 = vmatprep.mubr.bf16.mxu0 %v544
        %1216 = vmatmul.mubr.bf16.gmra.mrb[0].mxu0 %v543
        %v1217 = vpop.f32.mrb[0].mxu0
        %v1218 = vadd.f32 %v646, %v1217
        %v1219 = vpop.f32.mrb[0].mxu0
        %v1220 = vadd.f32 %v650, %v1219
        %v1221 = vpop.f32.mrb[0].mxu0
        %v1222 = vadd.f32 %v646, %v1221
        %v1223 = vpop.f32.mrb[0].mxu0
        %v1224 = vadd.f32 %v650, %v1223
        %1225 = vdwg.mxu0
        %1226 = vmatprep.subr.bf16.mxu0 %v964
        %1227 = vmatpush1.bf16.msra.mxu0 %v963
        %1228 = vmatprep.subr.bf16.mxu0 %v970
        %1229 = vmatpush1.bf16.msra.mxu0 %v969
        %1230 = vmatprep.subr.bf16.mxu0 %v976
        %1231 = vmatpush1.bf16.msra.mxu0 %v975
        %1232 = vmatprep.subr.bf16.mxu0 %v982
        %1233 = vmatpush1.bf16.msra.mxu0 %v981
        %1234 = vmatprep.subr.bf16.mxu0 %v988
        %1235 = vmatpush1.bf16.msra.mxu0 %v987
        %1236 = vmatprep.subr.bf16.mxu0 %v994
        %1237 = vmatpush1.bf16.msra.mxu0 %v993
        %1238 = vmatprep.subr.bf16.mxu0 %v1000
        %1239 = vmatpush1.bf16.msra.mxu0 %v999
        %1240 = vmatprep.subr.bf16.mxu0 %v1006
        %1241 = vmatpush1.bf16.msra.mxu0 %v1005
        %1242 = vmatprep.subr.bf16.mxu0 %v1012
        %1243 = vmatpush1.bf16.msra.mxu0 %v1011
        %1244 = vmatprep.subr.bf16.mxu0 %v1018
        %1245 = vmatpush1.bf16.msra.mxu0 %v1017
        %1246 = vmatprep.subr.bf16.mxu0 %v1024
        %1247 = vmatpush1.bf16.msra.mxu0 %v1023
        %1248 = vmatprep.subr.bf16.mxu0 %v1030
        %1249 = vmatpush1.bf16.msra.mxu0 %v1029
        %1250 = vmatprep.subr.bf16.mxu0 %v1036
        %1251 = vmatpush1.bf16.msra.mxu0 %v1035
        %1252 = vmatprep.subr.bf16.mxu0 %v1042
        %1253 = vmatpush1.bf16.msra.mxu0 %v1041
        %1254 = vmatprep.subr.bf16.mxu0 %v1048
        %1255 = vmatpush1.bf16.msra.mxu0 %v1047
        %1256 = vmatprep.subr.bf16.mxu0 %v1054
        %1257 = vmatpush1.bf16.msra.mxu0 %v1053
        %1258 = vmatprep.mubr.bf16.mxu0 %v538
        %1259 = vmatmul.mubr.bf16.gmra.mrb[0].mxu0 %v537
        %v1260 = vpop.f32.mrb[0].mxu0
        %v1261 = vadd.f32 %v654, %v1260
        %v1262 = vpop.f32.mrb[0].mxu0
        %v1263 = vadd.f32 %v658, %v1262
        %v1264 = vpop.f32.mrb[0].mxu0
        %v1265 = vadd.f32 %v654, %v1264
        %v1266 = vpop.f32.mrb[0].mxu0
        %v1267 = vadd.f32 %v658, %v1266
        %1268 = vmatprep.mubr.bf16.mxu0 %v540
        %1269 = vmatmul.mubr.bf16.gmra.mrb[0].mxu0 %v539
        %v1270 = vpop.f32.mrb[0].mxu0
        %v1271 = vadd.f32 %v654, %v1270
        %v1272 = vpop.f32.mrb[0].mxu0
        %v1273 = vadd.f32 %v658, %v1272
        %v1274 = vpop.f32.mrb[0].mxu0
        %v1275 = vadd.f32 %v654, %v1274
        %v1276 = vpop.f32.mrb[0].mxu0
        %v1277 = vadd.f32 %v658, %v1276
        %1278 = vmatprep.mubr.bf16.mxu0 %v542
        %1279 = vmatmul.mubr.bf16.gmra.mrb[0].mxu0 %v541
        %v1280 = vpop.f32.mrb[0].mxu0
        %v1281 = vadd.f32 %v654, %v1280
        %v1282 = vpop.f32.mrb[0].mxu0
        %v1283 = vadd.f32 %v658, %v1282
        %v1284 = vpop.f32.mrb[0].mxu0
        %v1285 = vadd.f32 %v654, %v1284
        %v1286 = vpop.f32.mrb[0].mxu0
        %v1287 = vadd.f32 %v658, %v1286
        %1288 = vmatprep.mubr.bf16.mxu0 %v544
        %1289 = vmatmul.mubr.bf16.gmra.mrb[0].mxu0 %v543
        %v1290 = vpop.f32.mrb[0].mxu0
        %v1291 = vadd.f32 %v654, %v1290
        %v1292 = vpop.f32.mrb[0].mxu0
        %v1293 = vadd.f32 %v658, %v1292
        %v1294 = vpop.f32.mrb[0].mxu0
        %v1295 = vadd.f32 %v654, %v1294
        %v1296 = vpop.f32.mrb[0].mxu0
        %v1297 = vadd.f32 %v658, %v1296
        %1298 = vdwg.mxu0
        %1299 = vmatprep.subr.bf16.mxu0 %v966
        %1300 = vmatpush1.bf16.msra.mxu0 %v965
        %1301 = vmatprep.subr.bf16.mxu0 %v972
        %1302 = vmatpush1.bf16.msra.mxu0 %v971
        %1303 = vmatprep.subr.bf16.mxu0 %v978
        %1304 = vmatpush1.bf16.msra.mxu0 %v977
        %1305 = vmatprep.subr.bf16.mxu0 %v984
        %1306 = vmatpush1.bf16.msra.mxu0 %v983
        %1307 = vmatprep.subr.bf16.mxu0 %v990
        %1308 = vmatpush1.bf16.msra.mxu0 %v989
        %1309 = vmatprep.subr.bf16.mxu0 %v996
        %1310 = vmatpush1.bf16.msra.mxu0 %v995
        %1311 = vmatprep.subr.bf16.mxu0 %v1002
        %1312 = vmatpush1.bf16.msra.mxu0 %v1001
        %1313 = vmatprep.subr.bf16.mxu0 %v1008
        %1314 = vmatpush1.bf16.msra.mxu0 %v1007
        %1315 = vmatprep.subr.bf16.mxu0 %v1014
        %1316 = vmatpush1.bf16.msra.mxu0 %v1013
        %1317 = vmatprep.subr.bf16.mxu0 %v1020
        %1318 = vmatpush1.bf16.msra.mxu0 %v1019
        %1319 = vmatprep.subr.bf16.mxu0 %v1026
        %1320 = vmatpush1.bf16.msra.mxu0 %v1025
        %1321 = vmatprep.subr.bf16.mxu0 %v1032
        %1322 = vmatpush1.bf16.msra.mxu0 %v1031
        %1323 = vmatprep.subr.bf16.mxu0 %v1038
        %1324 = vmatpush1.bf16.msra.mxu0 %v1037
        %1325 = vmatprep.subr.bf16.mxu0 %v1044
        %1326 = vmatpush1.bf16.msra.mxu0 %v1043
        %1327 = vmatprep.subr.bf16.mxu0 %v1050
        %1328 = vmatpush1.bf16.msra.mxu0 %v1049
        %1329 = vmatprep.subr.bf16.mxu0 %v1056
        %1330 = vmatpush1.bf16.msra.mxu0 %v1055
        %1331 = vmatprep.mubr.bf16.mxu0 %v538
        %1332 = vmatmul.mubr.bf16.gmra.mrb[0].mxu0 %v537
        %v1333 = vpop.f32.mrb[0].mxu0
        %v1334 = vadd.f32 %v662, %v1333
        %v1335 = vpop.f32.mrb[0].mxu0
        %v1336 = vadd.f32 %v666, %v1335
        %v1337 = vpop.f32.mrb[0].mxu0
        %v1338 = vadd.f32 %v662, %v1337
        %v1339 = vpop.f32.mrb[0].mxu0
        %v1340 = vadd.f32 %v666, %v1339
        %1341 = vmatprep.mubr.bf16.mxu0 %v540
        %1342 = vmatmul.mubr.bf16.gmra.mrb[0].mxu0 %v539
        %v1343 = vpop.f32.mrb[0].mxu0
        %v1344 = vadd.f32 %v662, %v1343
        %v1345 = vpop.f32.mrb[0].mxu0
        %v1346 = vadd.f32 %v666, %v1345
        %v1347 = vpop.f32.mrb[0].mxu0
        %v1348 = vadd.f32 %v662, %v1347
        %v1349 = vpop.f32.mrb[0].mxu0
        %v1350 = vadd.f32 %v666, %v1349
        %1351 = vmatprep.mubr.bf16.mxu0 %v542
        %1352 = vmatmul.mubr.bf16.gmra.mrb[0].mxu0 %v541
        %v1353 = vpop.f32.mrb[0].mxu0
        %v1354 = vadd.f32 %v662, %v1353
        %v1355 = vpop.f32.mrb[0].mxu0
        %v1356 = vadd.f32 %v666, %v1355
        %v1357 = vpop.f32.mrb[0].mxu0
        %v1358 = vadd.f32 %v662, %v1357
        %v1359 = vpop.f32.mrb[0].mxu0
        %v1360 = vadd.f32 %v666, %v1359
        %1361 = vmatprep.mubr.bf16.mxu0 %v544
        %1362 = vmatmul.mubr.bf16.gmra.mrb[0].mxu0 %v543
        %v1363 = vpop.f32.mrb[0].mxu0
        %v1364 = vadd.f32 %v662, %v1363
        %v1365 = vpop.f32.mrb[0].mxu0
        %v1366 = vadd.f32 %v666, %v1365
        %v1367 = vpop.f32.mrb[0].mxu0
        %v1368 = vadd.f32 %v662, %v1367
        %v1369 = vpop.f32.mrb[0].mxu0
        %v1370 = vadd.f32 %v666, %v1369
        %1371 = vdwg.mxu0
        %v1372 = vmul.f32 %v1188, 0.088388346
        %v1373 = vmul.f32 %v1190, 0.088388346
        %v1374 = vmul.f32 %v1192, 0.088388346
        %v1375 = vmul.f32 %v1194, 0.088388346
        %v1376 = vmul.f32 %v1198, 0.088388346
        %v1377 = vmul.f32 %v1200, 0.088388346
        %v1378 = vmul.f32 %v1202, 0.088388346
        %v1379 = vmul.f32 %v1204, 0.088388346
        %v1380 = vpack.c.bf16 %v1374, %v1372
        %v1381 = vpack.c.bf16 %v1378, %v1376
        %v1382 = vpack.c.bf16 %v1375, %v1373
        %v1383 = vpack.c.bf16 %v1379, %v1377
        %v1384 = vpack.c.bf16 %v1265, %v1261
        %v1385 = vpack.c.bf16 %v1275, %v1271
        %v1386 = vpack.c.bf16 %v1267, %v1263
        %v1387 = vpack.c.bf16 %v1277, %v1273
        %v1388 = vpack.c.bf16 %v1338, %v1334
        %v1389 = vpack.c.bf16 %v1348, %v1344
        %v1390 = vpack.c.bf16 %v1340, %v1336
        %v1391 = vpack.c.bf16 %v1350, %v1346
        %1392 = vmatprep.subr.bf16.mxu0 0
        %1393 = vmatpush1.bf16.xpose.msra.mxu0 %v1384
        %1394 = vmatprep.subr.bf16.mxu0 0
        %1395 = vmatpush1.bf16.xpose.msra.mxu0 %v1385
        %1396 = vmatprep.subr.bf16.mxu0 0
        %1397 = vmatpush1.bf16.xpose.msra.mxu0 0
        %1398 = vmatprep.subr.bf16.mxu0 0
        %1399 = vmatpush1.bf16.xpose.msra.mxu0 0
        %1400 = vmatprep.subr.bf16.mxu0 0
        %1401 = vmatpush1.bf16.xpose.msra.mxu0 0
        %1402 = vmatprep.subr.bf16.mxu0 0
        %1403 = vmatpush1.bf16.xpose.msra.mxu0 0
        %1404 = vmatprep.subr.bf16.mxu0 0
        %1405 = vmatpush1.bf16.xpose.msra.mxu0 0
        %1406 = vmatprep.subr.bf16.mxu0 0
        %1407 = vmatpush1.bf16.xpose.msra.mxu0 0
        %1408 = vmatprep.subr.bf16.mxu0 0
        %1409 = vmatpush1.bf16.xpose.msra.mxu0 0
        %1410 = vmatprep.subr.bf16.mxu0 0
        %1411 = vmatpush1.bf16.xpose.msra.mxu0 0
        %1412 = vmatprep.subr.bf16.mxu0 0
        %1413 = vmatpush1.bf16.xpose.msra.mxu0 0
        %1414 = vmatprep.subr.bf16.mxu0 0
        %1415 = vmatpush1.bf16.xpose.msra.mxu0 0
        %1416 = vmatprep.subr.bf16.mxu0 0
        %1417 = vmatpush1.bf16.xpose.msra.mxu0 0
        %1418 = vmatprep.subr.bf16.mxu0 0
        %1419 = vmatpush1.bf16.xpose.msra.mxu0 0
        %1420 = vmatprep.subr.bf16.mxu0 0
        %1421 = vmatpush1.bf16.xpose.msra.mxu0 0
        %1422 = vmatprep.subr.bf16.mxu0 0
        %1423 = vmatpush1.bf16.xpose.msra.mxu0 0
        %1424 = vmatprep.mubr.bf16.mxu0 0
        %1425 = vmatmul.mubr.bf16.gmra.mrb[0].mxu0 %v1380
        %v1426 = vpop.f32.mrb[0].mxu0
        %v1427 = vadd.f32 0.0, %v1426
        %v1428 = vpop.f32.mrb[0].mxu0
        %v1429 = vpop.f32.mrb[0].mxu0
        %v1430 = vadd.f32 0.0, %v1429
        %v1431 = vpop.f32.mrb[0].mxu0
        %1432 = vmatprep.mubr.bf16.mxu0 0
        %1433 = vmatmul.mubr.bf16.gmra.mrb[0].mxu0 %v1381
        %v1434 = vpop.f32.mrb[0].mxu0
        %v1435 = vadd.f32 0.0, %v1434
        %v1436 = vpop.f32.mrb[0].mxu0
        %v1437 = vpop.f32.mrb[0].mxu0
        %v1438 = vadd.f32 0.0, %v1437
        %v1439 = vpop.f32.mrb[0].mxu0
        %1440 = vdwg.mxu0
        %1441 = vmatprep.subr.bf16.mxu0 0
        %1442 = vmatpush1.bf16.xpose.msra.mxu0 %v1386
        %1443 = vmatprep.subr.bf16.mxu0 0
        %1444 = vmatpush1.bf16.xpose.msra.mxu0 %v1387
        %1445 = vmatprep.subr.bf16.mxu0 0
        %1446 = vmatpush1.bf16.xpose.msra.mxu0 0
        %1447 = vmatprep.subr.bf16.mxu0 0
        %1448 = vmatpush1.bf16.xpose.msra.mxu0 0
        %1449 = vmatprep.subr.bf16.mxu0 0
        %1450 = vmatpush1.bf16.xpose.msra.mxu0 0
        %1451 = vmatprep.subr.bf16.mxu0 0
        %1452 = vmatpush1.bf16.xpose.msra.mxu0 0
        %1453 = vmatprep.subr.bf16.mxu0 0
        %1454 = vmatpush1.bf16.xpose.msra.mxu0 0
        %1455 = vmatprep.subr.bf16.mxu0 0
        %1456 = vmatpush1.bf16.xpose.msra.mxu0 0
        %1457 = vmatprep.subr.bf16.mxu0 0
        %1458 = vmatpush1.bf16.xpose.msra.mxu0 0
        %1459 = vmatprep.subr.bf16.mxu0 0
        %1460 = vmatpush1.bf16.xpose.msra.mxu0 0
        %1461 = vmatprep.subr.bf16.mxu0 0
        %1462 = vmatpush1.bf16.xpose.msra.mxu0 0
        %1463 = vmatprep.subr.bf16.mxu0 0
        %1464 = vmatpush1.bf16.xpose.msra.mxu0 0
        %1465 = vmatprep.subr.bf16.mxu0 0
        %1466 = vmatpush1.bf16.xpose.msra.mxu0 0
        %1467 = vmatprep.subr.bf16.mxu0 0
        %1468 = vmatpush1.bf16.xpose.msra.mxu0 0
        %1469 = vmatprep.subr.bf16.mxu0 0
        %1470 = vmatpush1.bf16.xpose.msra.mxu0 0
        %1471 = vmatprep.subr.bf16.mxu0 0
        %1472 = vmatpush1.bf16.xpose.msra.mxu0 0
        %1473 = vmatprep.mubr.bf16.mxu0 0
        %1474 = vmatmul.mubr.bf16.gmra.mrb[0].mxu0 %v1382
        %v1475 = vpop.f32.mrb[0].mxu0
        %v1476 = vadd.f32 0.0, %v1475
        %v1477 = vpop.f32.mrb[0].mxu0
        %v1478 = vpop.f32.mrb[0].mxu0
        %v1479 = vadd.f32 0.0, %v1478
        %v1480 = vpop.f32.mrb[0].mxu0
        %1481 = vmatprep.mubr.bf16.mxu0 0
        %1482 = vmatmul.mubr.bf16.gmra.mrb[0].mxu0 %v1383
        %v1483 = vpop.f32.mrb[0].mxu0
        %v1484 = vadd.f32 0.0, %v1483
        %v1485 = vpop.f32.mrb[0].mxu0
        %v1486 = vpop.f32.mrb[0].mxu0
        %v1487 = vadd.f32 0.0, %v1486
        %v1488 = vpop.f32.mrb[0].mxu0
        %1489 = vdwg.mxu0
        %vm1490 = vcmask 261120
        %v1491 = vsel %vm1490, %v1427, -inf
        %1492 = vmax.xlane.f32.xlu0 %v1491
        %v1493 = vpop.xlane.xlu0 %1492
        %v1494 = vsel %vm1490, %v1430, -inf
        %1495 = vmax.xlane.f32.xlu0 %v1494
        %v1496 = vpop.xlane.xlu0 %1495
        %v1497 = vsel %vm1490, %v1435, -inf
        %1498 = vmax.xlane.f32.xlu0 %v1497
        %v1499 = vpop.xlane.xlu0 %1498
        %v1500 = vsel %vm1490, %v1438, -inf
        %1501 = vmax.xlane.f32.xlu0 %v1500
        %v1502 = vpop.xlane.xlu0 %1501
        %v1503 = vsel %vm1490, %v1476, -inf
        %1504 = vmax.xlane.f32.xlu0 %v1503
        %v1505 = vpop.xlane.xlu0 %1504
        %v1506 = vsel %vm1490, %v1479, -inf
        %1507 = vmax.xlane.f32.xlu0 %v1506
        %v1508 = vpop.xlane.xlu0 %1507
        %v1509 = vsel %vm1490, %v1484, -inf
        %1510 = vmax.xlane.f32.xlu0 %v1509
        %v1511 = vpop.xlane.xlu0 %1510
        %v1512 = vsel %vm1490, %v1487, -inf
        %1513 = vmax.xlane.f32.xlu0 %v1512
        %v1514 = vpop.xlane.xlu0 %1513
        %v1515 = vsub.f32 %v1427, %v1493
        %v1516 = vsub.f32 %v1430, %v1496
        %v1517 = vsub.f32 %v1435, %v1499
        %v1518 = vsub.f32 %v1438, %v1502
        %v1519 = vsub.f32 %v1476, %v1505
        %v1520 = vsub.f32 %v1479, %v1508
        %v1521 = vsub.f32 %v1484, %v1511
        %v1522 = vsub.f32 %v1487, %v1514
        %v1523 = vmul.f32 %v1515, 1.442695
        %v1524 = vpow.pop %v1523
        %v1525 = vmul.f32 %v1516, 1.442695
        %v1526 = vpow.pop %v1525
        %v1527 = vmul.f32 %v1517, 1.442695
        %v1528 = vpow.pop %v1527
        %v1529 = vmul.f32 %v1518, 1.442695
        %v1530 = vpow.pop %v1529
        %v1531 = vmul.f32 %v1519, 1.442695
        %v1532 = vpow.pop %v1531
        %v1533 = vmul.f32 %v1520, 1.442695
        %v1534 = vpow.pop %v1533
        %v1535 = vmul.f32 %v1521, 1.442695
        %v1536 = vpow.pop %v1535
        %v1537 = vmul.f32 %v1522, 1.442695
        %v1538 = vpow.pop %v1537
        %v1539 = vsel %vm1490, %v1524, 0.0
        %1540 = vadd.xlane.f32.xlu0 %v1539
        %v1541 = vpop.xlane.xlu0 %1540
        %v1542 = vsel %vm1490, %v1526, 0.0
        %1543 = vadd.xlane.f32.xlu0 %v1542
        %v1544 = vpop.xlane.xlu0 %1543
        %v1545 = vsel %vm1490, %v1528, 0.0
        %1546 = vadd.xlane.f32.xlu0 %v1545
        %v1547 = vpop.xlane.xlu0 %1546
        %v1548 = vsel %vm1490, %v1530, 0.0
        %1549 = vadd.xlane.f32.xlu0 %v1548
        %v1550 = vpop.xlane.xlu0 %1549
        %v1551 = vsel %vm1490, %v1532, 0.0
        %1552 = vadd.xlane.f32.xlu0 %v1551
        %v1553 = vpop.xlane.xlu0 %1552
        %v1554 = vsel %vm1490, %v1534, 0.0
        %1555 = vadd.xlane.f32.xlu0 %v1554
        %v1556 = vpop.xlane.xlu0 %1555
        %v1557 = vsel %vm1490, %v1536, 0.0
        %1558 = vadd.xlane.f32.xlu0 %v1557
        %v1559 = vpop.xlane.xlu0 %1558
        %v1560 = vsel %vm1490, %v1538, 0.0
        %1561 = vadd.xlane.f32.xlu0 %v1560
        %v1562 = vpop.xlane.xlu0 %1561
        %v1563 = vrcp.pop %v1541
        %v1564 = vrcp.pop %v1544
        %v1565 = vrcp.pop %v1547
        %v1566 = vrcp.pop %v1550
        %v1567 = vrcp.pop %v1553
        %v1568 = vrcp.pop %v1556
        %v1569 = vrcp.pop %v1559
        %v1570 = vrcp.pop %v1562
        %v1571 = vmul.f32 %v1524, %v1563
        %v1572 = vmul.f32 %v1526, %v1564
        %v1573 = vmul.f32 %v1528, %v1565
        %v1574 = vmul.f32 %v1530, %v1566
        %v1575 = vmul.f32 %v1532, %v1567
        %v1576 = vmul.f32 %v1534, %v1568
        %v1577 = vmul.f32 %v1536, %v1569
        %v1578 = vmul.f32 %v1538, %v1570
        %v1579 = vpack.c.bf16 %v1572, %v1571
        %v1580 = vpack.c.bf16 %v1574, %v1573
        %v1581 = vpack.c.bf16 %v1576, %v1575
        %v1582 = vpack.c.bf16 %v1578, %v1577
        %v1584 = vsel %vm1490, %v1579, 0
        %v1587 = vsel %vm1490, %v1580, 0
        %1589 = vmatprep.subr.bf16.mxu0 0
        %1590 = vmatpush1.bf16.msra.mxu0 %v1388
        %1591 = vmatprep.subr.bf16.mxu0 0
        %1592 = vmatpush1.bf16.msra.mxu0 %v1389
        %1593 = vmatprep.subr.bf16.mxu0 0
        %1594 = vmatpush1.bf16.msra.mxu0 0
        %1595 = vmatprep.subr.bf16.mxu0 0
        %1596 = vmatpush1.bf16.msra.mxu0 0
        %1597 = vmatprep.subr.bf16.mxu0 0
        %1598 = vmatpush1.bf16.msra.mxu0 0
        %1599 = vmatprep.subr.bf16.mxu0 0
        %1600 = vmatpush1.bf16.msra.mxu0 0
        %1601 = vmatprep.subr.bf16.mxu0 0
        %1602 = vmatpush1.bf16.msra.mxu0 0
        %1603 = vmatprep.subr.bf16.mxu0 0
        %1604 = vmatpush1.bf16.msra.mxu0 0
        %1605 = vmatprep.subr.bf16.mxu0 0
        %1606 = vmatpush1.bf16.msra.mxu0 0
        %1607 = vmatprep.subr.bf16.mxu0 0
        %1608 = vmatpush1.bf16.msra.mxu0 0
        %1609 = vmatprep.subr.bf16.mxu0 0
        %1610 = vmatpush1.bf16.msra.mxu0 0
        %1611 = vmatprep.subr.bf16.mxu0 0
        %1612 = vmatpush1.bf16.msra.mxu0 0
        %1613 = vmatprep.subr.bf16.mxu0 0
        %1614 = vmatpush1.bf16.msra.mxu0 0
        %1615 = vmatprep.subr.bf16.mxu0 0
        %1616 = vmatpush1.bf16.msra.mxu0 0
        %1617 = vmatprep.subr.bf16.mxu0 0
        %1618 = vmatpush1.bf16.msra.mxu0 0
        %1619 = vmatprep.subr.bf16.mxu0 0
        %1620 = vmatpush1.bf16.msra.mxu0 0
        %1621 = vmatprep.mubr.bf16.mxu0 0
        %1622 = vmatmul.mubr.bf16.gmra.mrb[0].mxu0 %v1584
        %v1623 = vpop.f32.mrb[0].mxu0
        %v1624 = vadd.f32 0.0, %v1623
        %v1625 = vpop.f32.mrb[0].mxu0
        %v1626 = vpop.f32.mrb[0].mxu0
        %v1627 = vadd.f32 0.0, %v1626
        %v1628 = vpop.f32.mrb[0].mxu0
        %1629 = vmatprep.mubr.bf16.mxu0 0
        %1630 = vmatmul.mubr.bf16.gmra.mrb[0].mxu0 %v1587
        %v1631 = vpop.f32.mrb[0].mxu0
        %v1632 = vadd.f32 0.0, %v1631
        %v1633 = vpop.f32.mrb[0].mxu0
        %v1634 = vpop.f32.mrb[0].mxu0
        %v1635 = vadd.f32 0.0, %v1634
        %v1636 = vpop.f32.mrb[0].mxu0
        %1637 = vdwg.mxu0
        %v1639 = vsel %vm1490, %v1581, 0
        %v1642 = vsel %vm1490, %v1582, 0
        %1644 = vmatprep.subr.bf16.mxu0 0
        %1645 = vmatpush1.bf16.msra.mxu0 %v1390
        %1646 = vmatprep.subr.bf16.mxu0 0
        %1647 = vmatpush1.bf16.msra.mxu0 %v1391
        %1648 = vmatprep.subr.bf16.mxu0 0
        %1649 = vmatpush1.bf16.msra.mxu0 0
        %1650 = vmatprep.subr.bf16.mxu0 0
        %1651 = vmatpush1.bf16.msra.mxu0 0
        %1652 = vmatprep.subr.bf16.mxu0 0
        %1653 = vmatpush1.bf16.msra.mxu0 0
        %1654 = vmatprep.subr.bf16.mxu0 0
        %1655 = vmatpush1.bf16.msra.mxu0 0
        %1656 = vmatprep.subr.bf16.mxu0 0
        %1657 = vmatpush1.bf16.msra.mxu0 0
        %1658 = vmatprep.subr.bf16.mxu0 0
        %1659 = vmatpush1.bf16.msra.mxu0 0
        %1660 = vmatprep.subr.bf16.mxu0 0
        %1661 = vmatpush1.bf16.msra.mxu0 0
        %1662 = vmatprep.subr.bf16.mxu0 0
        %1663 = vmatpush1.bf16.msra.mxu0 0
        %1664 = vmatprep.subr.bf16.mxu0 0
        %1665 = vmatpush1.bf16.msra.mxu0 0
        %1666 = vmatprep.subr.bf16.mxu0 0
        %1667 = vmatpush1.bf16.msra.mxu0 0
        %1668 = vmatprep.subr.bf16.mxu0 0
        %1669 = vmatpush1.bf16.msra.mxu0 0
        %1670 = vmatprep.subr.bf16.mxu0 0
        %1671 = vmatpush1.bf16.msra.mxu0 0
        %1672 = vmatprep.subr.bf16.mxu0 0
        %1673 = vmatpush1.bf16.msra.mxu0 0
        %1674 = vmatprep.subr.bf16.mxu0 0
        %1675 = vmatpush1.bf16.msra.mxu0 0
        %1676 = vmatprep.mubr.bf16.mxu0 0
        %1677 = vmatmul.mubr.bf16.gmra.mrb[0].mxu0 %v1639
        %v1678 = vpop.f32.mrb[0].mxu0
        %v1679 = vadd.f32 0.0, %v1678
        %v1680 = vpop.f32.mrb[0].mxu0
        %v1681 = vpop.f32.mrb[0].mxu0
        %v1682 = vadd.f32 0.0, %v1681
        %v1683 = vpop.f32.mrb[0].mxu0
        %1684 = vmatprep.mubr.bf16.mxu0 0
        %1685 = vmatmul.mubr.bf16.gmra.mrb[0].mxu0 %v1642
        %v1686 = vpop.f32.mrb[0].mxu0
        %v1687 = vadd.f32 0.0, %v1686
        %v1688 = vpop.f32.mrb[0].mxu0
        %v1689 = vpop.f32.mrb[0].mxu0
        %v1690 = vadd.f32 0.0, %v1689
        %v1691 = vpop.f32.mrb[0].mxu0
        %1692 = vdwg.mxu0
        %v1693 = vpack.c.bf16 %v1627, %v1624
        %v1694 = vpack.c.bf16 %v1635, %v1632
        %v1695 = vpack.c.bf16 %v1682, %v1679
        %v1696 = vpack.c.bf16 %v1690, %v1687
        %v1697 = vld [vmem:[#allocation7] sm:$0xff]
        %v1698 = vld [vmem:[#allocation7 + $0x8] sm:$0xff]
        %v1699 = vld [vmem:[#allocation7 + $0x10] sm:$0xff]
        %v1700 = vld [vmem:[#allocation7 + $0x18] sm:$0xff]
        %v1701 = vld [vmem:[#allocation7 + $0x20] sm:$0xff]
        %v1702 = vld [vmem:[#allocation7 + $0x28] sm:$0xff]
        %v1703 = vld [vmem:[#allocation7 + $0x30] sm:$0xff]
        %v1704 = vld [vmem:[#allocation7 + $0x38] sm:$0xff]
        %v1705 = vld [vmem:[#allocation7 + $0x40] sm:$0xff]
        %v1706 = vld [vmem:[#allocation7 + $0x48] sm:$0xff]
        %v1707 = vld [vmem:[#allocation7 + $0x50] sm:$0xff]
        %v1708 = vld [vmem:[#allocation7 + $0x58] sm:$0xff]
        %v1709 = vld [vmem:[#allocation7 + $0x60] sm:$0xff]
        %v1710 = vld [vmem:[#allocation7 + $0x68] sm:$0xff]
        %v1711 = vld [vmem:[#allocation7 + $0x70] sm:$0xff]
        %v1712 = vld [vmem:[#allocation7 + $0x78] sm:$0xff]
        %v1713 = vld [vmem:[#allocation7 + $0x80] sm:$0xff]
        %v1714 = vld [vmem:[#allocation7 + $0x88] sm:$0xff]
        %v1715 = vld [vmem:[#allocation7 + $0x90] sm:$0xff]
        %v1716 = vld [vmem:[#allocation7 + $0x98] sm:$0xff]
        %v1717 = vld [vmem:[#allocation7 + $0xa0] sm:$0xff]
        %v1718 = vld [vmem:[#allocation7 + $0xa8] sm:$0xff]
        %v1719 = vld [vmem:[#allocation7 + $0xb0] sm:$0xff]
        %v1720 = vld [vmem:[#allocation7 + $0xb8] sm:$0xff]
        %v1721 = vld [vmem:[#allocation7 + $0xc0] sm:$0xff]
        %v1722 = vld [vmem:[#allocation7 + $0xc8] sm:$0xff]
        %v1723 = vld [vmem:[#allocation7 + $0xd0] sm:$0xff]
        %v1724 = vld [vmem:[#allocation7 + $0xd8] sm:$0xff]
        %v1725 = vld [vmem:[#allocation7 + $0xe0] sm:$0xff]
        %v1726 = vld [vmem:[#allocation7 + $0xe8] sm:$0xff]
        %v1727 = vld [vmem:[#allocation7 + $0xf0] sm:$0xff]
        %v1728 = vld [vmem:[#allocation7 + $0xf8] sm:$0xff]
        %v1745 = vunpack.c.l.b16 %v1697
        %v1746 = vunpack.c.h.b16 %v1697
        %v1747 = vunpack.c.l.b16 %v1698
        %v1748 = vunpack.c.h.b16 %v1698
        %v1749 = vunpack.c.l.b16 %v1699
        %v1750 = vunpack.c.h.b16 %v1699
        %v1751 = vunpack.c.l.b16 %v1700
        %v1752 = vunpack.c.h.b16 %v1700
        %v1753 = vunpack.c.l.b16 %v1701
        %v1754 = vunpack.c.h.b16 %v1701
        %v1755 = vunpack.c.l.b16 %v1702
        %v1756 = vunpack.c.h.b16 %v1702
        %v1757 = vunpack.c.l.b16 %v1703
        %v1758 = vunpack.c.h.b16 %v1703
        %v1759 = vunpack.c.l.b16 %v1704
        %v1760 = vunpack.c.h.b16 %v1704
        %v1761 = vunpack.c.l.b16 %v1705
        %v1762 = vunpack.c.h.b16 %v1705
        %v1763 = vunpack.c.l.b16 %v1706
        %v1764 = vunpack.c.h.b16 %v1706
        %v1765 = vunpack.c.l.b16 %v1707
        %v1766 = vunpack.c.h.b16 %v1707
        %v1767 = vunpack.c.l.b16 %v1708
        %v1768 = vunpack.c.h.b16 %v1708
        %v1769 = vunpack.c.l.b16 %v1709
        %v1770 = vunpack.c.h.b16 %v1709
        %v1771 = vunpack.c.l.b16 %v1710
        %v1772 = vunpack.c.h.b16 %v1710
        %v1773 = vunpack.c.l.b16 %v1711
        %v1774 = vunpack.c.h.b16 %v1711
        %v1775 = vunpack.c.l.b16 %v1712
        %v1776 = vunpack.c.h.b16 %v1712
        %v1777 = vpack.c.b16 %v1747, %v1745
        %v1778 = vpack.c.b16 %v1748, %v1746
        %v1779 = vpack.c.b16 %v1751, %v1749
        %v1780 = vpack.c.b16 %v1752, %v1750
        %v1781 = vpack.c.b16 %v1755, %v1753
        %v1782 = vpack.c.b16 %v1756, %v1754
        %v1783 = vpack.c.b16 %v1759, %v1757
        %v1784 = vpack.c.b16 %v1760, %v1758
        %v1785 = vpack.c.b16 %v1763, %v1761
        %v1786 = vpack.c.b16 %v1764, %v1762
        %v1787 = vpack.c.b16 %v1767, %v1765
        %v1788 = vpack.c.b16 %v1768, %v1766
        %v1789 = vpack.c.b16 %v1771, %v1769
        %v1790 = vpack.c.b16 %v1772, %v1770
        %v1791 = vpack.c.b16 %v1775, %v1773
        %v1792 = vpack.c.b16 %v1776, %v1774
        %1809 = vmatprep.subr.bf16.mxu0 %v1778
        %1810 = vmatpush1.bf16.msra.mxu0 %v1777
        %1811 = vmatprep.subr.bf16.mxu0 %v1780
        %1812 = vmatpush1.bf16.msra.mxu0 %v1779
        %1813 = vmatprep.subr.bf16.mxu0 %v1782
        %1814 = vmatpush1.bf16.msra.mxu0 %v1781
        %1815 = vmatprep.subr.bf16.mxu0 %v1784
        %1816 = vmatpush1.bf16.msra.mxu0 %v1783
        %1817 = vmatprep.subr.bf16.mxu0 %v1786
        %1818 = vmatpush1.bf16.msra.mxu0 %v1785
        %1819 = vmatprep.subr.bf16.mxu0 %v1788
        %1820 = vmatpush1.bf16.msra.mxu0 %v1787
        %1821 = vmatprep.subr.bf16.mxu0 %v1790
        %1822 = vmatpush1.bf16.msra.mxu0 %v1789
        %1823 = vmatprep.subr.bf16.mxu0 %v1792
        %1824 = vmatpush1.bf16.msra.mxu0 %v1791
        %1825 = vmatprep.subr.bf16.mxu0 0
        %1826 = vmatpush1.bf16.msra.mxu0 0
        %1827 = vmatprep.subr.bf16.mxu0 0
        %1828 = vmatpush1.bf16.msra.mxu0 0
        %1829 = vmatprep.subr.bf16.mxu0 0
        %1830 = vmatpush1.bf16.msra.mxu0 0
        %1831 = vmatprep.subr.bf16.mxu0 0
        %1832 = vmatpush1.bf16.msra.mxu0 0
        %1833 = vmatprep.subr.bf16.mxu0 0
        %1834 = vmatpush1.bf16.msra.mxu0 0
        %1835 = vmatprep.subr.bf16.mxu0 0
        %1836 = vmatpush1.bf16.msra.mxu0 0
        %1837 = vmatprep.subr.bf16.mxu0 0
        %1838 = vmatpush1.bf16.msra.mxu0 0
        %1839 = vmatprep.subr.bf16.mxu0 0
        %1840 = vmatpush1.bf16.msra.mxu0 0
        %1841 = vmatprep.mubr.bf16.mxu0 0
        %1842 = vmatmul.mubr.bf16.gmra.mrb[0].mxu0 %v1693
        %v1843 = vpop.f32.mrb[0].mxu0
        %v1844 = vadd.f32 0.0, %v1843
        %v1845 = vpop.f32.mrb[0].mxu0
        %v1846 = vadd.f32 0.0, %v1845
        %v1847 = vpop.f32.mrb[0].mxu0
        %v1848 = vadd.f32 0.0, %v1847
        %v1849 = vpop.f32.mrb[0].mxu0
        %v1850 = vadd.f32 0.0, %v1849
        %1851 = vmatprep.mubr.bf16.mxu0 0
        %1852 = vmatmul.mubr.bf16.gmra.mrb[0].mxu0 %v1694
        %v1853 = vpop.f32.mrb[0].mxu0
        %v1854 = vadd.f32 0.0, %v1853
        %v1855 = vpop.f32.mrb[0].mxu0
        %v1856 = vadd.f32 0.0, %v1855
        %v1857 = vpop.f32.mrb[0].mxu0
        %v1858 = vadd.f32 0.0, %v1857
        %v1859 = vpop.f32.mrb[0].mxu0
        %v1860 = vadd.f32 0.0, %v1859
        %1861 = vdwg.mxu0
        %v1878 = vunpack.c.l.b16 %v1713
        %v1879 = vunpack.c.h.b16 %v1713
        %v1880 = vunpack.c.l.b16 %v1714
        %v1881 = vunpack.c.h.b16 %v1714
        %v1882 = vunpack.c.l.b16 %v1715
        %v1883 = vunpack.c.h.b16 %v1715
        %v1884 = vunpack.c.l.b16 %v1716
        %v1885 = vunpack.c.h.b16 %v1716
        %v1886 = vunpack.c.l.b16 %v1717
        %v1887 = vunpack.c.h.b16 %v1717
        %v1888 = vunpack.c.l.b16 %v1718
        %v1889 = vunpack.c.h.b16 %v1718
        %v1890 = vunpack.c.l.b16 %v1719
        %v1891 = vunpack.c.h.b16 %v1719
        %v1892 = vunpack.c.l.b16 %v1720
        %v1893 = vunpack.c.h.b16 %v1720
        %v1894 = vunpack.c.l.b16 %v1721
        %v1895 = vunpack.c.h.b16 %v1721
        %v1896 = vunpack.c.l.b16 %v1722
        %v1897 = vunpack.c.h.b16 %v1722
        %v1898 = vunpack.c.l.b16 %v1723
        %v1899 = vunpack.c.h.b16 %v1723
        %v1900 = vunpack.c.l.b16 %v1724
        %v1901 = vunpack.c.h.b16 %v1724
        %v1902 = vunpack.c.l.b16 %v1725
        %v1903 = vunpack.c.h.b16 %v1725
        %v1904 = vunpack.c.l.b16 %v1726
        %v1905 = vunpack.c.h.b16 %v1726
        %v1906 = vunpack.c.l.b16 %v1727
        %v1907 = vunpack.c.h.b16 %v1727
        %v1908 = vunpack.c.l.b16 %v1728
        %v1909 = vunpack.c.h.b16 %v1728
        %v1910 = vpack.c.b16 %v1880, %v1878
        %v1911 = vpack.c.b16 %v1881, %v1879
        %v1912 = vpack.c.b16 %v1884, %v1882
        %v1913 = vpack.c.b16 %v1885, %v1883
        %v1914 = vpack.c.b16 %v1888, %v1886
        %v1915 = vpack.c.b16 %v1889, %v1887
        %v1916 = vpack.c.b16 %v1892, %v1890
        %v1917 = vpack.c.b16 %v1893, %v1891
        %v1918 = vpack.c.b16 %v1896, %v1894
        %v1919 = vpack.c.b16 %v1897, %v1895
        %v1920 = vpack.c.b16 %v1900, %v1898
        %v1921 = vpack.c.b16 %v1901, %v1899
        %v1922 = vpack.c.b16 %v1904, %v1902
        %v1923 = vpack.c.b16 %v1905, %v1903
        %v1924 = vpack.c.b16 %v1908, %v1906
        %v1925 = vpack.c.b16 %v1909, %v1907
        %1942 = vmatprep.subr.bf16.mxu0 %v1911
        %1943 = vmatpush1.bf16.msra.mxu0 %v1910
        %1944 = vmatprep.subr.bf16.mxu0 %v1913
        %1945 = vmatpush1.bf16.msra.mxu0 %v1912
        %1946 = vmatprep.subr.bf16.mxu0 %v1915
        %1947 = vmatpush1.bf16.msra.mxu0 %v1914
        %1948 = vmatprep.subr.bf16.mxu0 %v1917
        %1949 = vmatpush1.bf16.msra.mxu0 %v1916
        %1950 = vmatprep.subr.bf16.mxu0 %v1919
        %1951 = vmatpush1.bf16.msra.mxu0 %v1918
        %1952 = vmatprep.subr.bf16.mxu0 %v1921
        %1953 = vmatpush1.bf16.msra.mxu0 %v1920
        %1954 = vmatprep.subr.bf16.mxu0 %v1923
        %1955 = vmatpush1.bf16.msra.mxu0 %v1922
        %1956 = vmatprep.subr.bf16.mxu0 %v1925
        %1957 = vmatpush1.bf16.msra.mxu0 %v1924
        %1958 = vmatprep.subr.bf16.mxu0 0
        %1959 = vmatpush1.bf16.msra.mxu0 0
        %1960 = vmatprep.subr.bf16.mxu0 0
        %1961 = vmatpush1.bf16.msra.mxu0 0
        %1962 = vmatprep.subr.bf16.mxu0 0
        %1963 = vmatpush1.bf16.msra.mxu0 0
        %1964 = vmatprep.subr.bf16.mxu0 0
        %1965 = vmatpush1.bf16.msra.mxu0 0
        %1966 = vmatprep.subr.bf16.mxu0 0
        %1967 = vmatpush1.bf16.msra.mxu0 0
        %1968 = vmatprep.subr.bf16.mxu0 0
        %1969 = vmatpush1.bf16.msra.mxu0 0
        %1970 = vmatprep.subr.bf16.mxu0 0
        %1971 = vmatpush1.bf16.msra.mxu0 0
        %1972 = vmatprep.subr.bf16.mxu0 0
        %1973 = vmatpush1.bf16.msra.mxu0 0
        %1974 = vmatprep.mubr.bf16.mxu0 0
        %1975 = vmatmul.mubr.bf16.gmra.mrb[0].mxu0 %v1695
        %v1976 = vpop.f32.mrb[0].mxu0
        %v1977 = vadd.f32 0.0, %v1976
        %v1978 = vpop.f32.mrb[0].mxu0
        %v1979 = vadd.f32 0.0, %v1978
        %v1980 = vpop.f32.mrb[0].mxu0
        %v1981 = vadd.f32 0.0, %v1980
        %v1982 = vpop.f32.mrb[0].mxu0
        %v1983 = vadd.f32 0.0, %v1982
        %1984 = vmatprep.mubr.bf16.mxu0 0
        %1985 = vmatmul.mubr.bf16.gmra.mrb[0].mxu0 %v1696
        %v1986 = vpop.f32.mrb[0].mxu0
        %v1987 = vadd.f32 0.0, %v1986
        %v1988 = vpop.f32.mrb[0].mxu0
        %v1989 = vadd.f32 0.0, %v1988
        %v1990 = vpop.f32.mrb[0].mxu0
        %v1991 = vadd.f32 0.0, %v1990
        %v1992 = vpop.f32.mrb[0].mxu0
        %v1993 = vadd.f32 0.0, %v1992
        %1994 = vdwg.mxu0
        %v1995 = vadd.f32 %v1844, %v1977
        %v1996 = vadd.f32 %v1846, %v1979
        %v1997 = vadd.f32 %v1848, %v1981
        %v1998 = vadd.f32 %v1850, %v1983
        %v1999 = vadd.f32 %v1854, %v1987
        %v2000 = vadd.f32 %v1856, %v1989
        %v2001 = vadd.f32 %v1858, %v1991
        %v2002 = vadd.f32 %v1860, %v1993
        %v2003 = vmul.f32 %v1208, 0.088388346
        %v2004 = vmul.f32 %v1210, 0.088388346
        %v2005 = vmul.f32 %v1212, 0.088388346
        %v2006 = vmul.f32 %v1214, 0.088388346
        %v2007 = vmul.f32 %v1218, 0.088388346
        %v2008 = vmul.f32 %v1220, 0.088388346
        %v2009 = vmul.f32 %v1222, 0.088388346
        %v2010 = vmul.f32 %v1224, 0.088388346
        %v2011 = vpack.c.bf16 %v2005, %v2003
        %v2012 = vpack.c.bf16 %v2009, %v2007
        %v2013 = vpack.c.bf16 %v2006, %v2004
        %v2014 = vpack.c.bf16 %v2010, %v2008
        %v2015 = vpack.c.bf16 %v1285, %v1281
        %v2016 = vpack.c.bf16 %v1295, %v1291
        %v2017 = vpack.c.bf16 %v1287, %v1283
        %v2018 = vpack.c.bf16 %v1297, %v1293
        %v2019 = vpack.c.bf16 %v1358, %v1354
        %v2020 = vpack.c.bf16 %v1368, %v1364
        %v2021 = vpack.c.bf16 %v1360, %v1356
        %v2022 = vpack.c.bf16 %v1370, %v1366
        %2023 = vmatprep.subr.bf16.mxu0 0
        %2024 = vmatpush1.bf16.xpose.msra.mxu0 %v2015
        %2025 = vmatprep.subr.bf16.mxu0 0
        %2026 = vmatpush1.bf16.xpose.msra.mxu0 %v2016
        %2027 = vmatprep.subr.bf16.mxu0 0
        %2028 = vmatpush1.bf16.xpose.msra.mxu0 0
        %2029 = vmatprep.subr.bf16.mxu0 0
        %2030 = vmatpush1.bf16.xpose.msra.mxu0 0
        %2031 = vmatprep.subr.bf16.mxu0 0
        %2032 = vmatpush1.bf16.xpose.msra.mxu0 0
        %2033 = vmatprep.subr.bf16.mxu0 0
        %2034 = vmatpush1.bf16.xpose.msra.mxu0 0
        %2035 = vmatprep.subr.bf16.mxu0 0
        %2036 = vmatpush1.bf16.xpose.msra.mxu0 0
        %2037 = vmatprep.subr.bf16.mxu0 0
        %2038 = vmatpush1.bf16.xpose.msra.mxu0 0
        %2039 = vmatprep.subr.bf16.mxu0 0
        %2040 = vmatpush1.bf16.xpose.msra.mxu0 0
        %2041 = vmatprep.subr.bf16.mxu0 0
        %2042 = vmatpush1.bf16.xpose.msra.mxu0 0
        %2043 = vmatprep.subr.bf16.mxu0 0
        %2044 = vmatpush1.bf16.xpose.msra.mxu0 0
        %2045 = vmatprep.subr.bf16.mxu0 0
        %2046 = vmatpush1.bf16.xpose.msra.mxu0 0
        %2047 = vmatprep.subr.bf16.mxu0 0
        %2048 = vmatpush1.bf16.xpose.msra.mxu0 0
        %2049 = vmatprep.subr.bf16.mxu0 0
        %2050 = vmatpush1.bf16.xpose.msra.mxu0 0
        %2051 = vmatprep.subr.bf16.mxu0 0
        %2052 = vmatpush1.bf16.xpose.msra.mxu0 0
        %2053 = vmatprep.subr.bf16.mxu0 0
        %2054 = vmatpush1.bf16.xpose.msra.mxu0 0
        %2055 = vmatprep.mubr.bf16.mxu0 0
        %2056 = vmatmul.mubr.bf16.gmra.mrb[0].mxu0 %v2011
        %v2057 = vpop.f32.mrb[0].mxu0
        %v2058 = vadd.f32 0.0, %v2057
        %v2059 = vpop.f32.mrb[0].mxu0
        %v2060 = vpop.f32.mrb[0].mxu0
        %v2061 = vadd.f32 0.0, %v2060
        %v2062 = vpop.f32.mrb[0].mxu0
        %2063 = vmatprep.mubr.bf16.mxu0 0
        %2064 = vmatmul.mubr.bf16.gmra.mrb[0].mxu0 %v2012
        %v2065 = vpop.f32.mrb[0].mxu0
        %v2066 = vadd.f32 0.0, %v2065
        %v2067 = vpop.f32.mrb[0].mxu0
        %v2068 = vpop.f32.mrb[0].mxu0
        %v2069 = vadd.f32 0.0, %v2068
        %v2070 = vpop.f32.mrb[0].mxu0
        %2071 = vdwg.mxu0
        %2072 = vmatprep.subr.bf16.mxu0 0
        %2073 = vmatpush1.bf16.xpose.msra.mxu0 %v2017
        %2074 = vmatprep.subr.bf16.mxu0 0
        %2075 = vmatpush1.bf16.xpose.msra.mxu0 %v2018
        %2076 = vmatprep.subr.bf16.mxu0 0
        %2077 = vmatpush1.bf16.xpose.msra.mxu0 0
        %2078 = vmatprep.subr.bf16.mxu0 0
        %2079 = vmatpush1.bf16.xpose.msra.mxu0 0
        %2080 = vmatprep.subr.bf16.mxu0 0
        %2081 = vmatpush1.bf16.xpose.msra.mxu0 0
        %2082 = vmatprep.subr.bf16.mxu0 0
        %2083 = vmatpush1.bf16.xpose.msra.mxu0 0
        %2084 = vmatprep.subr.bf16.mxu0 0
        %2085 = vmatpush1.bf16.xpose.msra.mxu0 0
        %2086 = vmatprep.subr.bf16.mxu0 0
        %2087 = vmatpush1.bf16.xpose.msra.mxu0 0
        %2088 = vmatprep.subr.bf16.mxu0 0
        %2089 = vmatpush1.bf16.xpose.msra.mxu0 0
        %2090 = vmatprep.subr.bf16.mxu0 0
        %2091 = vmatpush1.bf16.xpose.msra.mxu0 0
        %2092 = vmatprep.subr.bf16.mxu0 0
        %2093 = vmatpush1.bf16.xpose.msra.mxu0 0
        %2094 = vmatprep.subr.bf16.mxu0 0
        %2095 = vmatpush1.bf16.xpose.msra.mxu0 0
        %2096 = vmatprep.subr.bf16.mxu0 0
        %2097 = vmatpush1.bf16.xpose.msra.mxu0 0
        %2098 = vmatprep.subr.bf16.mxu0 0
        %2099 = vmatpush1.bf16.xpose.msra.mxu0 0
        %2100 = vmatprep.subr.bf16.mxu0 0
        %2101 = vmatpush1.bf16.xpose.msra.mxu0 0
        %2102 = vmatprep.subr.bf16.mxu0 0
        %2103 = vmatpush1.bf16.xpose.msra.mxu0 0
        %2104 = vmatprep.mubr.bf16.mxu0 0
        %2105 = vmatmul.mubr.bf16.gmra.mrb[0].mxu0 %v2013
        %v2106 = vpop.f32.mrb[0].mxu0
        %v2107 = vadd.f32 0.0, %v2106
        %v2108 = vpop.f32.mrb[0].mxu0
        %v2109 = vpop.f32.mrb[0].mxu0
        %v2110 = vadd.f32 0.0, %v2109
        %v2111 = vpop.f32.mrb[0].mxu0
        %2112 = vmatprep.mubr.bf16.mxu0 0
        %2113 = vmatmul.mubr.bf16.gmra.mrb[0].mxu0 %v2014
        %v2114 = vpop.f32.mrb[0].mxu0
        %v2115 = vadd.f32 0.0, %v2114
        %v2116 = vpop.f32.mrb[0].mxu0
        %v2117 = vpop.f32.mrb[0].mxu0
        %v2118 = vadd.f32 0.0, %v2117
        %v2119 = vpop.f32.mrb[0].mxu0
        %2120 = vdwg.mxu0
        %v2121 = vsel %vm1490, %v2058, -inf
        %2122 = vmax.xlane.f32.xlu0 %v2121
        %v2123 = vpop.xlane.xlu0 %2122
        %v2124 = vsel %vm1490, %v2061, -inf
        %2125 = vmax.xlane.f32.xlu0 %v2124
        %v2126 = vpop.xlane.xlu0 %2125
        %v2127 = vsel %vm1490, %v2066, -inf
        %2128 = vmax.xlane.f32.xlu0 %v2127
        %v2129 = vpop.xlane.xlu0 %2128
        %v2130 = vsel %vm1490, %v2069, -inf
        %2131 = vmax.xlane.f32.xlu0 %v2130
        %v2132 = vpop.xlane.xlu0 %2131
        %v2133 = vsel %vm1490, %v2107, -inf
        %2134 = vmax.xlane.f32.xlu0 %v2133
        %v2135 = vpop.xlane.xlu0 %2134
        %v2136 = vsel %vm1490, %v2110, -inf
        %2137 = vmax.xlane.f32.xlu0 %v2136
        %v2138 = vpop.xlane.xlu0 %2137
        %v2139 = vsel %vm1490, %v2115, -inf
        %2140 = vmax.xlane.f32.xlu0 %v2139
        %v2141 = vpop.xlane.xlu0 %2140
        %v2142 = vsel %vm1490, %v2118, -inf
        %2143 = vmax.xlane.f32.xlu0 %v2142
        %v2144 = vpop.xlane.xlu0 %2143
        %v2145 = vsub.f32 %v2058, %v2123
        %v2146 = vsub.f32 %v2061, %v2126
        %v2147 = vsub.f32 %v2066, %v2129
        %v2148 = vsub.f32 %v2069, %v2132
        %v2149 = vsub.f32 %v2107, %v2135
        %v2150 = vsub.f32 %v2110, %v2138
        %v2151 = vsub.f32 %v2115, %v2141
        %v2152 = vsub.f32 %v2118, %v2144
        %v2153 = vmul.f32 %v2145, 1.442695
        %v2154 = vpow.pop %v2153
        %v2155 = vmul.f32 %v2146, 1.442695
        %v2156 = vpow.pop %v2155
        %v2157 = vmul.f32 %v2147, 1.442695
        %v2158 = vpow.pop %v2157
        %v2159 = vmul.f32 %v2148, 1.442695
        %v2160 = vpow.pop %v2159
        %v2161 = vmul.f32 %v2149, 1.442695
        %v2162 = vpow.pop %v2161
        %v2163 = vmul.f32 %v2150, 1.442695
        %v2164 = vpow.pop %v2163
        %v2165 = vmul.f32 %v2151, 1.442695
        %v2166 = vpow.pop %v2165
        %v2167 = vmul.f32 %v2152, 1.442695
        %v2168 = vpow.pop %v2167
        %v2169 = vsel %vm1490, %v2154, 0.0
        %2170 = vadd.xlane.f32.xlu0 %v2169
        %v2171 = vpop.xlane.xlu0 %2170
        %v2172 = vsel %vm1490, %v2156, 0.0
        %2173 = vadd.xlane.f32.xlu0 %v2172
        %v2174 = vpop.xlane.xlu0 %2173
        %v2175 = vsel %vm1490, %v2158, 0.0
        %2176 = vadd.xlane.f32.xlu0 %v2175
        %v2177 = vpop.xlane.xlu0 %2176
        %v2178 = vsel %vm1490, %v2160, 0.0
        %2179 = vadd.xlane.f32.xlu0 %v2178
        %v2180 = vpop.xlane.xlu0 %2179
        %v2181 = vsel %vm1490, %v2162, 0.0
        %2182 = vadd.xlane.f32.xlu0 %v2181
        %v2183 = vpop.xlane.xlu0 %2182
        %v2184 = vsel %vm1490, %v2164, 0.0
        %2185 = vadd.xlane.f32.xlu0 %v2184
        %v2186 = vpop.xlane.xlu0 %2185
        %v2187 = vsel %vm1490, %v2166, 0.0
        %2188 = vadd.xlane.f32.xlu0 %v2187
        %v2189 = vpop.xlane.xlu0 %2188
        %v2190 = vsel %vm1490, %v2168, 0.0
        %2191 = vadd.xlane.f32.xlu0 %v2190
        %v2192 = vpop.xlane.xlu0 %2191
        %v2193 = vrcp.pop %v2171
        %v2194 = vrcp.pop %v2174
        %v2195 = vrcp.pop %v2177
        %v2196 = vrcp.pop %v2180
        %v2197 = vrcp.pop %v2183
        %v2198 = vrcp.pop %v2186
        %v2199 = vrcp.pop %v2189
        %v2200 = vrcp.pop %v2192
        %v2201 = vmul.f32 %v2154, %v2193
        %v2202 = vmul.f32 %v2156, %v2194
        %v2203 = vmul.f32 %v2158, %v2195
        %v2204 = vmul.f32 %v2160, %v2196
        %v2205 = vmul.f32 %v2162, %v2197
        %v2206 = vmul.f32 %v2164, %v2198
        %v2207 = vmul.f32 %v2166, %v2199
        %v2208 = vmul.f32 %v2168, %v2200
        %v2209 = vpack.c.bf16 %v2202, %v2201
        %v2210 = vpack.c.bf16 %v2204, %v2203
        %v2211 = vpack.c.bf16 %v2206, %v2205
        %v2212 = vpack.c.bf16 %v2208, %v2207
        %v2214 = vsel %vm1490, %v2209, 0
        %v2217 = vsel %vm1490, %v2210, 0
        %2219 = vmatprep.subr.bf16.mxu0 0
        %2220 = vmatpush1.bf16.msra.mxu0 %v2019
        %2221 = vmatprep.subr.bf16.mxu0 0
        %2222 = vmatpush1.bf16.msra.mxu0 %v2020
        %2223 = vmatprep.subr.bf16.mxu0 0
        %2224 = vmatpush1.bf16.msra.mxu0 0
        %2225 = vmatprep.subr.bf16.mxu0 0
        %2226 = vmatpush1.bf16.msra.mxu0 0
        %2227 = vmatprep.subr.bf16.mxu0 0
        %2228 = vmatpush1.bf16.msra.mxu0 0
        %2229 = vmatprep.subr.bf16.mxu0 0
        %2230 = vmatpush1.bf16.msra.mxu0 0
        %2231 = vmatprep.subr.bf16.mxu0 0
        %2232 = vmatpush1.bf16.msra.mxu0 0
        %2233 = vmatprep.subr.bf16.mxu0 0
        %2234 = vmatpush1.bf16.msra.mxu0 0
        %2235 = vmatprep.subr.bf16.mxu0 0
        %2236 = vmatpush1.bf16.msra.mxu0 0
        %2237 = vmatprep.subr.bf16.mxu0 0
        %2238 = vmatpush1.bf16.msra.mxu0 0
        %2239 = vmatprep.subr.bf16.mxu0 0
        %2240 = vmatpush1.bf16.msra.mxu0 0
        %2241 = vmatprep.subr.bf16.mxu0 0
        %2242 = vmatpush1.bf16.msra.mxu0 0
        %2243 = vmatprep.subr.bf16.mxu0 0
        %2244 = vmatpush1.bf16.msra.mxu0 0
        %2245 = vmatprep.subr.bf16.mxu0 0
        %2246 = vmatpush1.bf16.msra.mxu0 0
        %2247 = vmatprep.subr.bf16.mxu0 0
        %2248 = vmatpush1.bf16.msra.mxu0 0
        %2249 = vmatprep.subr.bf16.mxu0 0
        %2250 = vmatpush1.bf16.msra.mxu0 0
        %2251 = vmatprep.mubr.bf16.mxu0 0
        %2252 = vmatmul.mubr.bf16.gmra.mrb[0].mxu0 %v2214
        %v2253 = vpop.f32.mrb[0].mxu0
        %v2254 = vadd.f32 0.0, %v2253
        %v2255 = vpop.f32.mrb[0].mxu0
        %v2256 = vpop.f32.mrb[0].mxu0
        %v2257 = vadd.f32 0.0, %v2256
        %v2258 = vpop.f32.mrb[0].mxu0
        %2259 = vmatprep.mubr.bf16.mxu0 0
        %2260 = vmatmul.mubr.bf16.gmra.mrb[0].mxu0 %v2217
        %v2261 = vpop.f32.mrb[0].mxu0
        %v2262 = vadd.f32 0.0, %v2261
        %v2263 = vpop.f32.mrb[0].mxu0
        %v2264 = vpop.f32.mrb[0].mxu0
        %v2265 = vadd.f32 0.0, %v2264
        %v2266 = vpop.f32.mrb[0].mxu0
        %2267 = vdwg.mxu0
        %v2269 = vsel %vm1490, %v2211, 0
        %v2272 = vsel %vm1490, %v2212, 0
        %2274 = vmatprep.subr.bf16.mxu0 0
        %2275 = vmatpush1.bf16.msra.mxu0 %v2021
        %2276 = vmatprep.subr.bf16.mxu0 0
        %2277 = vmatpush1.bf16.msra.mxu0 %v2022
        %2278 = vmatprep.subr.bf16.mxu0 0
        %2279 = vmatpush1.bf16.msra.mxu0 0
        %2280 = vmatprep.subr.bf16.mxu0 0
        %2281 = vmatpush1.bf16.msra.mxu0 0
        %2282 = vmatprep.subr.bf16.mxu0 0
        %2283 = vmatpush1.bf16.msra.mxu0 0
        %2284 = vmatprep.subr.bf16.mxu0 0
        %2285 = vmatpush1.bf16.msra.mxu0 0
        %2286 = vmatprep.subr.bf16.mxu0 0
        %2287 = vmatpush1.bf16.msra.mxu0 0
        %2288 = vmatprep.subr.bf16.mxu0 0
        %2289 = vmatpush1.bf16.msra.mxu0 0
        %2290 = vmatprep.subr.bf16.mxu0 0
        %2291 = vmatpush1.bf16.msra.mxu0 0
        %2292 = vmatprep.subr.bf16.mxu0 0
        %2293 = vmatpush1.bf16.msra.mxu0 0
        %2294 = vmatprep.subr.bf16.mxu0 0
        %2295 = vmatpush1.bf16.msra.mxu0 0
        %2296 = vmatprep.subr.bf16.mxu0 0
        %2297 = vmatpush1.bf16.msra.mxu0 0
        %2298 = vmatprep.subr.bf16.mxu0 0
        %2299 = vmatpush1.bf16.msra.mxu0 0
        %2300 = vmatprep.subr.bf16.mxu0 0
        %2301 = vmatpush1.bf16.msra.mxu0 0
        %2302 = vmatprep.subr.bf16.mxu0 0
        %2303 = vmatpush1.bf16.msra.mxu0 0
        %2304 = vmatprep.subr.bf16.mxu0 0
        %2305 = vmatpush1.bf16.msra.mxu0 0
        %2306 = vmatprep.mubr.bf16.mxu0 0
        %2307 = vmatmul.mubr.bf16.gmra.mrb[0].mxu0 %v2269
        %v2308 = vpop.f32.mrb[0].mxu0
        %v2309 = vadd.f32 0.0, %v2308
        %v2310 = vpop.f32.mrb[0].mxu0
        %v2311 = vpop.f32.mrb[0].mxu0
        %v2312 = vadd.f32 0.0, %v2311
        %v2313 = vpop.f32.mrb[0].mxu0
        %2314 = vmatprep.mubr.bf16.mxu0 0
        %2315 = vmatmul.mubr.bf16.gmra.mrb[0].mxu0 %v2272
        %v2316 = vpop.f32.mrb[0].mxu0
        %v2317 = vadd.f32 0.0, %v2316
        %v2318 = vpop.f32.mrb[0].mxu0
        %v2319 = vpop.f32.mrb[0].mxu0
        %v2320 = vadd.f32 0.0, %v2319
        %v2321 = vpop.f32.mrb[0].mxu0
        %2322 = vdwg.mxu0
        %v2323 = vpack.c.bf16 %v2257, %v2254
        %v2324 = vpack.c.bf16 %v2265, %v2262
        %v2325 = vpack.c.bf16 %v2312, %v2309
        %v2326 = vpack.c.bf16 %v2320, %v2317
        %v2327 = vld [vmem:[#allocation7] sm:$0xff]
        %v2328 = vld [vmem:[#allocation7 + $0x8] sm:$0xff]
        %v2329 = vld [vmem:[#allocation7 + $0x10] sm:$0xff]
        %v2330 = vld [vmem:[#allocation7 + $0x18] sm:$0xff]
        %v2331 = vld [vmem:[#allocation7 + $0x20] sm:$0xff]
        %v2332 = vld [vmem:[#allocation7 + $0x28] sm:$0xff]
        %v2333 = vld [vmem:[#allocation7 + $0x30] sm:$0xff]
        %v2334 = vld [vmem:[#allocation7 + $0x38] sm:$0xff]
        %v2335 = vld [vmem:[#allocation7 + $0x40] sm:$0xff]
        %v2336 = vld [vmem:[#allocation7 + $0x48] sm:$0xff]
        %v2337 = vld [vmem:[#allocation7 + $0x50] sm:$0xff]
        %v2338 = vld [vmem:[#allocation7 + $0x58] sm:$0xff]
        %v2339 = vld [vmem:[#allocation7 + $0x60] sm:$0xff]
        %v2340 = vld [vmem:[#allocation7 + $0x68] sm:$0xff]
        %v2341 = vld [vmem:[#allocation7 + $0x70] sm:$0xff]
        %v2342 = vld [vmem:[#allocation7 + $0x78] sm:$0xff]
        %v2343 = vld [vmem:[#allocation7 + $0x80] sm:$0xff]
        %v2344 = vld [vmem:[#allocation7 + $0x88] sm:$0xff]
        %v2345 = vld [vmem:[#allocation7 + $0x90] sm:$0xff]
        %v2346 = vld [vmem:[#allocation7 + $0x98] sm:$0xff]
        %v2347 = vld [vmem:[#allocation7 + $0xa0] sm:$0xff]
        %v2348 = vld [vmem:[#allocation7 + $0xa8] sm:$0xff]
        %v2349 = vld [vmem:[#allocation7 + $0xb0] sm:$0xff]
        %v2350 = vld [vmem:[#allocation7 + $0xb8] sm:$0xff]
        %v2351 = vld [vmem:[#allocation7 + $0xc0] sm:$0xff]
        %v2352 = vld [vmem:[#allocation7 + $0xc8] sm:$0xff]
        %v2353 = vld [vmem:[#allocation7 + $0xd0] sm:$0xff]
        %v2354 = vld [vmem:[#allocation7 + $0xd8] sm:$0xff]
        %v2355 = vld [vmem:[#allocation7 + $0xe0] sm:$0xff]
        %v2356 = vld [vmem:[#allocation7 + $0xe8] sm:$0xff]
        %v2357 = vld [vmem:[#allocation7 + $0xf0] sm:$0xff]
        %v2358 = vld [vmem:[#allocation7 + $0xf8] sm:$0xff]
        %v2375 = vunpack.c.l.b16 %v2327
        %v2376 = vunpack.c.h.b16 %v2327
        %v2377 = vunpack.c.l.b16 %v2328
        %v2378 = vunpack.c.h.b16 %v2328
        %v2379 = vunpack.c.l.b16 %v2329
        %v2380 = vunpack.c.h.b16 %v2329
        %v2381 = vunpack.c.l.b16 %v2330
        %v2382 = vunpack.c.h.b16 %v2330
        %v2383 = vunpack.c.l.b16 %v2331
        %v2384 = vunpack.c.h.b16 %v2331
        %v2385 = vunpack.c.l.b16 %v2332
        %v2386 = vunpack.c.h.b16 %v2332
        %v2387 = vunpack.c.l.b16 %v2333
        %v2388 = vunpack.c.h.b16 %v2333
        %v2389 = vunpack.c.l.b16 %v2334
        %v2390 = vunpack.c.h.b16 %v2334
        %v2391 = vunpack.c.l.b16 %v2335
        %v2392 = vunpack.c.h.b16 %v2335
        %v2393 = vunpack.c.l.b16 %v2336
        %v2394 = vunpack.c.h.b16 %v2336
        %v2395 = vunpack.c.l.b16 %v2337
        %v2396 = vunpack.c.h.b16 %v2337
        %v2397 = vunpack.c.l.b16 %v2338
        %v2398 = vunpack.c.h.b16 %v2338
        %v2399 = vunpack.c.l.b16 %v2339
        %v2400 = vunpack.c.h.b16 %v2339
        %v2401 = vunpack.c.l.b16 %v2340
        %v2402 = vunpack.c.h.b16 %v2340
        %v2403 = vunpack.c.l.b16 %v2341
        %v2404 = vunpack.c.h.b16 %v2341
        %v2405 = vunpack.c.l.b16 %v2342
        %v2406 = vunpack.c.h.b16 %v2342
        %v2407 = vpack.c.b16 %v2377, %v2375
        %v2408 = vpack.c.b16 %v2378, %v2376
        %v2409 = vpack.c.b16 %v2381, %v2379
        %v2410 = vpack.c.b16 %v2382, %v2380
        %v2411 = vpack.c.b16 %v2385, %v2383
        %v2412 = vpack.c.b16 %v2386, %v2384
        %v2413 = vpack.c.b16 %v2389, %v2387
        %v2414 = vpack.c.b16 %v2390, %v2388
        %v2415 = vpack.c.b16 %v2393, %v2391
        %v2416 = vpack.c.b16 %v2394, %v2392
        %v2417 = vpack.c.b16 %v2397, %v2395
        %v2418 = vpack.c.b16 %v2398, %v2396
        %v2419 = vpack.c.b16 %v2401, %v2399
        %v2420 = vpack.c.b16 %v2402, %v2400
        %v2421 = vpack.c.b16 %v2405, %v2403
        %v2422 = vpack.c.b16 %v2406, %v2404
        %2439 = vmatprep.subr.bf16.mxu0 %v2408
        %2440 = vmatpush1.bf16.msra.mxu0 %v2407
        %2441 = vmatprep.subr.bf16.mxu0 %v2410
        %2442 = vmatpush1.bf16.msra.mxu0 %v2409
        %2443 = vmatprep.subr.bf16.mxu0 %v2412
        %2444 = vmatpush1.bf16.msra.mxu0 %v2411
        %2445 = vmatprep.subr.bf16.mxu0 %v2414
        %2446 = vmatpush1.bf16.msra.mxu0 %v2413
        %2447 = vmatprep.subr.bf16.mxu0 %v2416
        %2448 = vmatpush1.bf16.msra.mxu0 %v2415
        %2449 = vmatprep.subr.bf16.mxu0 %v2418
        %2450 = vmatpush1.bf16.msra.mxu0 %v2417
        %2451 = vmatprep.subr.bf16.mxu0 %v2420
        %2452 = vmatpush1.bf16.msra.mxu0 %v2419
        %2453 = vmatprep.subr.bf16.mxu0 %v2422
        %2454 = vmatpush1.bf16.msra.mxu0 %v2421
        %2455 = vmatprep.subr.bf16.mxu0 0
        %2456 = vmatpush1.bf16.msra.mxu0 0
        %2457 = vmatprep.subr.bf16.mxu0 0
        %2458 = vmatpush1.bf16.msra.mxu0 0
        %2459 = vmatprep.subr.bf16.mxu0 0
        %2460 = vmatpush1.bf16.msra.mxu0 0
        %2461 = vmatprep.subr.bf16.mxu0 0
        %2462 = vmatpush1.bf16.msra.mxu0 0
        %2463 = vmatprep.subr.bf16.mxu0 0
        %2464 = vmatpush1.bf16.msra.mxu0 0
        %2465 = vmatprep.subr.bf16.mxu0 0
        %2466 = vmatpush1.bf16.msra.mxu0 0
        %2467 = vmatprep.subr.bf16.mxu0 0
        %2468 = vmatpush1.bf16.msra.mxu0 0
        %2469 = vmatprep.subr.bf16.mxu0 0
        %2470 = vmatpush1.bf16.msra.mxu0 0
        %2471 = vmatprep.mubr.bf16.mxu0 0
        %2472 = vmatmul.mubr.bf16.gmra.mrb[0].mxu0 %v2323
        %v2473 = vpop.f32.mrb[0].mxu0
        %v2474 = vadd.f32 0.0, %v2473
        %v2475 = vpop.f32.mrb[0].mxu0
        %v2476 = vadd.f32 0.0, %v2475
        %v2477 = vpop.f32.mrb[0].mxu0
        %v2478 = vadd.f32 0.0, %v2477
        %v2479 = vpop.f32.mrb[0].mxu0
        %v2480 = vadd.f32 0.0, %v2479
        %2481 = vmatprep.mubr.bf16.mxu0 0
        %2482 = vmatmul.mubr.bf16.gmra.mrb[0].mxu0 %v2324
        %v2483 = vpop.f32.mrb[0].mxu0
        %v2484 = vadd.f32 0.0, %v2483
        %v2485 = vpop.f32.mrb[0].mxu0
        %v2486 = vadd.f32 0.0, %v2485
        %v2487 = vpop.f32.mrb[0].mxu0
        %v2488 = vadd.f32 0.0, %v2487
        %v2489 = vpop.f32.mrb[0].mxu0
        %v2490 = vadd.f32 0.0, %v2489
        %2491 = vdwg.mxu0
        %v2508 = vunpack.c.l.b16 %v2343
        %v2509 = vunpack.c.h.b16 %v2343
        %v2510 = vunpack.c.l.b16 %v2344
        %v2511 = vunpack.c.h.b16 %v2344
        %v2512 = vunpack.c.l.b16 %v2345
        %v2513 = vunpack.c.h.b16 %v2345
        %v2514 = vunpack.c.l.b16 %v2346
        %v2515 = vunpack.c.h.b16 %v2346
        %v2516 = vunpack.c.l.b16 %v2347
        %v2517 = vunpack.c.h.b16 %v2347
        %v2518 = vunpack.c.l.b16 %v2348
        %v2519 = vunpack.c.h.b16 %v2348
        %v2520 = vunpack.c.l.b16 %v2349
        %v2521 = vunpack.c.h.b16 %v2349
        %v2522 = vunpack.c.l.b16 %v2350
        %v2523 = vunpack.c.h.b16 %v2350
        %v2524 = vunpack.c.l.b16 %v2351
        %v2525 = vunpack.c.h.b16 %v2351
        %v2526 = vunpack.c.l.b16 %v2352
        %v2527 = vunpack.c.h.b16 %v2352
        %v2528 = vunpack.c.l.b16 %v2353
        %v2529 = vunpack.c.h.b16 %v2353
        %v2530 = vunpack.c.l.b16 %v2354
        %v2531 = vunpack.c.h.b16 %v2354
        %v2532 = vunpack.c.l.b16 %v2355
        %v2533 = vunpack.c.h.b16 %v2355
        %v2534 = vunpack.c.l.b16 %v2356
        %v2535 = vunpack.c.h.b16 %v2356
        %v2536 = vunpack.c.l.b16 %v2357
        %v2537 = vunpack.c.h.b16 %v2357
        %v2538 = vunpack.c.l.b16 %v2358
        %v2539 = vunpack.c.h.b16 %v2358
        %v2540 = vpack.c.b16 %v2510, %v2508
        %v2541 = vpack.c.b16 %v2511, %v2509
        %v2542 = vpack.c.b16 %v2514, %v2512
        %v2543 = vpack.c.b16 %v2515, %v2513
        %v2544 = vpack.c.b16 %v2518, %v2516
        %v2545 = vpack.c.b16 %v2519, %v2517
        %v2546 = vpack.c.b16 %v2522, %v2520
        %v2547 = vpack.c.b16 %v2523, %v2521
        %v2548 = vpack.c.b16 %v2526, %v2524
        %v2549 = vpack.c.b16 %v2527, %v2525
        %v2550 = vpack.c.b16 %v2530, %v2528
        %v2551 = vpack.c.b16 %v2531, %v2529
        %v2552 = vpack.c.b16 %v2534, %v2532
        %v2553 = vpack.c.b16 %v2535, %v2533
        %v2554 = vpack.c.b16 %v2538, %v2536
        %v2555 = vpack.c.b16 %v2539, %v2537
        %2572 = vmatprep.subr.bf16.mxu0 %v2541
        %2573 = vmatpush1.bf16.msra.mxu0 %v2540
        %2574 = vmatprep.subr.bf16.mxu0 %v2543
        %2575 = vmatpush1.bf16.msra.mxu0 %v2542
        %2576 = vmatprep.subr.bf16.mxu0 %v2545
        %2577 = vmatpush1.bf16.msra.mxu0 %v2544
        %2578 = vmatprep.subr.bf16.mxu0 %v2547
        %2579 = vmatpush1.bf16.msra.mxu0 %v2546
        %2580 = vmatprep.subr.bf16.mxu0 %v2549
        %2581 = vmatpush1.bf16.msra.mxu0 %v2548
        %2582 = vmatprep.subr.bf16.mxu0 %v2551
        %2583 = vmatpush1.bf16.msra.mxu0 %v2550
        %2584 = vmatprep.subr.bf16.mxu0 %v2553
        %2585 = vmatpush1.bf16.msra.mxu0 %v2552
        %2586 = vmatprep.subr.bf16.mxu0 %v2555
        %2587 = vmatpush1.bf16.msra.mxu0 %v2554
        %2588 = vmatprep.subr.bf16.mxu0 0
        %2589 = vmatpush1.bf16.msra.mxu0 0
        %2590 = vmatprep.subr.bf16.mxu0 0
        %2591 = vmatpush1.bf16.msra.mxu0 0
        %2592 = vmatprep.subr.bf16.mxu0 0
        %2593 = vmatpush1.bf16.msra.mxu0 0
        %2594 = vmatprep.subr.bf16.mxu0 0
        %2595 = vmatpush1.bf16.msra.mxu0 0
        %2596 = vmatprep.subr.bf16.mxu0 0
        %2597 = vmatpush1.bf16.msra.mxu0 0
        %2598 = vmatprep.subr.bf16.mxu0 0
        %2599 = vmatpush1.bf16.msra.mxu0 0
        %2600 = vmatprep.subr.bf16.mxu0 0
        %2601 = vmatpush1.bf16.msra.mxu0 0
        %2602 = vmatprep.subr.bf16.mxu0 0
        %2603 = vmatpush1.bf16.msra.mxu0 0
        %2604 = vmatprep.mubr.bf16.mxu0 0
        %2605 = vmatmul.mubr.bf16.gmra.mrb[0].mxu0 %v2325
        %v2606 = vpop.f32.mrb[0].mxu0
        %v2607 = vadd.f32 0.0, %v2606
        %v2608 = vpop.f32.mrb[0].mxu0
        %v2609 = vadd.f32 0.0, %v2608
        %v2610 = vpop.f32.mrb[0].mxu0
        %v2611 = vadd.f32 0.0, %v2610
        %v2612 = vpop.f32.mrb[0].mxu0
        %v2613 = vadd.f32 0.0, %v2612
        %2614 = vmatprep.mubr.bf16.mxu0 0
        %2615 = vmatmul.mubr.bf16.gmra.mrb[0].mxu0 %v2326
        %v2616 = vpop.f32.mrb[0].mxu0
        %v2617 = vadd.f32 0.0, %v2616
        %v2618 = vpop.f32.mrb[0].mxu0
        %v2619 = vadd.f32 0.0, %v2618
        %v2620 = vpop.f32.mrb[0].mxu0
        %v2621 = vadd.f32 0.0, %v2620
        %v2622 = vpop.f32.mrb[0].mxu0
        %v2623 = vadd.f32 0.0, %v2622
        %2624 = vdwg.mxu0
        %v2625 = vadd.f32 %v2474, %v2607
        %v2626 = vadd.f32 %v2476, %v2609
        %v2627 = vadd.f32 %v2478, %v2611
        %v2628 = vadd.f32 %v2480, %v2613
        %v2629 = vadd.f32 %v2484, %v2617
        %v2630 = vadd.f32 %v2486, %v2619
        %v2631 = vadd.f32 %v2488, %v2621
        %v2632 = vadd.f32 %v2490, %v2623
        %v2633 = vld [vmem:[%s4] sm:$0x3]
        %v2635 = vlaneseq
        %v2636 = vshrl.u32 %v2635, 7
        %v2637 = vsub.s32 0, %v2636
        %v2638 = vrot.slane %v2633, %v2637
        %v2639 = vlaneseq
        %v2640 = vshrl.u32 %v2639, 7
        %v2641 = vsub.s32 1, %v2640
        %v2642 = vrot.slane %v2633, %v2641
        %v2645 = vadd.f32 %v1995, %v2638
        %v2646 = vadd.f32 %v1996, %v2642
        %v2647 = vadd.f32 %v1997, %v2638
        %v2648 = vadd.f32 %v1998, %v2642
        %v2649 = vadd.f32 %v1999, %v2638
        %v2650 = vadd.f32 %v2000, %v2642
        %v2651 = vadd.f32 %v2001, %v2638
        %v2652 = vadd.f32 %v2002, %v2642
        %v2653 = vadd.f32 %v2625, %v2638
        %v2654 = vadd.f32 %v2626, %v2642
        %v2655 = vadd.f32 %v2627, %v2638
        %v2656 = vadd.f32 %v2628, %v2642
        %v2657 = vadd.f32 %v2629, %v2638
        %v2658 = vadd.f32 %v2630, %v2642
        %v2659 = vadd.f32 %v2631, %v2638
        %v2660 = vadd.f32 %v2632, %v2642
        %v2661 = vadd.f32 %v521, %v2645
        %v2662 = vadd.f32 %v522, %v2646
        %v2663 = vadd.f32 %v523, %v2647
        %v2664 = vadd.f32 %v524, %v2648
        %v2665 = vadd.f32 %v525, %v2649
        %v2666 = vadd.f32 %v526, %v2650
        %v2667 = vadd.f32 %v527, %v2651
        %v2668 = vadd.f32 %v528, %v2652
        %v2669 = vadd.f32 %v529, %v2653
        %v2670 = vadd.f32 %v530, %v2654
        %v2671 = vadd.f32 %v531, %v2655
        %v2672 = vadd.f32 %v532, %v2656
        %v2673 = vadd.f32 %v533, %v2657
        %v2674 = vadd.f32 %v534, %v2658
        %v2675 = vadd.f32 %v535, %v2659
        %v2676 = vadd.f32 %v536, %v2660
        %v2677 = vadd.f32 %v2661, %v2662
        %2678 = vadd.xlane.f32.xlu0 %v2677
        %v2679 = vpop.xlane.xlu0 %2678
        %v2680 = vadd.f32 %v2663, %v2664
        %2681 = vadd.xlane.f32.xlu0 %v2680
        %v2682 = vpop.xlane.xlu0 %2681
        %v2683 = vadd.f32 %v2665, %v2666
        %2684 = vadd.xlane.f32.xlu0 %v2683
        %v2685 = vpop.xlane.xlu0 %2684
        %v2686 = vadd.f32 %v2667, %v2668
        %2687 = vadd.xlane.f32.xlu0 %v2686
        %v2688 = vpop.xlane.xlu0 %2687
        %v2689 = vadd.f32 %v2669, %v2670
        %2690 = vadd.xlane.f32.xlu0 %v2689
        %v2691 = vpop.xlane.xlu0 %2690
        %v2692 = vadd.f32 %v2671, %v2672
        %2693 = vadd.xlane.f32.xlu0 %v2692
        %v2694 = vpop.xlane.xlu0 %2693
        %v2695 = vadd.f32 %v2673, %v2674
        %2696 = vadd.xlane.f32.xlu0 %v2695
        %v2697 = vpop.xlane.xlu0 %2696
        %v2698 = vadd.f32 %v2675, %v2676
        %2699 = vadd.xlane.f32.xlu0 %v2698
        %v2700 = vpop.xlane.xlu0 %2699
        %v2701 = vrcp.pop 256.0
        %v2702 = vmul.f32 %v2679, %v2701
        %v2703 = vmul.f32 %v2682, %v2701
        %v2704 = vmul.f32 %v2685, %v2701
        %v2705 = vmul.f32 %v2688, %v2701
        %v2706 = vmul.f32 %v2691, %v2701
        %v2707 = vmul.f32 %v2694, %v2701
        %v2708 = vmul.f32 %v2697, %v2701
        %v2709 = vmul.f32 %v2700, %v2701
        %v2710 = vsub.f32 %v2661, %v2702
        %v2711 = vsub.f32 %v2662, %v2702
        %v2712 = vsub.f32 %v2663, %v2703
        %v2713 = vsub.f32 %v2664, %v2703
        %v2714 = vsub.f32 %v2665, %v2704
        %v2715 = vsub.f32 %v2666, %v2704
        %v2716 = vsub.f32 %v2667, %v2705
        %v2717 = vsub.f32 %v2668, %v2705
        %v2718 = vsub.f32 %v2669, %v2706
        %v2719 = vsub.f32 %v2670, %v2706
        %v2720 = vsub.f32 %v2671, %v2707
        %v2721 = vsub.f32 %v2672, %v2707
        %v2722 = vsub.f32 %v2673, %v2708
        %v2723 = vsub.f32 %v2674, %v2708
        %v2724 = vsub.f32 %v2675, %v2709
        %v2725 = vsub.f32 %v2676, %v2709
        %v2726 = vmul.f32 %v2710, %v2710
        %v2727 = vmul.f32 %v2711, %v2711
        %v2728 = vmul.f32 %v2712, %v2712
        %v2729 = vmul.f32 %v2713, %v2713
        %v2730 = vmul.f32 %v2714, %v2714
        %v2731 = vmul.f32 %v2715, %v2715
        %v2732 = vmul.f32 %v2716, %v2716
        %v2733 = vmul.f32 %v2717, %v2717
        %v2734 = vmul.f32 %v2718, %v2718
        %v2735 = vmul.f32 %v2719, %v2719
        %v2736 = vmul.f32 %v2720, %v2720
        %v2737 = vmul.f32 %v2721, %v2721
        %v2738 = vmul.f32 %v2722, %v2722
        %v2739 = vmul.f32 %v2723, %v2723
        %v2740 = vmul.f32 %v2724, %v2724
        %v2741 = vmul.f32 %v2725, %v2725
        %v2742 = vadd.f32 %v2726, %v2727
        %2743 = vadd.xlane.f32.xlu0 %v2742
        %v2744 = vpop.xlane.xlu0 %2743
        %v2745 = vadd.f32 %v2728, %v2729
        %2746 = vadd.xlane.f32.xlu0 %v2745
        %v2747 = vpop.xlane.xlu0 %2746
        %v2748 = vadd.f32 %v2730, %v2731
        %2749 = vadd.xlane.f32.xlu0 %v2748
        %v2750 = vpop.xlane.xlu0 %2749
        %v2751 = vadd.f32 %v2732, %v2733
        %2752 = vadd.xlane.f32.xlu0 %v2751
        %v2753 = vpop.xlane.xlu0 %2752
        %v2754 = vadd.f32 %v2734, %v2735
        %2755 = vadd.xlane.f32.xlu0 %v2754
        %v2756 = vpop.xlane.xlu0 %2755
        %v2757 = vadd.f32 %v2736, %v2737
        %2758 = vadd.xlane.f32.xlu0 %v2757
        %v2759 = vpop.xlane.xlu0 %2758
        %v2760 = vadd.f32 %v2738, %v2739
        %2761 = vadd.xlane.f32.xlu0 %v2760
        %v2762 = vpop.xlane.xlu0 %2761
        %v2763 = vadd.f32 %v2740, %v2741
        %2764 = vadd.xlane.f32.xlu0 %v2763
        %v2765 = vpop.xlane.xlu0 %2764
        %v2766 = vmul.f32 %v2744, %v2701
        %v2767 = vmul.f32 %v2747, %v2701
        %v2768 = vmul.f32 %v2750, %v2701
        %v2769 = vmul.f32 %v2753, %v2701
        %v2770 = vmul.f32 %v2756, %v2701
        %v2771 = vmul.f32 %v2759, %v2701
        %v2772 = vmul.f32 %v2762, %v2701
        %v2773 = vmul.f32 %v2765, %v2701
        %v2774 = vadd.f32 %v2766, 1e-05
        %v2775 = vadd.f32 %v2767, 1e-05
        %v2776 = vadd.f32 %v2768, 1e-05
        %v2777 = vadd.f32 %v2769, 1e-05
        %v2778 = vadd.f32 %v2770, 1e-05
        %v2779 = vadd.f32 %v2771, 1e-05
        %v2780 = vadd.f32 %v2772, 1e-05
        %v2781 = vadd.f32 %v2773, 1e-05
        %v2782 = vrsqrt.pop %v2774
        %v2783 = vrsqrt.pop %v2775
        %v2784 = vrsqrt.pop %v2776
        %v2785 = vrsqrt.pop %v2777
        %v2786 = vrsqrt.pop %v2778
        %v2787 = vrsqrt.pop %v2779
        %v2788 = vrsqrt.pop %v2780
        %v2789 = vrsqrt.pop %v2781
        %v2790 = vmul.f32 %v2710, %v2782
        %v2791 = vmul.f32 %v2711, %v2782
        %v2792 = vmul.f32 %v2712, %v2783
        %v2793 = vmul.f32 %v2713, %v2783
        %v2794 = vmul.f32 %v2714, %v2784
        %v2795 = vmul.f32 %v2715, %v2784
        %v2796 = vmul.f32 %v2716, %v2785
        %v2797 = vmul.f32 %v2717, %v2785
        %v2798 = vmul.f32 %v2718, %v2786
        %v2799 = vmul.f32 %v2719, %v2786
        %v2800 = vmul.f32 %v2720, %v2787
        %v2801 = vmul.f32 %v2721, %v2787
        %v2802 = vmul.f32 %v2722, %v2788
        %v2803 = vmul.f32 %v2723, %v2788
        %v2804 = vmul.f32 %v2724, %v2789
        %v2805 = vmul.f32 %v2725, %v2789
        %v2806 = vld [vmem:[%s5] sm:$0x3]
        %v2808 = vlaneseq
        %v2809 = vshrl.u32 %v2808, 7
        %v2810 = vsub.s32 0, %v2809
        %v2811 = vrot.slane %v2806, %v2810
        %v2812 = vlaneseq
        %v2813 = vshrl.u32 %v2812, 7
        %v2814 = vsub.s32 1, %v2813
        %v2815 = vrot.slane %v2806, %v2814
        %v2818 = vmul.f32 %v2790, %v2811
        %v2819 = vmul.f32 %v2791, %v2815
        %v2820 = vmul.f32 %v2792, %v2811
        %v2821 = vmul.f32 %v2793, %v2815
        %v2822 = vmul.f32 %v2794, %v2811
        %v2823 = vmul.f32 %v2795, %v2815
        %v2824 = vmul.f32 %v2796, %v2811
        %v2825 = vmul.f32 %v2797, %v2815
        %v2826 = vmul.f32 %v2798, %v2811
        %v2827 = vmul.f32 %v2799, %v2815
        %v2828 = vmul.f32 %v2800, %v2811
        %v2829 = vmul.f32 %v2801, %v2815
        %v2830 = vmul.f32 %v2802, %v2811
        %v2831 = vmul.f32 %v2803, %v2815
        %v2832 = vmul.f32 %v2804, %v2811
        %v2833 = vmul.f32 %v2805, %v2815
        %v2834 = vld [vmem:[%s6] sm:$0x3]
        %v2836 = vlaneseq
        %v2837 = vshrl.u32 %v2836, 7
        %v2838 = vsub.s32 0, %v2837
        %v2839 = vrot.slane %v2834, %v2838
        %v2840 = vlaneseq
        %v2841 = vshrl.u32 %v2840, 7
        %v2842 = vsub.s32 1, %v2841
        %v2843 = vrot.slane %v2834, %v2842
        %v2846 = vadd.f32 %v2818, %v2839
        %v2847 = vadd.f32 %v2819, %v2843
        %v2848 = vadd.f32 %v2820, %v2839
        %v2849 = vadd.f32 %v2821, %v2843
        %v2850 = vadd.f32 %v2822, %v2839
        %v2851 = vadd.f32 %v2823, %v2843
        %v2852 = vadd.f32 %v2824, %v2839
        %v2853 = vadd.f32 %v2825, %v2843
        %v2854 = vadd.f32 %v2826, %v2839
        %v2855 = vadd.f32 %v2827, %v2843
        %v2856 = vadd.f32 %v2828, %v2839
        %v2857 = vadd.f32 %v2829, %v2843
        %v2858 = vadd.f32 %v2830, %v2839
        %v2859 = vadd.f32 %v2831, %v2843
        %v2860 = vadd.f32 %v2832, %v2839
        %v2861 = vadd.f32 %v2833, %v2843
        %v2862 = vpack.c.bf16 %v2848, %v2846
        %v2863 = vpack.c.bf16 %v2849, %v2847
        %v2864 = vpack.c.bf16 %v2852, %v2850
        %v2865 = vpack.c.bf16 %v2853, %v2851
        %v2866 = vpack.c.bf16 %v2856, %v2854
        %v2867 = vpack.c.bf16 %v2857, %v2855
        %v2868 = vpack.c.bf16 %v2860, %v2858
        %v2869 = vpack.c.bf16 %v2861, %v2859
        %v2870 = vld [vmem:[#allocation8] sm:$0xff]
        %v2871 = vld [vmem:[#allocation8 + $0x8] sm:$0xff]
        %v2872 = vld [vmem:[#allocation8 + $0x10] sm:$0xff]
        %v2873 = vld [vmem:[#allocation8 + $0x18] sm:$0xff]
        %v2874 = vld [vmem:[#allocation8 + $0x20] sm:$0xff]
        %v2875 = vld [vmem:[#allocation8 + $0x28] sm:$0xff]
        %v2876 = vld [vmem:[#allocation8 + $0x30] sm:$0xff]
        %v2877 = vld [vmem:[#allocation8 + $0x38] sm:$0xff]
        %v2878 = vld [vmem:[#allocation8 + $0x40] sm:$0xff]
        %v2879 = vld [vmem:[#allocation8 + $0x48] sm:$0xff]
        %v2880 = vld [vmem:[#allocation8 + $0x50] sm:$0xff]
        %v2881 = vld [vmem:[#allocation8 + $0x58] sm:$0xff]
        %v2882 = vld [vmem:[#allocation8 + $0x60] sm:$0xff]
        %v2883 = vld [vmem:[#allocation8 + $0x68] sm:$0xff]
        %v2884 = vld [vmem:[#allocation8 + $0x70] sm:$0xff]
        %v2885 = vld [vmem:[#allocation8 + $0x78] sm:$0xff]
        %v2886 = vld [vmem:[#allocation8 + $0x80] sm:$0xff]
        %v2887 = vld [vmem:[#allocation8 + $0x88] sm:$0xff]
        %v2888 = vld [vmem:[#allocation8 + $0x90] sm:$0xff]
        %v2889 = vld [vmem:[#allocation8 + $0x98] sm:$0xff]
        %v2890 = vld [vmem:[#allocation8 + $0xa0] sm:$0xff]
        %v2891 = vld [vmem:[#allocation8 + $0xa8] sm:$0xff]
        %v2892 = vld [vmem:[#allocation8 + $0xb0] sm:$0xff]
        %v2893 = vld [vmem:[#allocation8 + $0xb8] sm:$0xff]
        %v2894 = vld [vmem:[#allocation8 + $0xc0] sm:$0xff]
        %v2895 = vld [vmem:[#allocation8 + $0xc8] sm:$0xff]
        %v2896 = vld [vmem:[#allocation8 + $0xd0] sm:$0xff]
        %v2897 = vld [vmem:[#allocation8 + $0xd8] sm:$0xff]
        %v2898 = vld [vmem:[#allocation8 + $0xe0] sm:$0xff]
        %v2899 = vld [vmem:[#allocation8 + $0xe8] sm:$0xff]
        %v2900 = vld [vmem:[#allocation8 + $0xf0] sm:$0xff]
        %v2901 = vld [vmem:[#allocation8 + $0xf8] sm:$0xff]
        %v2902 = vld [vmem:[#allocation8 + $0x100] sm:$0xff]
        %v2903 = vld [vmem:[#allocation8 + $0x108] sm:$0xff]
        %v2904 = vld [vmem:[#allocation8 + $0x110] sm:$0xff]
        %v2905 = vld [vmem:[#allocation8 + $0x118] sm:$0xff]
        %v2906 = vld [vmem:[#allocation8 + $0x120] sm:$0xff]
        %v2907 = vld [vmem:[#allocation8 + $0x128] sm:$0xff]
        %v2908 = vld [vmem:[#allocation8 + $0x130] sm:$0xff]
        %v2909 = vld [vmem:[#allocation8 + $0x138] sm:$0xff]
        %v2910 = vld [vmem:[#allocation8 + $0x140] sm:$0xff]
        %v2911 = vld [vmem:[#allocation8 + $0x148] sm:$0xff]
        %v2912 = vld [vmem:[#allocation8 + $0x150] sm:$0xff]
        %v2913 = vld [vmem:[#allocation8 + $0x158] sm:$0xff]
        %v2914 = vld [vmem:[#allocation8 + $0x160] sm:$0xff]
        %v2915 = vld [vmem:[#allocation8 + $0x168] sm:$0xff]
        %v2916 = vld [vmem:[#allocation8 + $0x170] sm:$0xff]
        %v2917 = vld [vmem:[#allocation8 + $0x178] sm:$0xff]
        %v2918 = vld [vmem:[#allocation8 + $0x180] sm:$0xff]
        %v2919 = vld [vmem:[#allocation8 + $0x188] sm:$0xff]
        %v2920 = vld [vmem:[#allocation8 + $0x190] sm:$0xff]
        %v2921 = vld [vmem:[#allocation8 + $0x198] sm:$0xff]
        %v2922 = vld [vmem:[#allocation8 + $0x1a0] sm:$0xff]
        %v2923 = vld [vmem:[#allocation8 + $0x1a8] sm:$0xff]
        %v2924 = vld [vmem:[#allocation8 + $0x1b0] sm:$0xff]
        %v2925 = vld [vmem:[#allocation8 + $0x1b8] sm:$0xff]
        %v2926 = vld [vmem:[#allocation8 + $0x1c0] sm:$0xff]
        %v2927 = vld [vmem:[#allocation8 + $0x1c8] sm:$0xff]
        %v2928 = vld [vmem:[#allocation8 + $0x1d0] sm:$0xff]
        %v2929 = vld [vmem:[#allocation8 + $0x1d8] sm:$0xff]
        %v2930 = vld [vmem:[#allocation8 + $0x1e0] sm:$0xff]
        %v2931 = vld [vmem:[#allocation8 + $0x1e8] sm:$0xff]
        %v2932 = vld [vmem:[#allocation8 + $0x1f0] sm:$0xff]
        %v2933 = vld [vmem:[#allocation8 + $0x1f8] sm:$0xff]
        %v2934 = vld [vmem:[%s8] sm:$0xf]
        %v2936 = vlaneseq
        %v2937 = vshrl.u32 %v2936, 7
        %v2938 = vsub.s32 0, %v2937
        %v2939 = vrot.slane %v2934, %v2938
        %v2940 = vlaneseq
        %v2941 = vshrl.u32 %v2940, 7
        %v2942 = vsub.s32 1, %v2941
        %v2943 = vrot.slane %v2934, %v2942
        %v2944 = vlaneseq
        %v2945 = vshrl.u32 %v2944, 7
        %v2946 = vsub.s32 2, %v2945
        %v2947 = vrot.slane %v2934, %v2946
        %v2948 = vlaneseq
        %v2949 = vshrl.u32 %v2948, 7
        %v2950 = vsub.s32 3, %v2949
        %v2951 = vrot.slane %v2934, %v2950
        %v3020 = vunpack.c.l.b16 %v2870
        %v3021 = vunpack.c.h.b16 %v2870
        %v3022 = vunpack.c.l.b16 %v2871
        %v3023 = vunpack.c.h.b16 %v2871
        %v3024 = vunpack.c.l.b16 %v2872
        %v3025 = vunpack.c.h.b16 %v2872
        %v3026 = vunpack.c.l.b16 %v2873
        %v3027 = vunpack.c.h.b16 %v2873
        %v3028 = vunpack.c.l.b16 %v2874
        %v3029 = vunpack.c.h.b16 %v2874
        %v3030 = vunpack.c.l.b16 %v2875
        %v3031 = vunpack.c.h.b16 %v2875
        %v3032 = vunpack.c.l.b16 %v2876
        %v3033 = vunpack.c.h.b16 %v2876
        %v3034 = vunpack.c.l.b16 %v2877
        %v3035 = vunpack.c.h.b16 %v2877
        %v3036 = vunpack.c.l.b16 %v2878
        %v3037 = vunpack.c.h.b16 %v2878
        %v3038 = vunpack.c.l.b16 %v2879
        %v3039 = vunpack.c.h.b16 %v2879
        %v3040 = vunpack.c.l.b16 %v2880
        %v3041 = vunpack.c.h.b16 %v2880
        %v3042 = vunpack.c.l.b16 %v2881
        %v3043 = vunpack.c.h.b16 %v2881
        %v3044 = vunpack.c.l.b16 %v2882
        %v3045 = vunpack.c.h.b16 %v2882
        %v3046 = vunpack.c.l.b16 %v2883
        %v3047 = vunpack.c.h.b16 %v2883
        %v3048 = vunpack.c.l.b16 %v2884
        %v3049 = vunpack.c.h.b16 %v2884
        %v3050 = vunpack.c.l.b16 %v2885
        %v3051 = vunpack.c.h.b16 %v2885
        %v3052 = vunpack.c.l.b16 %v2886
        %v3053 = vunpack.c.h.b16 %v2886
        %v3054 = vunpack.c.l.b16 %v2887
        %v3055 = vunpack.c.h.b16 %v2887
        %v3056 = vunpack.c.l.b16 %v2888
        %v3057 = vunpack.c.h.b16 %v2888
        %v3058 = vunpack.c.l.b16 %v2889
        %v3059 = vunpack.c.h.b16 %v2889
        %v3060 = vunpack.c.l.b16 %v2890
        %v3061 = vunpack.c.h.b16 %v2890
        %v3062 = vunpack.c.l.b16 %v2891
        %v3063 = vunpack.c.h.b16 %v2891
        %v3064 = vunpack.c.l.b16 %v2892
        %v3065 = vunpack.c.h.b16 %v2892
        %v3066 = vunpack.c.l.b16 %v2893
        %v3067 = vunpack.c.h.b16 %v2893
        %v3068 = vunpack.c.l.b16 %v2894
        %v3069 = vunpack.c.h.b16 %v2894
        %v3070 = vunpack.c.l.b16 %v2895
        %v3071 = vunpack.c.h.b16 %v2895
        %v3072 = vunpack.c.l.b16 %v2896
        %v3073 = vunpack.c.h.b16 %v2896
        %v3074 = vunpack.c.l.b16 %v2897
        %v3075 = vunpack.c.h.b16 %v2897
        %v3076 = vunpack.c.l.b16 %v2898
        %v3077 = vunpack.c.h.b16 %v2898
        %v3078 = vunpack.c.l.b16 %v2899
        %v3079 = vunpack.c.h.b16 %v2899
        %v3080 = vunpack.c.l.b16 %v2900
        %v3081 = vunpack.c.h.b16 %v2900
        %v3082 = vunpack.c.l.b16 %v2901
        %v3083 = vunpack.c.h.b16 %v2901
        %v3084 = vunpack.c.l.b16 %v2902
        %v3085 = vunpack.c.h.b16 %v2902
        %v3086 = vunpack.c.l.b16 %v2903
        %v3087 = vunpack.c.h.b16 %v2903
        %v3088 = vunpack.c.l.b16 %v2904
        %v3089 = vunpack.c.h.b16 %v2904
        %v3090 = vunpack.c.l.b16 %v2905
        %v3091 = vunpack.c.h.b16 %v2905
        %v3092 = vunpack.c.l.b16 %v2906
        %v3093 = vunpack.c.h.b16 %v2906
        %v3094 = vunpack.c.l.b16 %v2907
        %v3095 = vunpack.c.h.b16 %v2907
        %v3096 = vunpack.c.l.b16 %v2908
        %v3097 = vunpack.c.h.b16 %v2908
        %v3098 = vunpack.c.l.b16 %v2909
        %v3099 = vunpack.c.h.b16 %v2909
        %v3100 = vunpack.c.l.b16 %v2910
        %v3101 = vunpack.c.h.b16 %v2910
        %v3102 = vunpack.c.l.b16 %v2911
        %v3103 = vunpack.c.h.b16 %v2911
        %v3104 = vunpack.c.l.b16 %v2912
        %v3105 = vunpack.c.h.b16 %v2912
        %v3106 = vunpack.c.l.b16 %v2913
        %v3107 = vunpack.c.h.b16 %v2913
        %v3108 = vunpack.c.l.b16 %v2914
        %v3109 = vunpack.c.h.b16 %v2914
        %v3110 = vunpack.c.l.b16 %v2915
        %v3111 = vunpack.c.h.b16 %v2915
        %v3112 = vunpack.c.l.b16 %v2916
        %v3113 = vunpack.c.h.b16 %v2916
        %v3114 = vunpack.c.l.b16 %v2917
        %v3115 = vunpack.c.h.b16 %v2917
        %v3116 = vunpack.c.l.b16 %v2918
        %v3117 = vunpack.c.h.b16 %v2918
        %v3118 = vunpack.c.l.b16 %v2919
        %v3119 = vunpack.c.h.b16 %v2919
        %v3120 = vunpack.c.l.b16 %v2920
        %v3121 = vunpack.c.h.b16 %v2920
        %v3122 = vunpack.c.l.b16 %v2921
        %v3123 = vunpack.c.h.b16 %v2921
        %v3124 = vunpack.c.l.b16 %v2922
        %v3125 = vunpack.c.h.b16 %v2922
        %v3126 = vunpack.c.l.b16 %v2923
        %v3127 = vunpack.c.h.b16 %v2923
        %v3128 = vunpack.c.l.b16 %v2924
        %v3129 = vunpack.c.h.b16 %v2924
        %v3130 = vunpack.c.l.b16 %v2925
        %v3131 = vunpack.c.h.b16 %v2925
        %v3132 = vunpack.c.l.b16 %v2926
        %v3133 = vunpack.c.h.b16 %v2926
        %v3134 = vunpack.c.l.b16 %v2927
        %v3135 = vunpack.c.h.b16 %v2927
        %v3136 = vunpack.c.l.b16 %v2928
        %v3137 = vunpack.c.h.b16 %v2928
        %v3138 = vunpack.c.l.b16 %v2929
        %v3139 = vunpack.c.h.b16 %v2929
        %v3140 = vunpack.c.l.b16 %v2930
        %v3141 = vunpack.c.h.b16 %v2930
        %v3142 = vunpack.c.l.b16 %v2931
        %v3143 = vunpack.c.h.b16 %v2931
        %v3144 = vunpack.c.l.b16 %v2932
        %v3145 = vunpack.c.h.b16 %v2932
        %v3146 = vunpack.c.l.b16 %v2933
        %v3147 = vunpack.c.h.b16 %v2933
        %v3148 = vpack.c.b16 %v3024, %v3020
        %v3149 = vpack.c.b16 %v3025, %v3021
        %v3150 = vpack.c.b16 %v3026, %v3022
        %v3151 = vpack.c.b16 %v3027, %v3023
        %v3152 = vpack.c.b16 %v3032, %v3028
        %v3153 = vpack.c.b16 %v3033, %v3029
        %v3154 = vpack.c.b16 %v3034, %v3030
        %v3155 = vpack.c.b16 %v3035, %v3031
        %v3156 = vpack.c.b16 %v3040, %v3036
        %v3157 = vpack.c.b16 %v3041, %v3037
        %v3158 = vpack.c.b16 %v3042, %v3038
        %v3159 = vpack.c.b16 %v3043, %v3039
        %v3160 = vpack.c.b16 %v3048, %v3044
        %v3161 = vpack.c.b16 %v3049, %v3045
        %v3162 = vpack.c.b16 %v3050, %v3046
        %v3163 = vpack.c.b16 %v3051, %v3047
        %v3164 = vpack.c.b16 %v3056, %v3052
        %v3165 = vpack.c.b16 %v3057, %v3053
        %v3166 = vpack.c.b16 %v3058, %v3054
        %v3167 = vpack.c.b16 %v3059, %v3055
        %v3168 = vpack.c.b16 %v3064, %v3060
        %v3169 = vpack.c.b16 %v3065, %v3061
        %v3170 = vpack.c.b16 %v3066, %v3062
        %v3171 = vpack.c.b16 %v3067, %v3063
        %v3172 = vpack.c.b16 %v3072, %v3068
        %v3173 = vpack.c.b16 %v3073, %v3069
        %v3174 = vpack.c.b16 %v3074, %v3070
        %v3175 = vpack.c.b16 %v3075, %v3071
        %v3176 = vpack.c.b16 %v3080, %v3076
        %v3177 = vpack.c.b16 %v3081, %v3077
        %v3178 = vpack.c.b16 %v3082, %v3078
        %v3179 = vpack.c.b16 %v3083, %v3079
        %v3180 = vpack.c.b16 %v3088, %v3084
        %v3181 = vpack.c.b16 %v3089, %v3085
        %v3182 = vpack.c.b16 %v3090, %v3086
        %v3183 = vpack.c.b16 %v3091, %v3087
        %v3184 = vpack.c.b16 %v3096, %v3092
        %v3185 = vpack.c.b16 %v3097, %v3093
        %v3186 = vpack.c.b16 %v3098, %v3094
        %v3187 = vpack.c.b16 %v3099, %v3095
        %v3188 = vpack.c.b16 %v3104, %v3100
        %v3189 = vpack.c.b16 %v3105, %v3101
        %v3190 = vpack.c.b16 %v3106, %v3102
        %v3191 = vpack.c.b16 %v3107, %v3103
        %v3192 = vpack.c.b16 %v3112, %v3108
        %v3193 = vpack.c.b16 %v3113, %v3109
        %v3194 = vpack.c.b16 %v3114, %v3110
        %v3195 = vpack.c.b16 %v3115, %v3111
        %v3196 = vpack.c.b16 %v3120, %v3116
        %v3197 = vpack.c.b16 %v3121, %v3117
        %v3198 = vpack.c.b16 %v3122, %v3118
        %v3199 = vpack.c.b16 %v3123, %v3119
        %v3200 = vpack.c.b16 %v3128, %v3124
        %v3201 = vpack.c.b16 %v3129, %v3125
        %v3202 = vpack.c.b16 %v3130, %v3126
        %v3203 = vpack.c.b16 %v3131, %v3127
        %v3204 = vpack.c.b16 %v3136, %v3132
        %v3205 = vpack.c.b16 %v3137, %v3133
        %v3206 = vpack.c.b16 %v3138, %v3134
        %v3207 = vpack.c.b16 %v3139, %v3135
        %v3208 = vpack.c.b16 %v3144, %v3140
        %v3209 = vpack.c.b16 %v3145, %v3141
        %v3210 = vpack.c.b16 %v3146, %v3142
        %v3211 = vpack.c.b16 %v3147, %v3143
        %3276 = vmatprep.subr.bf16.mxu0 %v3149
        %3277 = vmatpush1.bf16.msra.mxu0 %v3148
        %3278 = vmatprep.subr.bf16.mxu0 %v3153
        %3279 = vmatpush1.bf16.msra.mxu0 %v3152
        %3280 = vmatprep.subr.bf16.mxu0 %v3157
        %3281 = vmatpush1.bf16.msra.mxu0 %v3156
        %3282 = vmatprep.subr.bf16.mxu0 %v3161
        %3283 = vmatpush1.bf16.msra.mxu0 %v3160
        %3284 = vmatprep.subr.bf16.mxu0 %v3165
        %3285 = vmatpush1.bf16.msra.mxu0 %v3164
        %3286 = vmatprep.subr.bf16.mxu0 %v3169
        %3287 = vmatpush1.bf16.msra.mxu0 %v3168
        %3288 = vmatprep.subr.bf16.mxu0 %v3173
        %3289 = vmatpush1.bf16.msra.mxu0 %v3172
        %3290 = vmatprep.subr.bf16.mxu0 %v3177
        %3291 = vmatpush1.bf16.msra.mxu0 %v3176
        %3292 = vmatprep.subr.bf16.mxu0 %v3181
        %3293 = vmatpush1.bf16.msra.mxu0 %v3180
        %3294 = vmatprep.subr.bf16.mxu0 %v3185
        %3295 = vmatpush1.bf16.msra.mxu0 %v3184
        %3296 = vmatprep.subr.bf16.mxu0 %v3189
        %3297 = vmatpush1.bf16.msra.mxu0 %v3188
        %3298 = vmatprep.subr.bf16.mxu0 %v3193
        %3299 = vmatpush1.bf16.msra.mxu0 %v3192
        %3300 = vmatprep.subr.bf16.mxu0 %v3197
        %3301 = vmatpush1.bf16.msra.mxu0 %v3196
        %3302 = vmatprep.subr.bf16.mxu0 %v3201
        %3303 = vmatpush1.bf16.msra.mxu0 %v3200
        %3304 = vmatprep.subr.bf16.mxu0 %v3205
        %3305 = vmatpush1.bf16.msra.mxu0 %v3204
        %3306 = vmatprep.subr.bf16.mxu0 %v3209
        %3307 = vmatpush1.bf16.msra.mxu0 %v3208
        %3308 = vmatprep.mubr.bf16.mxu0 %v2863
        %3309 = vmatmul.mubr.bf16.gmra.mrb[0].mxu0 %v2862
        %v3310 = vpop.f32.mrb[0].mxu0
        %v3311 = vadd.f32 %v2939, %v3310
        %v3312 = vpop.f32.mrb[0].mxu0
        %v3313 = vadd.f32 %v2943, %v3312
        %v3314 = vpop.f32.mrb[0].mxu0
        %v3315 = vadd.f32 %v2939, %v3314
        %v3316 = vpop.f32.mrb[0].mxu0
        %v3317 = vadd.f32 %v2943, %v3316
        %3318 = vmatprep.mubr.bf16.mxu0 %v2865
        %3319 = vmatmul.mubr.bf16.gmra.mrb[0].mxu0 %v2864
        %v3320 = vpop.f32.mrb[0].mxu0
        %v3321 = vadd.f32 %v2939, %v3320
        %v3322 = vpop.f32.mrb[0].mxu0
        %v3323 = vadd.f32 %v2943, %v3322
        %v3324 = vpop.f32.mrb[0].mxu0
        %v3325 = vadd.f32 %v2939, %v3324
        %v3326 = vpop.f32.mrb[0].mxu0
        %v3327 = vadd.f32 %v2943, %v3326
        %3328 = vmatprep.mubr.bf16.mxu0 %v2867
        %3329 = vmatmul.mubr.bf16.gmra.mrb[0].mxu0 %v2866
        %v3330 = vpop.f32.mrb[0].mxu0
        %v3331 = vadd.f32 %v2939, %v3330
        %v3332 = vpop.f32.mrb[0].mxu0
        %v3333 = vadd.f32 %v2943, %v3332
        %v3334 = vpop.f32.mrb[0].mxu0
        %v3335 = vadd.f32 %v2939, %v3334
        %v3336 = vpop.f32.mrb[0].mxu0
        %v3337 = vadd.f32 %v2943, %v3336
        %3338 = vmatprep.mubr.bf16.mxu0 %v2869
        %3339 = vmatmul.mubr.bf16.gmra.mrb[0].mxu0 %v2868
        %v3340 = vpop.f32.mrb[0].mxu0
        %v3341 = vadd.f32 %v2939, %v3340
        %v3342 = vpop.f32.mrb[0].mxu0
        %v3343 = vadd.f32 %v2943, %v3342
        %v3344 = vpop.f32.mrb[0].mxu0
        %v3345 = vadd.f32 %v2939, %v3344
        %v3346 = vpop.f32.mrb[0].mxu0
        %v3347 = vadd.f32 %v2943, %v3346
        %3348 = vdwg.mxu0
        %3349 = vmatprep.subr.bf16.mxu0 %v3151
        %3350 = vmatpush1.bf16.msra.mxu0 %v3150
        %3351 = vmatprep.subr.bf16.mxu0 %v3155
        %3352 = vmatpush1.bf16.msra.mxu0 %v3154
        %3353 = vmatprep.subr.bf16.mxu0 %v3159
        %3354 = vmatpush1.bf16.msra.mxu0 %v3158
        %3355 = vmatprep.subr.bf16.mxu0 %v3163
        %3356 = vmatpush1.bf16.msra.mxu0 %v3162
        %3357 = vmatprep.subr.bf16.mxu0 %v3167
        %3358 = vmatpush1.bf16.msra.mxu0 %v3166
        %3359 = vmatprep.subr.bf16.mxu0 %v3171
        %3360 = vmatpush1.bf16.msra.mxu0 %v3170
        %3361 = vmatprep.subr.bf16.mxu0 %v3175
        %3362 = vmatpush1.bf16.msra.mxu0 %v3174
        %3363 = vmatprep.subr.bf16.mxu0 %v3179
        %3364 = vmatpush1.bf16.msra.mxu0 %v3178
        %3365 = vmatprep.subr.bf16.mxu0 %v3183
        %3366 = vmatpush1.bf16.msra.mxu0 %v3182
        %3367 = vmatprep.subr.bf16.mxu0 %v3187
        %3368 = vmatpush1.bf16.msra.mxu0 %v3186
        %3369 = vmatprep.subr.bf16.mxu0 %v3191
        %3370 = vmatpush1.bf16.msra.mxu0 %v3190
        %3371 = vmatprep.subr.bf16.mxu0 %v3195
        %3372 = vmatpush1.bf16.msra.mxu0 %v3194
        %3373 = vmatprep.subr.bf16.mxu0 %v3199
        %3374 = vmatpush1.bf16.msra.mxu0 %v3198
        %3375 = vmatprep.subr.bf16.mxu0 %v3203
        %3376 = vmatpush1.bf16.msra.mxu0 %v3202
        %3377 = vmatprep.subr.bf16.mxu0 %v3207
        %3378 = vmatpush1.bf16.msra.mxu0 %v3206
        %3379 = vmatprep.subr.bf16.mxu0 %v3211
        %3380 = vmatpush1.bf16.msra.mxu0 %v3210
        %3381 = vmatprep.mubr.bf16.mxu0 %v2863
        %3382 = vmatmul.mubr.bf16.gmra.mrb[0].mxu0 %v2862
        %v3383 = vpop.f32.mrb[0].mxu0
        %v3384 = vadd.f32 %v2947, %v3383
        %v3385 = vpop.f32.mrb[0].mxu0
        %v3386 = vadd.f32 %v2951, %v3385
        %v3387 = vpop.f32.mrb[0].mxu0
        %v3388 = vadd.f32 %v2947, %v3387
        %v3389 = vpop.f32.mrb[0].mxu0
        %v3390 = vadd.f32 %v2951, %v3389
        %3391 = vmatprep.mubr.bf16.mxu0 %v2865
        %3392 = vmatmul.mubr.bf16.gmra.mrb[0].mxu0 %v2864
        %v3393 = vpop.f32.mrb[0].mxu0
        %v3394 = vadd.f32 %v2947, %v3393
        %v3395 = vpop.f32.mrb[0].mxu0
        %v3396 = vadd.f32 %v2951, %v3395
        %v3397 = vpop.f32.mrb[0].mxu0
        %v3398 = vadd.f32 %v2947, %v3397
        %v3399 = vpop.f32.mrb[0].mxu0
        %v3400 = vadd.f32 %v2951, %v3399
        %3401 = vmatprep.mubr.bf16.mxu0 %v2867
        %3402 = vmatmul.mubr.bf16.gmra.mrb[0].mxu0 %v2866
        %v3403 = vpop.f32.mrb[0].mxu0
        %v3404 = vadd.f32 %v2947, %v3403
        %v3405 = vpop.f32.mrb[0].mxu0
        %v3406 = vadd.f32 %v2951, %v3405
        %v3407 = vpop.f32.mrb[0].mxu0
        %v3408 = vadd.f32 %v2947, %v3407
        %v3409 = vpop.f32.mrb[0].mxu0
        %v3410 = vadd.f32 %v2951, %v3409
        %3411 = vmatprep.mubr.bf16.mxu0 %v2869
        %3412 = vmatmul.mubr.bf16.gmra.mrb[0].mxu0 %v2868
        %v3413 = vpop.f32.mrb[0].mxu0
        %v3414 = vadd.f32 %v2947, %v3413
        %v3415 = vpop.f32.mrb[0].mxu0
        %v3416 = vadd.f32 %v2951, %v3415
        %v3417 = vpop.f32.mrb[0].mxu0
        %v3418 = vadd.f32 %v2947, %v3417
        %v3419 = vpop.f32.mrb[0].mxu0
        %v3420 = vadd.f32 %v2951, %v3419
        %3421 = vdwg.mxu0
        %v3422 = vmax.f32 %v3311, 0.0
        %v3423 = vmax.f32 %v3313, 0.0
        %v3424 = vmax.f32 %v3384, 0.0
        %v3425 = vmax.f32 %v3386, 0.0
        %v3426 = vmax.f32 %v3315, 0.0
        %v3427 = vmax.f32 %v3317, 0.0
        %v3428 = vmax.f32 %v3388, 0.0
        %v3429 = vmax.f32 %v3390, 0.0
        %v3430 = vmax.f32 %v3321, 0.0
        %v3431 = vmax.f32 %v3323, 0.0
        %v3432 = vmax.f32 %v3394, 0.0
        %v3433 = vmax.f32 %v3396, 0.0
        %v3434 = vmax.f32 %v3325, 0.0
        %v3435 = vmax.f32 %v3327, 0.0
        %v3436 = vmax.f32 %v3398, 0.0
        %v3437 = vmax.f32 %v3400, 0.0
        %v3438 = vmax.f32 %v3331, 0.0
        %v3439 = vmax.f32 %v3333, 0.0
        %v3440 = vmax.f32 %v3404, 0.0
        %v3441 = vmax.f32 %v3406, 0.0
        %v3442 = vmax.f32 %v3335, 0.0
        %v3443 = vmax.f32 %v3337, 0.0
        %v3444 = vmax.f32 %v3408, 0.0
        %v3445 = vmax.f32 %v3410, 0.0
        %v3446 = vmax.f32 %v3341, 0.0
        %v3447 = vmax.f32 %v3343, 0.0
        %v3448 = vmax.f32 %v3414, 0.0
        %v3449 = vmax.f32 %v3416, 0.0
        %v3450 = vmax.f32 %v3345, 0.0
        %v3451 = vmax.f32 %v3347, 0.0
        %v3452 = vmax.f32 %v3418, 0.0
        %v3453 = vmax.f32 %v3420, 0.0
        %v3454 = vpack.c.bf16 %v3426, %v3422
        %v3455 = vpack.c.bf16 %v3427, %v3423
        %v3456 = vpack.c.bf16 %v3428, %v3424
        %v3457 = vpack.c.bf16 %v3429, %v3425
        %v3458 = vpack.c.bf16 %v3434, %v3430
        %v3459 = vpack.c.bf16 %v3435, %v3431
        %v3460 = vpack.c.bf16 %v3436, %v3432
        %v3461 = vpack.c.bf16 %v3437, %v3433
        %v3462 = vpack.c.bf16 %v3442, %v3438
        %v3463 = vpack.c.bf16 %v3443, %v3439
        %v3464 = vpack.c.bf16 %v3444, %v3440
        %v3465 = vpack.c.bf16 %v3445, %v3441
        %v3466 = vpack.c.bf16 %v3450, %v3446
        %v3467 = vpack.c.bf16 %v3451, %v3447
        %v3468 = vpack.c.bf16 %v3452, %v3448
        %v3469 = vpack.c.bf16 %v3453, %v3449
        %v3470 = vld [vmem:[#allocation10] sm:$0xff]
        %v3471 = vld [vmem:[#allocation10 + $0x8] sm:$0xff]
        %v3472 = vld [vmem:[#allocation10 + $0x10] sm:$0xff]
        %v3473 = vld [vmem:[#allocation10 + $0x18] sm:$0xff]
        %v3474 = vld [vmem:[#allocation10 + $0x20] sm:$0xff]
        %v3475 = vld [vmem:[#allocation10 + $0x28] sm:$0xff]
        %v3476 = vld [vmem:[#allocation10 + $0x30] sm:$0xff]
        %v3477 = vld [vmem:[#allocation10 + $0x38] sm:$0xff]
        %v3478 = vld [vmem:[#allocation10 + $0x40] sm:$0xff]
        %v3479 = vld [vmem:[#allocation10 + $0x48] sm:$0xff]
        %v3480 = vld [vmem:[#allocation10 + $0x50] sm:$0xff]
        %v3481 = vld [vmem:[#allocation10 + $0x58] sm:$0xff]
        %v3482 = vld [vmem:[#allocation10 + $0x60] sm:$0xff]
        %v3483 = vld [vmem:[#allocation10 + $0x68] sm:$0xff]
        %v3484 = vld [vmem:[#allocation10 + $0x70] sm:$0xff]
        %v3485 = vld [vmem:[#allocation10 + $0x78] sm:$0xff]
        %v3486 = vld [vmem:[#allocation10 + $0x80] sm:$0xff]
        %v3487 = vld [vmem:[#allocation10 + $0x88] sm:$0xff]
        %v3488 = vld [vmem:[#allocation10 + $0x90] sm:$0xff]
        %v3489 = vld [vmem:[#allocation10 + $0x98] sm:$0xff]
        %v3490 = vld [vmem:[#allocation10 + $0xa0] sm:$0xff]
        %v3491 = vld [vmem:[#allocation10 + $0xa8] sm:$0xff]
        %v3492 = vld [vmem:[#allocation10 + $0xb0] sm:$0xff]
        %v3493 = vld [vmem:[#allocation10 + $0xb8] sm:$0xff]
        %v3494 = vld [vmem:[#allocation10 + $0xc0] sm:$0xff]
        %v3495 = vld [vmem:[#allocation10 + $0xc8] sm:$0xff]
        %v3496 = vld [vmem:[#allocation10 + $0xd0] sm:$0xff]
        %v3497 = vld [vmem:[#allocation10 + $0xd8] sm:$0xff]
        %v3498 = vld [vmem:[#allocation10 + $0xe0] sm:$0xff]
        %v3499 = vld [vmem:[#allocation10 + $0xe8] sm:$0xff]
        %v3500 = vld [vmem:[#allocation10 + $0xf0] sm:$0xff]
        %v3501 = vld [vmem:[#allocation10 + $0xf8] sm:$0xff]
        %v3502 = vld [vmem:[#allocation10 + $0x100] sm:$0xff]
        %v3503 = vld [vmem:[#allocation10 + $0x108] sm:$0xff]
        %v3504 = vld [vmem:[#allocation10 + $0x110] sm:$0xff]
        %v3505 = vld [vmem:[#allocation10 + $0x118] sm:$0xff]
        %v3506 = vld [vmem:[#allocation10 + $0x120] sm:$0xff]
        %v3507 = vld [vmem:[#allocation10 + $0x128] sm:$0xff]
        %v3508 = vld [vmem:[#allocation10 + $0x130] sm:$0xff]
        %v3509 = vld [vmem:[#allocation10 + $0x138] sm:$0xff]
        %v3510 = vld [vmem:[#allocation10 + $0x140] sm:$0xff]
        %v3511 = vld [vmem:[#allocation10 + $0x148] sm:$0xff]
        %v3512 = vld [vmem:[#allocation10 + $0x150] sm:$0xff]
        %v3513 = vld [vmem:[#allocation10 + $0x158] sm:$0xff]
        %v3514 = vld [vmem:[#allocation10 + $0x160] sm:$0xff]
        %v3515 = vld [vmem:[#allocation10 + $0x168] sm:$0xff]
        %v3516 = vld [vmem:[#allocation10 + $0x170] sm:$0xff]
        %v3517 = vld [vmem:[#allocation10 + $0x178] sm:$0xff]
        %v3518 = vld [vmem:[#allocation10 + $0x180] sm:$0xff]
        %v3519 = vld [vmem:[#allocation10 + $0x188] sm:$0xff]
        %v3520 = vld [vmem:[#allocation10 + $0x190] sm:$0xff]
        %v3521 = vld [vmem:[#allocation10 + $0x198] sm:$0xff]
        %v3522 = vld [vmem:[#allocation10 + $0x1a0] sm:$0xff]
        %v3523 = vld [vmem:[#allocation10 + $0x1a8] sm:$0xff]
        %v3524 = vld [vmem:[#allocation10 + $0x1b0] sm:$0xff]
        %v3525 = vld [vmem:[#allocation10 + $0x1b8] sm:$0xff]
        %v3526 = vld [vmem:[#allocation10 + $0x1c0] sm:$0xff]
        %v3527 = vld [vmem:[#allocation10 + $0x1c8] sm:$0xff]
        %v3528 = vld [vmem:[#allocation10 + $0x1d0] sm:$0xff]
        %v3529 = vld [vmem:[#allocation10 + $0x1d8] sm:$0xff]
        %v3530 = vld [vmem:[#allocation10 + $0x1e0] sm:$0xff]
        %v3531 = vld [vmem:[#allocation10 + $0x1e8] sm:$0xff]
        %v3532 = vld [vmem:[#allocation10 + $0x1f0] sm:$0xff]
        %v3533 = vld [vmem:[#allocation10 + $0x1f8] sm:$0xff]
        %v3534 = vld [vmem:[%s10] sm:$0x3]
        %v3536 = vlaneseq
        %v3537 = vshrl.u32 %v3536, 7
        %v3538 = vsub.s32 0, %v3537
        %v3539 = vrot.slane %v3534, %v3538
        %v3540 = vlaneseq
        %v3541 = vshrl.u32 %v3540, 7
        %v3542 = vsub.s32 1, %v3541
        %v3543 = vrot.slane %v3534, %v3542
        %v3610 = vunpack.c.l.b16 %v3470
        %v3611 = vunpack.c.h.b16 %v3470
        %v3612 = vunpack.c.l.b16 %v3471
        %v3613 = vunpack.c.h.b16 %v3471
        %v3614 = vunpack.c.l.b16 %v3472
        %v3615 = vunpack.c.h.b16 %v3472
        %v3616 = vunpack.c.l.b16 %v3473
        %v3617 = vunpack.c.h.b16 %v3473
        %v3618 = vunpack.c.l.b16 %v3474
        %v3619 = vunpack.c.h.b16 %v3474
        %v3620 = vunpack.c.l.b16 %v3475
        %v3621 = vunpack.c.h.b16 %v3475
        %v3622 = vunpack.c.l.b16 %v3476
        %v3623 = vunpack.c.h.b16 %v3476
        %v3624 = vunpack.c.l.b16 %v3477
        %v3625 = vunpack.c.h.b16 %v3477
        %v3626 = vunpack.c.l.b16 %v3478
        %v3627 = vunpack.c.h.b16 %v3478
        %v3628 = vunpack.c.l.b16 %v3479
        %v3629 = vunpack.c.h.b16 %v3479
        %v3630 = vunpack.c.l.b16 %v3480
        %v3631 = vunpack.c.h.b16 %v3480
        %v3632 = vunpack.c.l.b16 %v3481
        %v3633 = vunpack.c.h.b16 %v3481
        %v3634 = vunpack.c.l.b16 %v3482
        %v3635 = vunpack.c.h.b16 %v3482
        %v3636 = vunpack.c.l.b16 %v3483
        %v3637 = vunpack.c.h.b16 %v3483
        %v3638 = vunpack.c.l.b16 %v3484
        %v3639 = vunpack.c.h.b16 %v3484
        %v3640 = vunpack.c.l.b16 %v3485
        %v3641 = vunpack.c.h.b16 %v3485
        %v3642 = vunpack.c.l.b16 %v3486
        %v3643 = vunpack.c.h.b16 %v3486
        %v3644 = vunpack.c.l.b16 %v3487
        %v3645 = vunpack.c.h.b16 %v3487
        %v3646 = vunpack.c.l.b16 %v3488
        %v3647 = vunpack.c.h.b16 %v3488
        %v3648 = vunpack.c.l.b16 %v3489
        %v3649 = vunpack.c.h.b16 %v3489
        %v3650 = vunpack.c.l.b16 %v3490
        %v3651 = vunpack.c.h.b16 %v3490
        %v3652 = vunpack.c.l.b16 %v3491
        %v3653 = vunpack.c.h.b16 %v3491
        %v3654 = vunpack.c.l.b16 %v3492
        %v3655 = vunpack.c.h.b16 %v3492
        %v3656 = vunpack.c.l.b16 %v3493
        %v3657 = vunpack.c.h.b16 %v3493
        %v3658 = vunpack.c.l.b16 %v3494
        %v3659 = vunpack.c.h.b16 %v3494
        %v3660 = vunpack.c.l.b16 %v3495
        %v3661 = vunpack.c.h.b16 %v3495
        %v3662 = vunpack.c.l.b16 %v3496
        %v3663 = vunpack.c.h.b16 %v3496
        %v3664 = vunpack.c.l.b16 %v3497
        %v3665 = vunpack.c.h.b16 %v3497
        %v3666 = vunpack.c.l.b16 %v3498
        %v3667 = vunpack.c.h.b16 %v3498
        %v3668 = vunpack.c.l.b16 %v3499
        %v3669 = vunpack.c.h.b16 %v3499
        %v3670 = vunpack.c.l.b16 %v3500
        %v3671 = vunpack.c.h.b16 %v3500
        %v3672 = vunpack.c.l.b16 %v3501
        %v3673 = vunpack.c.h.b16 %v3501
        %v3674 = vunpack.c.l.b16 %v3502
        %v3675 = vunpack.c.h.b16 %v3502
        %v3676 = vunpack.c.l.b16 %v3503
        %v3677 = vunpack.c.h.b16 %v3503
        %v3678 = vunpack.c.l.b16 %v3504
        %v3679 = vunpack.c.h.b16 %v3504
        %v3680 = vunpack.c.l.b16 %v3505
        %v3681 = vunpack.c.h.b16 %v3505
        %v3682 = vunpack.c.l.b16 %v3506
        %v3683 = vunpack.c.h.b16 %v3506
        %v3684 = vunpack.c.l.b16 %v3507
        %v3685 = vunpack.c.h.b16 %v3507
        %v3686 = vunpack.c.l.b16 %v3508
        %v3687 = vunpack.c.h.b16 %v3508
        %v3688 = vunpack.c.l.b16 %v3509
        %v3689 = vunpack.c.h.b16 %v3509
        %v3690 = vunpack.c.l.b16 %v3510
        %v3691 = vunpack.c.h.b16 %v3510
        %v3692 = vunpack.c.l.b16 %v3511
        %v3693 = vunpack.c.h.b16 %v3511
        %v3694 = vunpack.c.l.b16 %v3512
        %v3695 = vunpack.c.h.b16 %v3512
        %v3696 = vunpack.c.l.b16 %v3513
        %v3697 = vunpack.c.h.b16 %v3513
        %v3698 = vunpack.c.l.b16 %v3514
        %v3699 = vunpack.c.h.b16 %v3514
        %v3700 = vunpack.c.l.b16 %v3515
        %v3701 = vunpack.c.h.b16 %v3515
        %v3702 = vunpack.c.l.b16 %v3516
        %v3703 = vunpack.c.h.b16 %v3516
        %v3704 = vunpack.c.l.b16 %v3517
        %v3705 = vunpack.c.h.b16 %v3517
        %v3706 = vunpack.c.l.b16 %v3518
        %v3707 = vunpack.c.h.b16 %v3518
        %v3708 = vunpack.c.l.b16 %v3519
        %v3709 = vunpack.c.h.b16 %v3519
        %v3710 = vunpack.c.l.b16 %v3520
        %v3711 = vunpack.c.h.b16 %v3520
        %v3712 = vunpack.c.l.b16 %v3521
        %v3713 = vunpack.c.h.b16 %v3521
        %v3714 = vunpack.c.l.b16 %v3522
        %v3715 = vunpack.c.h.b16 %v3522
        %v3716 = vunpack.c.l.b16 %v3523
        %v3717 = vunpack.c.h.b16 %v3523
        %v3718 = vunpack.c.l.b16 %v3524
        %v3719 = vunpack.c.h.b16 %v3524
        %v3720 = vunpack.c.l.b16 %v3525
        %v3721 = vunpack.c.h.b16 %v3525
        %v3722 = vunpack.c.l.b16 %v3526
        %v3723 = vunpack.c.h.b16 %v3526
        %v3724 = vunpack.c.l.b16 %v3527
        %v3725 = vunpack.c.h.b16 %v3527
        %v3726 = vunpack.c.l.b16 %v3528
        %v3727 = vunpack.c.h.b16 %v3528
        %v3728 = vunpack.c.l.b16 %v3529
        %v3729 = vunpack.c.h.b16 %v3529
        %v3730 = vunpack.c.l.b16 %v3530
        %v3731 = vunpack.c.h.b16 %v3530
        %v3732 = vunpack.c.l.b16 %v3531
        %v3733 = vunpack.c.h.b16 %v3531
        %v3734 = vunpack.c.l.b16 %v3532
        %v3735 = vunpack.c.h.b16 %v3532
        %v3736 = vunpack.c.l.b16 %v3533
        %v3737 = vunpack.c.h.b16 %v3533
        %v3738 = vpack.c.b16 %v3612, %v3610
        %v3739 = vpack.c.b16 %v3613, %v3611
        %v3740 = vpack.c.b16 %v3616, %v3614
        %v3741 = vpack.c.b16 %v3617, %v3615
        %v3742 = vpack.c.b16 %v3620, %v3618
        %v3743 = vpack.c.b16 %v3621, %v3619
        %v3744 = vpack.c.b16 %v3624, %v3622
        %v3745 = vpack.c.b16 %v3625, %v3623
        %v3746 = vpack.c.b16 %v3628, %v3626
        %v3747 = vpack.c.b16 %v3629, %v3627
        %v3748 = vpack.c.b16 %v3632, %v3630
        %v3749 = vpack.c.b16 %v3633, %v3631
        %v3750 = vpack.c.b16 %v3636, %v3634
        %v3751 = vpack.c.b16 %v3637, %v3635
        %v3752 = vpack.c.b16 %v3640, %v3638
        %v3753 = vpack.c.b16 %v3641, %v3639
        %v3754 = vpack.c.b16 %v3644, %v3642
        %v3755 = vpack.c.b16 %v3645, %v3643
        %v3756 = vpack.c.b16 %v3648, %v3646
        %v3757 = vpack.c.b16 %v3649, %v3647
        %v3758 = vpack.c.b16 %v3652, %v3650
        %v3759 = vpack.c.b16 %v3653, %v3651
        %v3760 = vpack.c.b16 %v3656, %v3654
        %v3761 = vpack.c.b16 %v3657, %v3655
        %v3762 = vpack.c.b16 %v3660, %v3658
        %v3763 = vpack.c.b16 %v3661, %v3659
        %v3764 = vpack.c.b16 %v3664, %v3662
        %v3765 = vpack.c.b16 %v3665, %v3663
        %v3766 = vpack.c.b16 %v3668, %v3666
        %v3767 = vpack.c.b16 %v3669, %v3667
        %v3768 = vpack.c.b16 %v3672, %v3670
        %v3769 = vpack.c.b16 %v3673, %v3671
        %v3770 = vpack.c.b16 %v3676, %v3674
        %v3771 = vpack.c.b16 %v3677, %v3675
        %v3772 = vpack.c.b16 %v3680, %v3678
        %v3773 = vpack.c.b16 %v3681, %v3679
        %v3774 = vpack.c.b16 %v3684, %v3682
        %v3775 = vpack.c.b16 %v3685, %v3683
        %v3776 = vpack.c.b16 %v3688, %v3686
        %v3777 = vpack.c.b16 %v3689, %v3687
        %v3778 = vpack.c.b16 %v3692, %v3690
        %v3779 = vpack.c.b16 %v3693, %v3691
        %v3780 = vpack.c.b16 %v3696, %v3694
        %v3781 = vpack.c.b16 %v3697, %v3695
        %v3782 = vpack.c.b16 %v3700, %v3698
        %v3783 = vpack.c.b16 %v3701, %v3699
        %v3784 = vpack.c.b16 %v3704, %v3702
        %v3785 = vpack.c.b16 %v3705, %v3703
        %v3786 = vpack.c.b16 %v3708, %v3706
        %v3787 = vpack.c.b16 %v3709, %v3707
        %v3788 = vpack.c.b16 %v3712, %v3710
        %v3789 = vpack.c.b16 %v3713, %v3711
        %v3790 = vpack.c.b16 %v3716, %v3714
        %v3791 = vpack.c.b16 %v3717, %v3715
        %v3792 = vpack.c.b16 %v3720, %v3718
        %v3793 = vpack.c.b16 %v3721, %v3719
        %v3794 = vpack.c.b16 %v3724, %v3722
        %v3795 = vpack.c.b16 %v3725, %v3723
        %v3796 = vpack.c.b16 %v3728, %v3726
        %v3797 = vpack.c.b16 %v3729, %v3727
        %v3798 = vpack.c.b16 %v3732, %v3730
        %v3799 = vpack.c.b16 %v3733, %v3731
        %v3800 = vpack.c.b16 %v3736, %v3734
        %v3801 = vpack.c.b16 %v3737, %v3735
        %3866 = vmatprep.subr.bf16.mxu0 %v3739
        %3867 = vmatpush1.bf16.msra.mxu0 %v3738
        %3868 = vmatprep.subr.bf16.mxu0 %v3741
        %3869 = vmatpush1.bf16.msra.mxu0 %v3740
        %3870 = vmatprep.subr.bf16.mxu0 %v3743
        %3871 = vmatpush1.bf16.msra.mxu0 %v3742
        %3872 = vmatprep.subr.bf16.mxu0 %v3745
        %3873 = vmatpush1.bf16.msra.mxu0 %v3744
        %3874 = vmatprep.subr.bf16.mxu0 %v3747
        %3875 = vmatpush1.bf16.msra.mxu0 %v3746
        %3876 = vmatprep.subr.bf16.mxu0 %v3749
        %3877 = vmatpush1.bf16.msra.mxu0 %v3748
        %3878 = vmatprep.subr.bf16.mxu0 %v3751
        %3879 = vmatpush1.bf16.msra.mxu0 %v3750
        %3880 = vmatprep.subr.bf16.mxu0 %v3753
        %3881 = vmatpush1.bf16.msra.mxu0 %v3752
        %3882 = vmatprep.subr.bf16.mxu0 %v3755
        %3883 = vmatpush1.bf16.msra.mxu0 %v3754
        %3884 = vmatprep.subr.bf16.mxu0 %v3757
        %3885 = vmatpush1.bf16.msra.mxu0 %v3756
        %3886 = vmatprep.subr.bf16.mxu0 %v3759
        %3887 = vmatpush1.bf16.msra.mxu0 %v3758
        %3888 = vmatprep.subr.bf16.mxu0 %v3761
        %3889 = vmatpush1.bf16.msra.mxu0 %v3760
        %3890 = vmatprep.subr.bf16.mxu0 %v3763
        %3891 = vmatpush1.bf16.msra.mxu0 %v3762
        %3892 = vmatprep.subr.bf16.mxu0 %v3765
        %3893 = vmatpush1.bf16.msra.mxu0 %v3764
        %3894 = vmatprep.subr.bf16.mxu0 %v3767
        %3895 = vmatpush1.bf16.msra.mxu0 %v3766
        %3896 = vmatprep.subr.bf16.mxu0 %v3769
        %3897 = vmatpush1.bf16.msra.mxu0 %v3768
        %3898 = vmatprep.mubr.bf16.mxu0 %v3455
        %3899 = vmatmul.mubr.bf16.gmra.mrb[0].mxu0 %v3454
        %v3900 = vpop.f32.mrb[0].mxu0
        %v3901 = vadd.f32 %v3539, %v3900
        %v3902 = vpop.f32.mrb[0].mxu0
        %v3903 = vadd.f32 %v3543, %v3902
        %v3904 = vpop.f32.mrb[0].mxu0
        %v3905 = vadd.f32 %v3539, %v3904
        %v3906 = vpop.f32.mrb[0].mxu0
        %v3907 = vadd.f32 %v3543, %v3906
        %3908 = vmatprep.mubr.bf16.mxu0 %v3459
        %3909 = vmatmul.mubr.bf16.gmra.mrb[0].mxu0 %v3458
        %v3910 = vpop.f32.mrb[0].mxu0
        %v3911 = vadd.f32 %v3539, %v3910
        %v3912 = vpop.f32.mrb[0].mxu0
        %v3913 = vadd.f32 %v3543, %v3912
        %v3914 = vpop.f32.mrb[0].mxu0
        %v3915 = vadd.f32 %v3539, %v3914
        %v3916 = vpop.f32.mrb[0].mxu0
        %v3917 = vadd.f32 %v3543, %v3916
        %3918 = vmatprep.mubr.bf16.mxu0 %v3463
        %3919 = vmatmul.mubr.bf16.gmra.mrb[0].mxu0 %v3462
        %v3920 = vpop.f32.mrb[0].mxu0
        %v3921 = vadd.f32 %v3539, %v3920
        %v3922 = vpop.f32.mrb[0].mxu0
        %v3923 = vadd.f32 %v3543, %v3922
        %v3924 = vpop.f32.mrb[0].mxu0
        %v3925 = vadd.f32 %v3539, %v3924
        %v3926 = vpop.f32.mrb[0].mxu0
        %v3927 = vadd.f32 %v3543, %v3926
        %3928 = vmatprep.mubr.bf16.mxu0 %v3467
        %3929 = vmatmul.mubr.bf16.gmra.mrb[0].mxu0 %v3466
        %v3930 = vpop.f32.mrb[0].mxu0
        %v3931 = vadd.f32 %v3539, %v3930
        %v3932 = vpop.f32.mrb[0].mxu0
        %v3933 = vadd.f32 %v3543, %v3932
        %v3934 = vpop.f32.mrb[0].mxu0
        %v3935 = vadd.f32 %v3539, %v3934
        %v3936 = vpop.f32.mrb[0].mxu0
        %v3937 = vadd.f32 %v3543, %v3936
        %3938 = vdwg.mxu0
        %3939 = vmatprep.subr.bf16.mxu0 %v3771
        %3940 = vmatpush1.bf16.msra.mxu0 %v3770
        %3941 = vmatprep.subr.bf16.mxu0 %v3773
        %3942 = vmatpush1.bf16.msra.mxu0 %v3772
        %3943 = vmatprep.subr.bf16.mxu0 %v3775
        %3944 = vmatpush1.bf16.msra.mxu0 %v3774
        %3945 = vmatprep.subr.bf16.mxu0 %v3777
        %3946 = vmatpush1.bf16.msra.mxu0 %v3776
        %3947 = vmatprep.subr.bf16.mxu0 %v3779
        %3948 = vmatpush1.bf16.msra.mxu0 %v3778
        %3949 = vmatprep.subr.bf16.mxu0 %v3781
        %3950 = vmatpush1.bf16.msra.mxu0 %v3780
        %3951 = vmatprep.subr.bf16.mxu0 %v3783
        %3952 = vmatpush1.bf16.msra.mxu0 %v3782
        %3953 = vmatprep.subr.bf16.mxu0 %v3785
        %3954 = vmatpush1.bf16.msra.mxu0 %v3784
        %3955 = vmatprep.subr.bf16.mxu0 %v3787
        %3956 = vmatpush1.bf16.msra.mxu0 %v3786
        %3957 = vmatprep.subr.bf16.mxu0 %v3789
        %3958 = vmatpush1.bf16.msra.mxu0 %v3788
        %3959 = vmatprep.subr.bf16.mxu0 %v3791
        %3960 = vmatpush1.bf16.msra.mxu0 %v3790
        %3961 = vmatprep.subr.bf16.mxu0 %v3793
        %3962 = vmatpush1.bf16.msra.mxu0 %v3792
        %3963 = vmatprep.subr.bf16.mxu0 %v3795
        %3964 = vmatpush1.bf16.msra.mxu0 %v3794
        %3965 = vmatprep.subr.bf16.mxu0 %v3797
        %3966 = vmatpush1.bf16.msra.mxu0 %v3796
        %3967 = vmatprep.subr.bf16.mxu0 %v3799
        %3968 = vmatpush1.bf16.msra.mxu0 %v3798
        %3969 = vmatprep.subr.bf16.mxu0 %v3801
        %3970 = vmatpush1.bf16.msra.mxu0 %v3800
        %3971 = vmatprep.mubr.bf16.mxu0 %v3457
        %3972 = vmatmul.mubr.bf16.gmra.mrb[0].mxu0 %v3456
        %v3973 = vpop.f32.mrb[0].mxu0
        %v3974 = vadd.f32 %v3901, %v3973
        %v3975 = vpop.f32.mrb[0].mxu0
        %v3976 = vadd.f32 %v3903, %v3975
        %v3977 = vpop.f32.mrb[0].mxu0
        %v3978 = vadd.f32 %v3905, %v3977
        %v3979 = vpop.f32.mrb[0].mxu0
        %v3980 = vadd.f32 %v3907, %v3979
        %3981 = vmatprep.mubr.bf16.mxu0 %v3461
        %3982 = vmatmul.mubr.bf16.gmra.mrb[0].mxu0 %v3460
        %v3983 = vpop.f32.mrb[0].mxu0
        %v3984 = vadd.f32 %v3911, %v3983
        %v3985 = vpop.f32.mrb[0].mxu0
        %v3986 = vadd.f32 %v3913, %v3985
        %v3987 = vpop.f32.mrb[0].mxu0
        %v3988 = vadd.f32 %v3915, %v3987
        %v3989 = vpop.f32.mrb[0].mxu0
        %v3990 = vadd.f32 %v3917, %v3989
        %3991 = vmatprep.mubr.bf16.mxu0 %v3465
        %3992 = vmatmul.mubr.bf16.gmra.mrb[0].mxu0 %v3464
        %v3993 = vpop.f32.mrb[0].mxu0
        %v3994 = vadd.f32 %v3921, %v3993
        %v3995 = vpop.f32.mrb[0].mxu0
        %v3996 = vadd.f32 %v3923, %v3995
        %v3997 = vpop.f32.mrb[0].mxu0
        %v3998 = vadd.f32 %v3925, %v3997
        %v3999 = vpop.f32.mrb[0].mxu0
        %v4000 = vadd.f32 %v3927, %v3999
        %4001 = vmatprep.mubr.bf16.mxu0 %v3469
        %4002 = vmatmul.mubr.bf16.gmra.mrb[0].mxu0 %v3468
        %v4003 = vpop.f32.mrb[0].mxu0
        %v4004 = vadd.f32 %v3931, %v4003
        %v4005 = vpop.f32.mrb[0].mxu0
        %v4006 = vadd.f32 %v3933, %v4005
        %v4007 = vpop.f32.mrb[0].mxu0
        %v4008 = vadd.f32 %v3935, %v4007
        %v4009 = vpop.f32.mrb[0].mxu0
        %v4010 = vadd.f32 %v3937, %v4009
        %4011 = vdwg.mxu0
        %v4012 = vadd.f32 %v2846, %v3974
        %v4013 = vadd.f32 %v2847, %v3976
        %v4014 = vadd.f32 %v2848, %v3978
        %v4015 = vadd.f32 %v2849, %v3980
        %v4016 = vadd.f32 %v2850, %v3984
        %v4017 = vadd.f32 %v2851, %v3986
        %v4018 = vadd.f32 %v2852, %v3988
        %v4019 = vadd.f32 %v2853, %v3990
        %v4020 = vadd.f32 %v2854, %v3994
        %v4021 = vadd.f32 %v2855, %v3996
        %v4022 = vadd.f32 %v2856, %v3998
        %v4023 = vadd.f32 %v2857, %v4000
        %v4024 = vadd.f32 %v2858, %v4004
        %v4025 = vadd.f32 %v2859, %v4006
        %v4026 = vadd.f32 %v2860, %v4008
        %v4027 = vadd.f32 %v2861, %v4010
        %v4028 = vadd.f32 %v4012, %v4013
        %4029 = vadd.xlane.f32.xlu0 %v4028
        %v4030 = vpop.xlane.xlu0 %4029
        %v4031 = vadd.f32 %v4014, %v4015
        %4032 = vadd.xlane.f32.xlu0 %v4031
        %v4033 = vpop.xlane.xlu0 %4032
        %v4034 = vadd.f32 %v4016, %v4017
        %4035 = vadd.xlane.f32.xlu0 %v4034
        %v4036 = vpop.xlane.xlu0 %4035
        %v4037 = vadd.f32 %v4018, %v4019
        %4038 = vadd.xlane.f32.xlu0 %v4037
        %v4039 = vpop.xlane.xlu0 %4038
        %v4040 = vadd.f32 %v4020, %v4021
        %4041 = vadd.xlane.f32.xlu0 %v4040
        %v4042 = vpop.xlane.xlu0 %4041
        %v4043 = vadd.f32 %v4022, %v4023
        %4044 = vadd.xlane.f32.xlu0 %v4043
        %v4045 = vpop.xlane.xlu0 %4044
        %v4046 = vadd.f32 %v4024, %v4025
        %4047 = vadd.xlane.f32.xlu0 %v4046
        %v4048 = vpop.xlane.xlu0 %4047
        %v4049 = vadd.f32 %v4026, %v4027
        %4050 = vadd.xlane.f32.xlu0 %v4049
        %v4051 = vpop.xlane.xlu0 %4050
        %v4052 = vmul.f32 %v4030, %v2701
        %v4053 = vmul.f32 %v4033, %v2701
        %v4054 = vmul.f32 %v4036, %v2701
        %v4055 = vmul.f32 %v4039, %v2701
        %v4056 = vmul.f32 %v4042, %v2701
        %v4057 = vmul.f32 %v4045, %v2701
        %v4058 = vmul.f32 %v4048, %v2701
        %v4059 = vmul.f32 %v4051, %v2701
        %v4060 = vsub.f32 %v4012, %v4052
        %v4061 = vsub.f32 %v4013, %v4052
        %v4062 = vsub.f32 %v4014, %v4053
        %v4063 = vsub.f32 %v4015, %v4053
        %v4064 = vsub.f32 %v4016, %v4054
        %v4065 = vsub.f32 %v4017, %v4054
        %v4066 = vsub.f32 %v4018, %v4055
        %v4067 = vsub.f32 %v4019, %v4055
        %v4068 = vsub.f32 %v4020, %v4056
        %v4069 = vsub.f32 %v4021, %v4056
        %v4070 = vsub.f32 %v4022, %v4057
        %v4071 = vsub.f32 %v4023, %v4057
        %v4072 = vsub.f32 %v4024, %v4058
        %v4073 = vsub.f32 %v4025, %v4058
        %v4074 = vsub.f32 %v4026, %v4059
        %v4075 = vsub.f32 %v4027, %v4059
        %v4076 = vmul.f32 %v4060, %v4060
        %v4077 = vmul.f32 %v4061, %v4061
        %v4078 = vmul.f32 %v4062, %v4062
        %v4079 = vmul.f32 %v4063, %v4063
        %v4080 = vmul.f32 %v4064, %v4064
        %v4081 = vmul.f32 %v4065, %v4065
        %v4082 = vmul.f32 %v4066, %v4066
        %v4083 = vmul.f32 %v4067, %v4067
        %v4084 = vmul.f32 %v4068, %v4068
        %v4085 = vmul.f32 %v4069, %v4069
        %v4086 = vmul.f32 %v4070, %v4070
        %v4087 = vmul.f32 %v4071, %v4071
        %v4088 = vmul.f32 %v4072, %v4072
        %v4089 = vmul.f32 %v4073, %v4073
        %v4090 = vmul.f32 %v4074, %v4074
        %v4091 = vmul.f32 %v4075, %v4075
        %v4092 = vadd.f32 %v4076, %v4077
        %4093 = vadd.xlane.f32.xlu0 %v4092
        %v4094 = vpop.xlane.xlu0 %4093
        %v4095 = vadd.f32 %v4078, %v4079
        %4096 = vadd.xlane.f32.xlu0 %v4095
        %v4097 = vpop.xlane.xlu0 %4096
        %v4098 = vadd.f32 %v4080, %v4081
        %4099 = vadd.xlane.f32.xlu0 %v4098
        %v4100 = vpop.xlane.xlu0 %4099
        %v4101 = vadd.f32 %v4082, %v4083
        %4102 = vadd.xlane.f32.xlu0 %v4101
        %v4103 = vpop.xlane.xlu0 %4102
        %v4104 = vadd.f32 %v4084, %v4085
        %4105 = vadd.xlane.f32.xlu0 %v4104
        %v4106 = vpop.xlane.xlu0 %4105
        %v4107 = vadd.f32 %v4086, %v4087
        %4108 = vadd.xlane.f32.xlu0 %v4107
        %v4109 = vpop.xlane.xlu0 %4108
        %v4110 = vadd.f32 %v4088, %v4089
        %4111 = vadd.xlane.f32.xlu0 %v4110
        %v4112 = vpop.xlane.xlu0 %4111
        %v4113 = vadd.f32 %v4090, %v4091
        %4114 = vadd.xlane.f32.xlu0 %v4113
        %v4115 = vpop.xlane.xlu0 %4114
        %v4116 = vmul.f32 %v4094, %v2701
        %v4117 = vmul.f32 %v4097, %v2701
        %v4118 = vmul.f32 %v4100, %v2701
        %v4119 = vmul.f32 %v4103, %v2701
        %v4120 = vmul.f32 %v4106, %v2701
        %v4121 = vmul.f32 %v4109, %v2701
        %v4122 = vmul.f32 %v4112, %v2701
        %v4123 = vmul.f32 %v4115, %v2701
        %v4124 = vadd.f32 %v4116, 1e-05
        %v4125 = vadd.f32 %v4117, 1e-05
        %v4126 = vadd.f32 %v4118, 1e-05
        %v4127 = vadd.f32 %v4119, 1e-05
        %v4128 = vadd.f32 %v4120, 1e-05
        %v4129 = vadd.f32 %v4121, 1e-05
        %v4130 = vadd.f32 %v4122, 1e-05
        %v4131 = vadd.f32 %v4123, 1e-05
        %v4132 = vrsqrt.pop %v4124
        %v4133 = vrsqrt.pop %v4125
        %v4134 = vrsqrt.pop %v4126
        %v4135 = vrsqrt.pop %v4127
        %v4136 = vrsqrt.pop %v4128
        %v4137 = vrsqrt.pop %v4129
        %v4138 = vrsqrt.pop %v4130
        %v4139 = vrsqrt.pop %v4131
        %v4140 = vmul.f32 %v4060, %v4132
        %v4141 = vmul.f32 %v4061, %v4132
        %v4142 = vmul.f32 %v4062, %v4133
        %v4143 = vmul.f32 %v4063, %v4133
        %v4144 = vmul.f32 %v4064, %v4134
        %v4145 = vmul.f32 %v4065, %v4134
        %v4146 = vmul.f32 %v4066, %v4135
        %v4147 = vmul.f32 %v4067, %v4135
        %v4148 = vmul.f32 %v4068, %v4136
        %v4149 = vmul.f32 %v4069, %v4136
        %v4150 = vmul.f32 %v4070, %v4137
        %v4151 = vmul.f32 %v4071, %v4137
        %v4152 = vmul.f32 %v4072, %v4138
        %v4153 = vmul.f32 %v4073, %v4138
        %v4154 = vmul.f32 %v4074, %v4139
        %v4155 = vmul.f32 %v4075, %v4139
        %v4156 = vld [vmem:[%s11] sm:$0x3]
        %v4158 = vlaneseq
        %v4159 = vshrl.u32 %v4158, 7
        %v4160 = vsub.s32 0, %v4159
        %v4161 = vrot.slane %v4156, %v4160
        %v4162 = vlaneseq
        %v4163 = vshrl.u32 %v4162, 7
        %v4164 = vsub.s32 1, %v4163
        %v4165 = vrot.slane %v4156, %v4164
        %v4168 = vmul.f32 %v4140, %v4161
        %v4169 = vmul.f32 %v4141, %v4165
        %v4170 = vmul.f32 %v4142, %v4161
        %v4171 = vmul.f32 %v4143, %v4165
        %v4172 = vmul.f32 %v4144, %v4161
        %v4173 = vmul.f32 %v4145, %v4165
        %v4174 = vmul.f32 %v4146, %v4161
        %v4175 = vmul.f32 %v4147, %v4165
        %v4176 = vmul.f32 %v4148, %v4161
        %v4177 = vmul.f32 %v4149, %v4165
        %v4178 = vmul.f32 %v4150, %v4161
        %v4179 = vmul.f32 %v4151, %v4165
        %v4180 = vmul.f32 %v4152, %v4161
        %v4181 = vmul.f32 %v4153, %v4165
        %v4182 = vmul.f32 %v4154, %v4161
        %v4183 = vmul.f32 %v4155, %v4165
        %v4184 = vld [vmem:[%s12] sm:$0x3]
        %v4186 = vlaneseq
        %v4187 = vshrl.u32 %v4186, 7
        %v4188 = vsub.s32 0, %v4187
        %v4189 = vrot.slane %v4184, %v4188
        %v4190 = vlaneseq
        %v4191 = vshrl.u32 %v4190, 7
        %v4192 = vsub.s32 1, %v4191
        %v4193 = vrot.slane %v4184, %v4192
        %v4196 = vadd.f32 %v4168, %v4189
        %v4197 = vadd.f32 %v4169, %v4193
        %v4198 = vadd.f32 %v4170, %v4189
        %v4199 = vadd.f32 %v4171, %v4193
        %v4200 = vadd.f32 %v4172, %v4189
        %v4201 = vadd.f32 %v4173, %v4193
        %v4202 = vadd.f32 %v4174, %v4189
        %v4203 = vadd.f32 %v4175, %v4193
        %v4204 = vadd.f32 %v4176, %v4189
        %v4205 = vadd.f32 %v4177, %v4193
        %v4206 = vadd.f32 %v4178, %v4189
        %v4207 = vadd.f32 %v4179, %v4193
        %v4208 = vadd.f32 %v4180, %v4189
        %v4209 = vadd.f32 %v4181, %v4193
        %v4210 = vadd.f32 %v4182, %v4189
        %v4211 = vadd.f32 %v4183, %v4193
        %4212 = vst [vmem:[%s517] sm:$0xff] %v4196
        %4213 = vst [vmem:[%s517 + $0x8] sm:$0xff] %v4197
        %4214 = vst [vmem:[%s517 + $0x10] sm:$0xff] %v4198
        %4215 = vst [vmem:[%s517 + $0x18] sm:$0xff] %v4199
        %4216 = vst [vmem:[%s517 + $0x20] sm:$0xff] %v4200
        %4217 = vst [vmem:[%s517 + $0x28] sm:$0xff] %v4201
        %4218 = vst [vmem:[%s517 + $0x30] sm:$0xff] %v4202
        %4219 = vst [vmem:[%s517 + $0x38] sm:$0xff] %v4203
        %4220 = vst [vmem:[%s517 + $0x40] sm:$0xff] %v4204
        %4221 = vst [vmem:[%s517 + $0x48] sm:$0xff] %v4205
        %4222 = vst [vmem:[%s517 + $0x50] sm:$0xff] %v4206
        %4223 = vst [vmem:[%s517 + $0x58] sm:$0xff] %v4207
        %4224 = vst [vmem:[%s517 + $0x60] sm:$0xff] %v4208
        %4225 = vst [vmem:[%s517 + $0x68] sm:$0xff] %v4209
        %4226 = vst [vmem:[%s517 + $0x70] sm:$0xff] %v4210
        %4227 = vst [vmem:[%s517 + $0x78] sm:$0xff] %v4211
        %s4228 = sand.u32 %s318, 1
        %s4229 = scalar_lea.sflag [#allocation4], %s4228
        %s4230 = sand.u32 %s318, 1
        %s4231 = smul.addr %s4230, 128
        %s4232 = scalar_lea.vmem [#allocation11], %s4231
        // Predicated region
        $region93: #{tpu_custom_call.1} parent=71 // pred_check
          %p4233 = pneg %p328
        $region94: #{tpu_custom_call.1} parent=71 // pred_check_branch
          %4235 = sbr.rel (%p4233) target = $region96
        $region95: #{tpu_custom_call.1} parent=71 // pred_region
          %s4236 = smul.u32 2, %s32
          %s4238 = ssub.s32 2048, 2048
          %4239 = vsyncadd %s4229, %s4238
          %s4240 = smul.addr %s4236, 8
          %s4241 = smul.addr %s4240, 128
          %s4242 = scalar_lea.hbm %s13, %s4241
          %s4243 = sshll.u32 %s4232, 4
          %s4244 = int_to_ptr.vmem [resolvable:$true] %s4243
          %4249 = dma.vmem_to_hbm [thread:$0]  %s4244, 2048, %s4242, %s4229, 256, 256, 16
        $region96: #{tpu_custom_call.1} parent=71 // pred_fallthru
          _
      $region72: #{tpu_custom_call.1} parent=5 // pred_fallthru
        _
      %p4250 = scmp.le.s32.totalorder 2, %s27
      // Predicated region
      $region97: #{tpu_custom_call.1} parent=5 // pred_check
        %p4251 = pneg %p4250
      $region98: #{tpu_custom_call.1} parent=5 // pred_check_branch
        %4253 = sbr.rel (%p4251) target = $region100
      $region99: #{tpu_custom_call.1} parent=5 // pred_region
        %s4254 = ssub.s32 %s27, 2
        // Predicated region
        $region101: #{tpu_custom_call.1} parent=99 // pred_check
          %p4255 = pneg %p334
        $region102: #{tpu_custom_call.1} parent=99 // pred_check_branch
          %4257 = sbr.rel (%p4255) target = $region104
        $region103: #{tpu_custom_call.1} parent=99 // pred_region
          %s4258 = sand.u32 %s319, 1
          %s4259 = scalar_lea.sflag [#allocation4], %s4258
          %s4260 = sand.u32 %s319, 1
          %s4261 = smul.addr %s4260, 128
          %s4262 = scalar_lea.vmem [#allocation11], %s4261
          %4263 = dma.done %s4259, 2048
        $region104: #{tpu_custom_call.1} parent=99 // pred_fallthru
          _
      $region100: #{tpu_custom_call.1} parent=5 // pred_fallthru
        _
    $region6: #{tpu_custom_call.1} parent=1 // loop_footer
      %s31 = sadd.s32 1, %s27
    $region7: #{tpu_custom_call.1} parent=1 // loop_footer_branch
      %26 = sbr.rel target = $region3
    $region8: #{tpu_custom_call.1} parent=1 // loop_exit
      _
    %4264 = vsyncpa [#allocation3], 1
    %s4265 = scalar_lea.sflag [#allocation3], 1
    %4266 = vsyncpa %s4265, 1
    %4267 = vsyncpa [#allocation6], 1
    %4268 = vsyncpa [#allocation9], 1
    %4269 = vsyncpa [#allocation4], 1
    %s4270 = scalar_lea.sflag [#allocation4], 1
    %4271 = vsyncpa %s4270, 1

</llo_original>
